<compile_context>
chip_gen: v7x
topology: tpu7x:2x2x1
jax: 0.10.0
libtpu: 0.0.40
codegen_flags: <defaults>
</compile_context>

<pallas_src>
import math
from collections import namedtuple

import jax
import jax.numpy as jnp
import numpy as np
from jax.experimental import pallas as pl
from jax.experimental.pallas import tpu as pltpu

KERNEL_CONDENSE_RATIO = 0.7
SphericalPointCloud = namedtuple("SphericalPointCloud", ["xyz", "feats", "anchors"])


def _round_up(x, n):
    return ((x + n - 1) // n) * n


def make_fused_kernel(*, radius, sigma):
    inv_two_sigma = 1.0 / (2.0 * float(sigma))
    r2_cut = float(radius) * float(radius)
    HI = jax.lax.Precision.HIGHEST

    def kernel(fragT_ref, centersT_ref, k3ka_ref, kka3_ref, wexp_ref, out_ref,
               acc_ref, cnt_ref):
        im = pl.program_id(1)

        @pl.when(im == 0)
        def _init():
            acc_ref[...] = jnp.zeros_like(acc_ref)
            cnt_ref[...] = jnp.zeros_like(cnt_ref)

        fragT = fragT_ref[...]      # (3, mt)       frag tile, lane-dense over points
        cT = centersT_ref[0]        # (nc, 3)       centers of this batch element
        k3ka = k3ka_ref[...]        # (3, ka_pad)   kernel points
        kka3 = kka3_ref[...]        # (ka_pad, 3)   kernel points (other orientation)

        # squared norms
        f2 = jnp.sum(fragT * fragT, axis=0, keepdims=True)      # (1, mt)
        c2 = jnp.sum(cT * cT, axis=1, keepdims=True)            # (nc, 1)
        k2 = jnp.sum(k3ka * k3ka, axis=0, keepdims=True)        # (1, ka_pad)

        # cross terms on the MXU (K = 3)
        fc = jnp.dot(cT, fragT, precision=HI,
                     preferred_element_type=jnp.float32)        # (nc, mt)
        ck = jnp.dot(cT, k3ka, precision=HI,
                     preferred_element_type=jnp.float32)        # (nc, ka_pad)
        fk = jnp.dot(kka3, fragT, precision=HI,
                     preferred_element_type=jnp.float32)        # (ka_pad, mt)

        # radius mask + neighbor count, lane-dense over the frag tile
        r2 = c2 + f2 - 2.0 * fc                                  # (nc, mt)
        mask = (r2 < r2_cut).astype(jnp.float32)                 # (nc, mt)
        cnt_ref[...] += jnp.sum(mask, axis=1, keepdims=True)     # (nc, 1)

        # ||(p - c) - k||^2 = ||p - c||^2 + (||k||^2 + 2 c.k) - 2 p.k
        cka = k2 + 2.0 * ck                                      # (nc, ka_pad)
        d2 = r2[:, None, :] + cka[:, :, None] - 2.0 * fk[None, :, :]   # (nc, ka_pad, mt)
        w = jnp.exp(d2 * (-inv_two_sigma)) * mask[:, None, :]
        acc_ref[...] += jnp.sum(w, axis=2)                       # (nc, ka_pad)

        # last frag tile: normalize by 1/(nnctn+1) and project with kron(W^T, I_na)
        @pl.when(im == pl.num_programs(1) - 1)
        def _finalize():
            inv = pl.reciprocal(cnt_ref[...] + 1.0, approx=True)  # (nc, 1)
            wts = acc_ref[...] * inv                              # (nc, ka_pad)
            out_ref[0] = jnp.dot(wts, wexp_ref[...], precision=HI,
                                 preferred_element_type=jnp.float32)  # (nc, dim_out*na)

    return kernel


def kernel_propagation_forward(frag, clouds, kernels, anchors, W, *,
                               radius, sigma, n_center, m_tile=128):
    # Only the fast path (clouds already has n_center points) is supported.
    assert clouds.shape[2] == n_center
    centers = clouds.astype(jnp.float32)                    # (b, 3, nc)
    b, _, nc = centers.shape
    ks, na, _ = kernels.shape
    dim_out = W.shape[0]
    # forward uses wts.unsqueeze(1) => dim_in == 1, so W is (dim_out, ks)
    assert W.shape[1] == ks, "BasicSO3Conv with dim_in != 1 is not supported here"

    m = frag.shape[0]
    ka = ks * na
    ka_pad = _round_up(ka, 128)          # lane-dense kernel-point axis
    n_out_na = dim_out * na

    mt = m_tile
    assert mt % 128 == 0                 # keeps all frag blocks (8,128)-aligned
    m_pad = _round_up(m, mt)
    n_mtiles = m_pad // mt

    # pad frag with far-away points: masked out, and the Gaussian underflows to 0
    frag32 = frag.astype(jnp.float32)
    frag_p = jnp.pad(frag32, ((0, m_pad - m), (0, 0)), constant_values=1.0e4)
    fragT_p = jnp.transpose(frag_p)                           # (3, m_pad)
    centersT = jnp.transpose(centers, (0, 2, 1))              # (b, nc, 3)

    # kernel points, flattened over (ks, na) and zero-padded to ka_pad
    kka3 = jnp.pad(kernels.reshape(ka, 3).astype(jnp.float32),
                   ((0, ka_pad - ka), (0, 0)))                # (ka_pad, 3)
    k3ka = jnp.transpose(kka3)                                # (3, ka_pad)

    # kron(W^T, I_na): wexp[k*na + a', o*na + a] = W[o, k] * (a' == a), so that
    # (wts(nc, ks*na) @ wexp)[c, o*na + a] = sum_k W[o, k] * wts[c, k*na + a]
    eye_na = jnp.eye(na, dtype=jnp.float32)
    wexp = (jnp.transpose(W.astype(jnp.float32))[:, None, :, None]
            * eye_na[None, :, None, :]).reshape(ka, n_out_na)
    wexp = jnp.pad(wexp, ((0, ka_pad - ka), (0, 0)))          # (ka_pad, dim_out*na)

    out_packed = pl.pallas_call(
        make_fused_kernel(radius=radius, sigma=sigma),
        out_shape=jax.ShapeDtypeStruct((b, nc, n_out_na), jnp.float32),
        grid=(b, n_mtiles),
        in_specs=[
            pl.BlockSpec((3, mt), lambda ib, im: (0, im)),            # fragT tile
            pl.BlockSpec((1, nc, 3), lambda ib, im: (ib, 0, 0)),      # centersT
            pl.BlockSpec((3, ka_pad), lambda ib, im: (0, 0)),         # kernel pts (3, ka)
            pl.BlockSpec((ka_pad, 3), lambda ib, im: (0, 0)),         # kernel pts (ka, 3)
            pl.BlockSpec((ka_pad, n_out_na), lambda ib, im: (0, 0)),  # expanded conv weight
        ],
        out_specs=pl.BlockSpec((1, nc, n_out_na), lambda ib, im: (ib, 0, 0)),
        scratch_shapes=[
            pltpu.VMEM((nc, ka_pad), jnp.float32),   # wts accumulator
            pltpu.VMEM((nc, 1), jnp.float32),        # neighbor count
        ],
        compiler_params=pltpu.CompilerParams(
            dimension_semantics=("parallel", "arbitrary"),
            # NOTE: size m_tile for VMEM: slab is nc*ka_pad*m_tile*4 B; shrink m_tile on v7x (64 MiB VMEM).
            vmem_limit_bytes=64 * 1024 * 1024,
        ),
    )(fragT_p, centersT, k3ka, kka3, wexp)

    feats = out_packed.reshape(b, nc, dim_out, na).transpose(0, 2, 1, 3)  # (b, dim_out, nc, na)
    return SphericalPointCloud(centers, feats, anchors)


def reference_forward(frag, clouds, kernels, W, *, radius, sigma):
    """Pure-JAX reference of the assumed anchor-query + BasicSO3Conv forward."""
    centers = clouds.astype(jnp.float32)                              # (b, 3, nc)
    diff = (frag[None, :, None, :]
            - jnp.transpose(centers, (0, 2, 1))[:, None, :, :])       # (b, m, nc, 3)
    r2 = jnp.sum(diff * diff, axis=-1)                                # (b, m, nc)
    mask = (r2 < radius * radius).astype(jnp.float32)
    nnctn = jnp.sum(mask, axis=1)                                     # (b, nc)
    dd = diff[:, :, :, None, None, :] - kernels[None, None, None]     # (b, m, nc, ks, na, 3)
    d2 = jnp.sum(dd * dd, axis=-1)
    w = jnp.exp(-d2 / (2.0 * sigma)) * mask[:, :, :, None, None]
    wts = jnp.sum(w, axis=1)                                          # (b, nc, ks, na)
    wts = wts / (nnctn[:, :, None, None] + 1.0)
    feats = jnp.einsum('ok,bcka->boca', W, wts,
                       precision=jax.lax.Precision.HIGHEST)           # (b, dim_out, nc, na)
    return feats


if __name__ == "__main__":
    # ---- small, deterministic config ----
    b = 2          # batch
    m = 256        # frag points (2 frag tiles of 128 -> exercises the m-reduction)
    n_center = 8   # nc
    ks = 12        # kernel points
    na = 4         # kanchor (normally 60, small here)
    dim_in = 1     # implied by wts.unsqueeze(1)
    dim_out = 8
    radius = 1.0
    sigma = 0.1

    key = jax.random.PRNGKey(0)
    k_frag, k_cent, k_kern, k_w = jax.random.split(key, 4)

    # synthetic spherical kernel points (stand-in for get_sphereical_kernel_points_from_ply)
    base = jax.random.uniform(k_kern, (ks, 3), jnp.float32, minval=-1.0, maxval=1.0)
    base = base * (KERNEL_CONDENSE_RATIO * radius)

    # synthetic anchors (stand-in for get_anchors): rotations about the z axis
    theta = jnp.arange(na, dtype=jnp.float32) * (2.0 * math.pi / na)
    c, s = jnp.cos(theta), jnp.sin(theta)
    z = jnp.zeros_like(theta)
    o = jnp.ones_like(theta)
    anchors = jnp.stack(
        [jnp.stack([c, -s, z], axis=-1),
         jnp.stack([s, c, z], axis=-1),
         jnp.stack([z, z, o], axis=-1)], axis=-2)                 # (na, 3, 3)

    # kernels = transpose(anchors @ base.T, (2, 0, 1)) -> (ks, na, 3)
    kernels = jnp.transpose(anchors @ base.T, (2, 0, 1)).astype(jnp.float32)

    # BasicSO3Conv weight: xavier_normal_ with gain('relu'), viewed (dim_out, dim_in*ks)
    fan_in = dim_in * ks
    fan_out = dim_out * ks
    std = math.sqrt(2.0) * math.sqrt(2.0 / (fan_in + fan_out))
    W = jax.random.normal(k_w, (dim_out, dim_in * ks), jnp.float32) * std

    frag = jax.random.uniform(k_frag, (m, 3), jnp.float32, minval=-1.0, maxval=1.0)
    clouds = jax.random.uniform(k_cent, (b, 3, n_center), jnp.float32,
                                minval=-0.5, maxval=0.5)

    out = kernel_propagation_forward(frag, clouds, kernels, anchors, W,
                                     radius=radius, sigma=sigma, n_center=n_center)
    jax.block_until_ready(out.feats)

    assert out.feats.shape == (b, dim_out, n_center, na)
    assert out.xyz.shape == (b, 3, n_center)

    ref = reference_forward(frag, clouds, kernels, W, radius=radius, sigma=sigma)
    np.testing.assert_allclose(np.asarray(out.feats), np.asarray(ref),
                               rtol=2e-2, atol=1e-4)

    print("KERNEL_OK")
</pallas_src>

<mosaic_0001>
module attributes {stable_mosaic.version = 11 : i64} {
  func.func @kernel(%arg0: i32, %arg1: i32, %arg2: memref<3x128xf32, #tpu.memory_space<vmem>>, %arg3: memref<1x8x3xf32, #tpu.memory_space<vmem>>, %arg4: memref<3x128xf32, #tpu.memory_space<vmem>>, %arg5: memref<128x3xf32, #tpu.memory_space<vmem>>, %arg6: memref<128x32xf32, #tpu.memory_space<vmem>>, %arg7: memref<1x8x32xf32, #tpu.memory_space<vmem>>, %arg8: memref<8x128xf32, #tpu.memory_space<vmem>>, %arg9: memref<8x1xf32, #tpu.memory_space<vmem>>) attributes {dimension_semantics = [#tpu.dimension_semantics<parallel>, #tpu.dimension_semantics<arbitrary>], iteration_bounds = array<i64: 2, 2>, scalar_prefetch = 0 : i64, scratch_operands = 2 : i64, tpu.core_type = #tpu.core_type<tc>, window_params = [{transform_indices = @transform_0, window_bounds = array<i64: 3, 128>}, {transform_indices = @transform_1, window_bounds = array<i64: 1, 8, 3>}, {pipeline_mode = #tpu.pipeline_mode<synchronous>, transform_indices = @transform_2, window_bounds = array<i64: 3, 128>}, {pipeline_mode = #tpu.pipeline_mode<synchronous>, transform_indices = @transform_3, window_bounds = array<i64: 128, 3>}, {pipeline_mode = #tpu.pipeline_mode<synchronous>, transform_indices = @transform_4, window_bounds = array<i64: 128, 32>}, {transform_indices = @transform_5, window_bounds = array<i64: 1, 8, 32>}]} {
    %c0_i32 = arith.constant 0 : i32
    %0 = arith.cmpi eq, %arg1, %c0_i32 : i32
    %1 = arith.extui %0 : i1 to i32
    %c0_i32_0 = arith.constant 0 : i32
    %2 = arith.cmpi ne, %1, %c0_i32_0 : i32
    scf.if %2 {
      %cst_30 = arith.constant 0.000000e+00 : f32
      %62 = vector.broadcast %cst_30 : f32 to vector<8x128xf32>
      %c0_31 = arith.constant 0 : index
      %c0_32 = arith.constant 0 : index
      %63 = vector.load %arg8[%c0_31, %c0_32] : memref<8x128xf32, #tpu.memory_space<vmem>>, vector<8x128xf32>
      tpu.vector_store %arg8[%c0_31, %c0_32], %62 {strides = array<i32>} : memref<8x128xf32, #tpu.memory_space<vmem>>, vector<8x128xf32>,
      %cst_33 = arith.constant 0.000000e+00 : f32
      %64 = vector.broadcast %cst_33 : f32 to vector<8x1xf32>
      %c0_34 = arith.constant 0 : index
      %c0_35 = arith.constant 0 : index
      %65 = vector.load %arg9[%c0_34, %c0_35] : memref<8x1xf32, #tpu.memory_space<vmem>>, vector<8x1xf32>
      tpu.vector_store %arg9[%c0_34, %c0_35], %64 {strides = array<i32>} : memref<8x1xf32, #tpu.memory_space<vmem>>, vector<8x1xf32>,
    } else {
    }
    %c0 = arith.constant 0 : index
    %c0_1 = arith.constant 0 : index
    %3 = vector.load %arg2[%c0, %c0_1] : memref<3x128xf32, #tpu.memory_space<vmem>>, vector<3x128xf32>
    %c0_2 = arith.constant 0 : index
    %c0_3 = arith.constant 0 : index
    %c0_4 = arith.constant 0 : index
    %4 = vector.load %arg3[%c0_2, %c0_3, %c0_4] : memref<1x8x3xf32, #tpu.memory_space<vmem>>, vector<1x8x3xf32>
    %5 = vector.shape_cast %4 : vector<1x8x3xf32> to vector<8x3xf32>
    %c0_5 = arith.constant 0 : index
    %c0_6 = arith.constant 0 : index
    %6 = vector.load %arg4[%c0_5, %c0_6] : memref<3x128xf32, #tpu.memory_space<vmem>>, vector<3x128xf32>
    %c0_7 = arith.constant 0 : index
    %c0_8 = arith.constant 0 : index
    %7 = vector.load %arg5[%c0_7, %c0_8] : memref<128x3xf32, #tpu.memory_space<vmem>>, vector<128x3xf32>
    %8 = arith.mulf %3, %3 : vector<3x128xf32>
    %cst = arith.constant dense<0.000000e+00> : vector<128xf32>
    %9 = vector.multi_reduction <add>, %8, %cst [0] : vector<3x128xf32> to vector<128xf32>
    %10 = vector.shape_cast %9 : vector<128xf32> to vector<1x128xf32>
    %11 = arith.mulf %5, %5 : vector<8x3xf32>
    %cst_9 = arith.constant dense<0.000000e+00> : vector<8xf32>
    %12 = vector.multi_reduction <add>, %11, %cst_9 [1] : vector<8x3xf32> to vector<8xf32>
    %13 = vector.shape_cast %12 : vector<8xf32> to vector<8x1xf32>
    %14 = arith.mulf %6, %6 : vector<3x128xf32>
    %cst_10 = arith.constant dense<0.000000e+00> : vector<128xf32>
    %15 = vector.multi_reduction <add>, %14, %cst_10 [0] : vector<3x128xf32> to vector<128xf32>
    %16 = vector.shape_cast %15 : vector<128xf32> to vector<1x128xf32>
    %cst_11 = arith.constant dense<0.000000e+00> : vector<8x128xf32>
    %17 = tpu.matmul %5, %3, %cst_11 {dimension_numbers = #tpu.dot_dimension_numbers<[1], [0], [0], [1], [0, 0, 1, 1], [], []>, precision = #tpu.contract_precision<fp32>} : vector<8x3xf32>, vector<3x128xf32>, vector<8x128xf32> -> vector<8x128xf32>
    %cst_12 = arith.constant dense<0.000000e+00> : vector<8x128xf32>
    %18 = tpu.matmul %5, %6, %cst_12 {dimension_numbers = #tpu.dot_dimension_numbers<[1], [0], [0], [1], [0, 0, 1, 1], [], []>, precision = #tpu.contract_precision<fp32>} : vector<8x3xf32>, vector<3x128xf32>, vector<8x128xf32> -> vector<8x128xf32>
    %cst_13 = arith.constant dense<0.000000e+00> : vector<128x128xf32>
    %19 = tpu.matmul %7, %3, %cst_13 {dimension_numbers = #tpu.dot_dimension_numbers<[1], [0], [0], [1], [0, 0, 1, 1], [], []>, precision = #tpu.contract_precision<fp32>} : vector<128x3xf32>, vector<3x128xf32>, vector<128x128xf32> -> vector<128x128xf32>
    %20 = vector.broadcast %13 : vector<8x1xf32> to vector<8x128xf32>
    %21 = vector.broadcast %10 : vector<1x128xf32> to vector<8x128xf32>
    %22 = arith.addf %20, %21 : vector<8x128xf32>
    %cst_14 = arith.constant 2.000000e+00 : f32
    %23 = vector.broadcast %cst_14 : f32 to vector<8x128xf32>
    %24 = arith.mulf %23, %17 : vector<8x128xf32>
    %25 = arith.subf %22, %24 : vector<8x128xf32>
    %cst_15 = arith.constant 1.000000e+00 : f32
    %26 = vector.broadcast %cst_15 : f32 to vector<8x128xf32>
    %27 = arith.cmpf olt, %25, %26 : vector<8x128xf32>
    %28 = arith.extui %27 : vector<8x128xi1> to vector<8x128xi32>
    %29 = arith.sitofp %28 : vector<8x128xi32> to vector<8x128xf32>
    %c0_16 = arith.constant 0 : index
    %c0_17 = arith.constant 0 : index
    %30 = vector.load %arg9[%c0_16, %c0_17] : memref<8x1xf32, #tpu.memory_space<vmem>>, vector<8x1xf32>
    %cst_18 = arith.constant dense<0.000000e+00> : vector<8xf32>
    %31 = vector.multi_reduction <add>, %29, %cst_18 [1] : vector<8x128xf32> to vector<8xf32>
    %32 = vector.shape_cast %31 : vector<8xf32> to vector<8x1xf32>
    %33 = arith.addf %30, %32 : vector<8x1xf32>
    %c0_19 = arith.constant 0 : index
    %c0_20 = arith.constant 0 : index
    %34 = vector.load %arg9[%c0_19, %c0_20] : memref<8x1xf32, #tpu.memory_space<vmem>>, vector<8x1xf32>
    tpu.vector_store %arg9[%c0_19, %c0_20], %33 {strides = array<i32>} : memref<8x1xf32, #tpu.memory_space<vmem>>, vector<8x1xf32>,
    %cst_21 = arith.constant 2.000000e+00 : f32
    %35 = vector.broadcast %cst_21 : f32 to vector<8x128xf32>
    %36 = arith.mulf %35, %18 : vector<8x128xf32>
    %37 = vector.broadcast %16 : vector<1x128xf32> to vector<8x128xf32>
    %38 = arith.addf %37, %36 : vector<8x128xf32>
    %39 = vector.shape_cast %25 : vector<8x128xf32> to vector<8x1x128xf32>
    %40 = vector.shape_cast %38 : vector<8x128xf32> to vector<8x128x1xf32>
    %41 = vector.broadcast %39 : vector<8x1x128xf32> to vector<8x128x128xf32>
    %42 = vector.broadcast %40 : vector<8x128x1xf32> to vector<8x128x128xf32>
    %43 = arith.addf %41, %42 : vector<8x128x128xf32>
    %44 = vector.shape_cast %19 : vector<128x128xf32> to vector<1x128x128xf32>
    %cst_22 = arith.constant 2.000000e+00 : f32
    %45 = vector.broadcast %cst_22 : f32 to vector<1x128x128xf32>
    %46 = arith.mulf %45, %44 : vector<1x128x128xf32>
    %47 = vector.broadcast %46 : vector<1x128x128xf32> to vector<8x128x128xf32>
    %48 = arith.subf %43, %47 : vector<8x128x128xf32>
    %cst_23 = arith.constant -5.000000e+00 : f32
    %49 = vector.broadcast %cst_23 : f32 to vector<8x128x128xf32>
    %50 = arith.mulf %48, %49 : vector<8x128x128xf32>
    %51 = math.exp %50 : vector<8x128x128xf32>
    %52 = vector.shape_cast %29 : vector<8x128xf32> to vector<8x1x128xf32>
    %53 = vector.broadcast %52 : vector<8x1x128xf32> to vector<8x128x128xf32>
    %54 = arith.mulf %51, %53 : vector<8x128x128xf32>
    %c0_24 = arith.constant 0 : index
    %c0_25 = arith.constant 0 : index
    %55 = vector.load %arg8[%c0_24, %c0_25] : memref<8x128xf32, #tpu.memory_space<vmem>>, vector<8x128xf32>
    %cst_26 = arith.constant dense<0.000000e+00> : vector<8x128xf32>
    %56 = vector.multi_reduction <add>, %54, %cst_26 [2] : vector<8x128x128xf32> to vector<8x128xf32>
    %57 = arith.addf %55, %56 : vector<8x128xf32>
    %c0_27 = arith.constant 0 : index
    %c0_28 = arith.constant 0 : index
    %58 = vector.load %arg8[%c0_27, %c0_28] : memref<8x128xf32, #tpu.memory_space<vmem>>, vector<8x128xf32>
    tpu.vector_store %arg8[%c0_27, %c0_28], %57 {strides = array<i32>} : memref<8x128xf32, #tpu.memory_space<vmem>>, vector<8x128xf32>,
    %c1_i32 = arith.constant 1 : i32
    %59 = arith.cmpi eq, %arg1, %c1_i32 : i32
    %60 = arith.extui %59 : i1 to i32
    %c0_i32_29 = arith.constant 0 : i32
    %61 = arith.cmpi ne, %60, %c0_i32_29 : i32
    scf.if %61 {
      %c0_30 = arith.constant 0 : index
      %c0_31 = arith.constant 0 : index
      %62 = vector.load %arg9[%c0_30, %c0_31] : memref<8x1xf32, #tpu.memory_space<vmem>>, vector<8x1xf32>
      %cst_32 = arith.constant 1.000000e+00 : f32
      %63 = vector.broadcast %cst_32 : f32 to vector<8x1xf32>
      %64 = arith.addf %62, %63 : vector<8x1xf32>
      %65 = tpu.reciprocal %64 {approx = true} : vector<8x1xf32> -> vector<8x1xf32>
      %c0_33 = arith.constant 0 : index
      %c0_34 = arith.constant 0 : index
      %66 = vector.load %arg8[%c0_33, %c0_34] : memref<8x128xf32, #tpu.memory_space<vmem>>, vector<8x128xf32>
      %67 = vector.broadcast %65 : vector<8x1xf32> to vector<8x128xf32>
      %68 = arith.mulf %66, %67 : vector<8x128xf32>
      %c0_35 = arith.constant 0 : index
      %c0_36 = arith.constant 0 : index
      %69 = vector.load %arg6[%c0_35, %c0_36] : memref<128x32xf32, #tpu.memory_space<vmem>>, vector<128x32xf32>
      %cst_37 = arith.constant dense<0.000000e+00> : vector<8x32xf32>
      %70 = tpu.matmul %68, %69, %cst_37 {dimension_numbers = #tpu.dot_dimension_numbers<[1], [0], [0], [1], [0, 0, 1, 1], [], []>, precision = #tpu.contract_precision<fp32>} : vector<8x128xf32>, vector<128x32xf32>, vector<8x32xf32> -> vector<8x32xf32>
      %c0_38 = arith.constant 0 : index
      %c0_39 = arith.constant 0 : index
      %c0_40 = arith.constant 0 : index
      %71 = vector.load %arg7[%c0_38, %c0_39, %c0_40] : memref<1x8x32xf32, #tpu.memory_space<vmem>>, vector<1x8x32xf32>
      %72 = vector.shape_cast %71 : vector<1x8x32xf32> to vector<8x32xf32>
      %73 = vector.shape_cast %70 : vector<8x32xf32> to vector<1x8x32xf32>
      tpu.vector_store %arg7[%c0_38, %c0_39, %c0_40], %73 {strides = array<i32>} : memref<1x8x32xf32, #tpu.memory_space<vmem>>, vector<1x8x32xf32>,
    } else {
    }
    return
  }
  func.func @transform_0(%arg0: i32, %arg1: i32) -> (i32, i32) {
    %c0_i32 = arith.constant 0 : i32
    %c0_i32_0 = arith.constant 0 : i32
    return %c0_i32, %arg1 : i32, i32
  }
  func.func @transform_1(%arg0: i32, %arg1: i32) -> (i32, i32, i32) {
    %c0_i32 = arith.constant 0 : i32
    %c0_i32_0 = arith.constant 0 : i32
    %c0_i32_1 = arith.constant 0 : i32
    return %arg0, %c0_i32, %c0_i32_0 : i32, i32, i32
  }
  func.func @transform_2(%arg0: i32, %arg1: i32) -> (i32, i32) {
    %c0_i32 = arith.constant 0 : i32
    %c0_i32_0 = arith.constant 0 : i32
    %c0_i32_1 = arith.constant 0 : i32
    return %c0_i32, %c0_i32_0 : i32, i32
  }
  func.func @transform_3(%arg0: i32, %arg1: i32) -> (i32, i32) {
    %c0_i32 = arith.constant 0 : i32
    %c0_i32_0 = arith.constant 0 : i32
    %c0_i32_1 = arith.constant 0 : i32
    return %c0_i32, %c0_i32_0 : i32, i32
  }
  func.func @transform_4(%arg0: i32, %arg1: i32) -> (i32, i32) {
    %c0_i32 = arith.constant 0 : i32
    %c0_i32_0 = arith.constant 0 : i32
    %c0_i32_1 = arith.constant 0 : i32
    return %c0_i32, %c0_i32_0 : i32, i32
  }
  func.func @transform_5(%arg0: i32, %arg1: i32) -> (i32, i32, i32) {
    %c0_i32 = arith.constant 0 : i32
    %c0_i32_0 = arith.constant 0 : i32
    %c0_i32_1 = arith.constant 0 : i32
    return %arg0, %c0_i32, %c0_i32_0 : i32, i32, i32
  }
}

</mosaic_0001>

<llo_original>
// kernel: tpu_custom_call.1
$region0: #{tpu_custom_call.1}
  #allocation0 [shape = 'u32[]', space=smem, size = 0x4, offset = 0x4, fixed_abs, tag = 'smem constant byte address 0x4 - core index']
  #allocation1 [shape = 'u32[144,128]{1,0:T(1,128)}', space=vmem, size = 0x12000, scoped, tag = 'internal scratch']
  #allocation2 [shape = 'f32[8,128]{1,0:T(8,128)}', space=vmem, size = 0x1000, scoped, tag = 'scratch operand']
  #allocation3 [shape = 'f32[8,1]{1,0:T(8,128)}', space=vmem, size = 0x1000, scoped, tag = 'scratch operand']
  %s0 = inlined_call_operand.hbm [shape: f32[3,256], index: 0, kind: input, shape index: {}]
  %s1 = inlined_call_operand.hbm [shape: f32[2,8,3], index: 1, kind: input, shape index: {}]
  %s2 = inlined_call_operand.hbm [shape: f32[3,128], index: 2, kind: input, shape index: {}]
  %s3 = inlined_call_operand.hbm [shape: f32[128,3], index: 3, kind: input, shape index: {}]
  %s4 = inlined_call_operand.hbm [shape: f32[128,32], index: 4, kind: input, shape index: {}]
  %s5 = inlined_call_operand.hbm [shape: f32[2,8,32], index: 5, kind: output, shape index: {}]
  %s6 = sld [smem:[#allocation0]]
  $region81: #{tpu_custom_call.1} parent=0
    _
  %s8 = ssub.s32 1, %s6
  %s9 = scalar_select 0, %s8, %s6
  $region1: #{tpu_custom_call.1} parent=0
    #allocation4 [shape = 'u8[4096]{0}', space=vmem, size = 0x1000, scoped, tag = 'input window, operand 0']
    #allocation5 [shape = 's32[2]{0}', space=sflag, size = 0x8, scoped, tag = 'scoped memory for tpu_custom_call.1']
    #allocation6 [shape = 's32[2]{0}', space=sflag, size = 0x8, scoped, tag = 'scoped memory for tpu_custom_call.1']
    #allocation7 [shape = 'u8[8192]{0}', space=vmem, size = 0x2000, scoped, tag = 'input window, operand 1']
    #allocation8 [shape = 's32[2]{0}', space=sflag, size = 0x8, scoped, tag = 'scoped memory for tpu_custom_call.1']
    #allocation9 [shape = 'u8[2048]{0}', space=vmem, size = 0x800, scoped, tag = 'input window, operand 2, single buffered']
    #allocation10 [shape = 'u8[65536]{0}', space=vmem, size = 0x10000, scoped, tag = 'input window, operand 3, single buffered']
    #allocation11 [shape = 's32[1]{0}', space=sflag, size = 0x4, scoped, tag = 'scoped memory for tpu_custom_call.1']
    #allocation12 [shape = 'u8[65536]{0}', space=vmem, size = 0x10000, scoped, tag = 'input window, operand 4, single buffered']
    #allocation13 [shape = 'u8[8192]{0}', space=vmem, size = 0x2000, scoped, tag = 'output window, operand 0']
    %10 = vsyncpa [#allocation5], 0
    %s11 = scalar_lea.sflag [#allocation5], 1
    %12 = vsyncpa %s11, 0
    %13 = vsyncpa [#allocation8], 0
    %s14 = scalar_lea.sflag [#allocation8], 1
    %15 = vsyncpa %s14, 0
    %16 = vsyncpa [#allocation11], 0
    %17 = vsyncpa [#allocation6], 0
    %s18 = scalar_lea.sflag [#allocation6], 1
    %19 = vsyncpa %s18, 0
    loop: start=0, step=1, limit=6
    $region2: #{tpu_custom_call.1} parent=1 // loop_pre_header
      _
    $region3: #{tpu_custom_call.1} parent=1 // loop_header
      %s21 = sphi 0, %s25
      %p22 = scmp.ge.s32.totalorder %s21, 6
      %s28 = sphi 0, %s40
      %s29 = sphi 0, %s36
      %s30 = sphi 0, %s28
      %s31 = sphi 0, %s29
      %s32 = sphi 0, %s30
      %s33 = sphi 0, %s31
      %s43 = sphi 0, %s45
      %s46 = sphi 0, %s43
      %s47 = sphi 0, %s46
      %s63 = sphi 0, %s47
      %s69 = sphi 0, %s71
      %s72 = sphi 0, %s69
      %s73 = sphi 0, %s72
      %s89 = sphi 0, %s73
      %s93 = sphi 0, %s93
      %s95 = sphi 0, %s93
      %s96 = sphi 0, %s95
      %s110 = sphi 0, %s96
      %s114 = sphi 0, %s114
      %s116 = sphi 0, %s114
      %s117 = sphi 0, %s116
      %s131 = sphi 0, %s117
      %s135 = sphi 0, %s135
      %s137 = sphi 0, %s135
      %s138 = sphi 0, %s137
      %s152 = sphi 0, %s138
      %s158 = sphi 0, %s160
      %s161 = sphi 0, %s158
      %s162 = sphi 0, %s161
      %s178 = sphi 0, %s162
    $region4: #{tpu_custom_call.1} parent=1 // loop_header_branch
      %24 = sbr.rel (%p22) target = $region8
    $region5: #{tpu_custom_call.1} parent=1 // loop_body
      %s26 = ssub.s32 %s21, 1
      %s27 = ssub.s32 %s21, 2
      %s34 = sadd.s32 1, %s29
      %p35 = scmp.ge.s32.totalorder %s34, 2
      %s36 = scalar_select %p35, 0, %s34
      %s37 = sadd.s32 1, %s28
      %s38 = scalar_select %p35, %s37, %s28
      %p39 = scmp.ge.s32.totalorder %s38, 2
      %s40 = scalar_select %p39, 0, %s38
      %s41 = ssub.s32 %s29, %s36
      %p42 = scmp.eq.s32.totalorder %s41, 0
      %s44 = sadd.s32 %s43, 1
      %s45 = scalar_select %p42, %s43, %s44
      %p48 = pneg %p42
      %p49 = scmp.eq.s32.totalorder %s21, 3
      %p50 = por %p48, %p49
      %p51 = scmp.ne.s32.totalorder %s43, %s46
      %p52 = scmp.eq.s32.totalorder %s21, 0
      %p53 = por %p51, %p52
      %p54 = scmp.ne.s32.totalorder %s43, %s46
      %p55 = scmp.eq.s32.totalorder %s26, 3
      %p56 = por %p54, %p55
      %p57 = scmp.ne.s32.totalorder %s46, %s47
      %p58 = scmp.eq.s32.totalorder %s26, 0
      %p59 = por %p57, %p58
      %p60 = scmp.ne.s32.totalorder %s46, %s47
      %p61 = scmp.eq.s32.totalorder %s27, 3
      %p62 = por %p60, %p61
      %p64 = scmp.ne.s32.totalorder %s47, %s63
      %p65 = scmp.eq.s32.totalorder %s27, 0
      %p66 = por %p64, %p65
      %s67 = ssub.s32 %s28, %s40
      %p68 = scmp.eq.s32.totalorder %s67, 0
      %s70 = sadd.s32 %s69, 1
      %s71 = scalar_select %p68, %s69, %s70
      %p74 = pneg %p68
      %p75 = scmp.eq.s32.totalorder %s21, 3
      %p76 = por %p74, %p75
      %p77 = scmp.ne.s32.totalorder %s69, %s72
      %p78 = scmp.eq.s32.totalorder %s21, 0
      %p79 = por %p77, %p78
      %p80 = scmp.ne.s32.totalorder %s69, %s72
      %p81 = scmp.eq.s32.totalorder %s26, 3
      %p82 = por %p80, %p81
      %p83 = scmp.ne.s32.totalorder %s72, %s73
      %p84 = scmp.eq.s32.totalorder %s26, 0
      %p85 = por %p83, %p84
      %p86 = scmp.ne.s32.totalorder %s72, %s73
      %p87 = scmp.eq.s32.totalorder %s27, 3
      %p88 = por %p86, %p87
      %p90 = scmp.ne.s32.totalorder %s73, %s89
      %p91 = scmp.eq.s32.totalorder %s27, 0
      %p92 = por %p90, %p91
      %s94 = sadd.s32 %s93, 1
      %p97 = scmp.eq.s32.totalorder %s21, 3
      %p98 = scmp.ne.s32.totalorder %s93, %s95
      %p99 = scmp.eq.s32.totalorder %s21, 0
      %p100 = por %p98, %p99
      %p101 = scmp.ne.s32.totalorder %s93, %s95
      %p102 = scmp.eq.s32.totalorder %s26, 3
      %p103 = por %p101, %p102
      %p104 = scmp.ne.s32.totalorder %s95, %s96
      %p105 = scmp.eq.s32.totalorder %s26, 0
      %p106 = por %p104, %p105
      %p107 = scmp.ne.s32.totalorder %s95, %s96
      %p108 = scmp.eq.s32.totalorder %s27, 3
      %p109 = por %p107, %p108
      %p111 = scmp.ne.s32.totalorder %s96, %s110
      %p112 = scmp.eq.s32.totalorder %s27, 0
      %p113 = por %p111, %p112
      %s115 = sadd.s32 %s114, 1
      %p118 = scmp.eq.s32.totalorder %s21, 3
      %p119 = scmp.ne.s32.totalorder %s114, %s116
      %p120 = scmp.eq.s32.totalorder %s21, 0
      %p121 = por %p119, %p120
      %p122 = scmp.ne.s32.totalorder %s114, %s116
      %p123 = scmp.eq.s32.totalorder %s26, 3
      %p124 = por %p122, %p123
      %p125 = scmp.ne.s32.totalorder %s116, %s117
      %p126 = scmp.eq.s32.totalorder %s26, 0
      %p127 = por %p125, %p126
      %p128 = scmp.ne.s32.totalorder %s116, %s117
      %p129 = scmp.eq.s32.totalorder %s27, 3
      %p130 = por %p128, %p129
      %p132 = scmp.ne.s32.totalorder %s117, %s131
      %p133 = scmp.eq.s32.totalorder %s27, 0
      %p134 = por %p132, %p133
      %s136 = sadd.s32 %s135, 1
      %p139 = scmp.eq.s32.totalorder %s21, 3
      %p140 = scmp.ne.s32.totalorder %s135, %s137
      %p141 = scmp.eq.s32.totalorder %s21, 0
      %p142 = por %p140, %p141
      %p143 = scmp.ne.s32.totalorder %s135, %s137
      %p144 = scmp.eq.s32.totalorder %s26, 3
      %p145 = por %p143, %p144
      %p146 = scmp.ne.s32.totalorder %s137, %s138
      %p147 = scmp.eq.s32.totalorder %s26, 0
      %p148 = por %p146, %p147
      %p149 = scmp.ne.s32.totalorder %s137, %s138
      %p150 = scmp.eq.s32.totalorder %s27, 3
      %p151 = por %p149, %p150
      %p153 = scmp.ne.s32.totalorder %s138, %s152
      %p154 = scmp.eq.s32.totalorder %s27, 0
      %p155 = por %p153, %p154
      %s156 = ssub.s32 %s28, %s40
      %p157 = scmp.eq.s32.totalorder %s156, 0
      %s159 = sadd.s32 %s158, 1
      %s160 = scalar_select %p157, %s158, %s159
      %p163 = pneg %p157
      %p164 = scmp.eq.s32.totalorder %s21, 3
      %p165 = por %p163, %p164
      %p166 = scmp.ne.s32.totalorder %s158, %s161
      %p167 = scmp.eq.s32.totalorder %s21, 0
      %p168 = por %p166, %p167
      %p169 = scmp.ne.s32.totalorder %s158, %s161
      %p170 = scmp.eq.s32.totalorder %s26, 3
      %p171 = por %p169, %p170
      %p172 = scmp.ne.s32.totalorder %s161, %s162
      %p173 = scmp.eq.s32.totalorder %s26, 0
      %p174 = por %p172, %p173
      %p175 = scmp.ne.s32.totalorder %s161, %s162
      %p176 = scmp.eq.s32.totalorder %s27, 3
      %p177 = por %p175, %p176
      %p179 = scmp.ne.s32.totalorder %s162, %s178
      %p180 = scmp.eq.s32.totalorder %s27, 0
      %p181 = por %p179, %p180
      %p182 = scmp.le.s32.totalorder 1, %s21
      %p183 = scmp.lt.s32.totalorder %s21, 5
      %p184 = pnand %p182, %p183
      %p185 = pneg %p184
      // Predicated region
      $region9: #{tpu_custom_call.1} parent=5 // pred_check
        _
      $region10: #{tpu_custom_call.1} parent=5 // pred_check_branch
        %187 = sbr.rel (%p184) target = $region12
      $region11: #{tpu_custom_call.1} parent=5 // pred_region
        %s188 = ssub.s32 %s21, 1
        // Predicated region
        $region13: #{tpu_custom_call.1} parent=11 // pred_check
          %p189 = pneg %p106
        $region14: #{tpu_custom_call.1} parent=11 // pred_check_branch
          %191 = sbr.rel (%p189) target = $region16
        $region15: #{tpu_custom_call.1} parent=11 // pred_region
          %s193 = ssub.s32 64, 64
          %194 = vsyncadd [#allocation8], %s193
          %s196 = sshll.u32 [#allocation9], 4
          %s197 = int_to_ptr.vmem [resolvable:$true] %s196
          %199 = dma.hbm_to_vmem [thread:$0]  %s2, 64, %s197, [#allocation8]
        $region16: #{tpu_custom_call.1} parent=11 // pred_fallthru
          _
        // Predicated region
        $region17: #{tpu_custom_call.1} parent=11 // pred_check
          %p200 = pneg %p127
        $region18: #{tpu_custom_call.1} parent=11 // pred_check_branch
          %202 = sbr.rel (%p200) target = $region20
        $region19: #{tpu_custom_call.1} parent=11 // pred_region
          %s204 = ssub.s32 2048, 2048
          %205 = vsyncadd [#allocation11], %s204
          %s206 = sshll.u32 [#allocation10], 4
          %s207 = int_to_ptr.vmem [resolvable:$true] %s206
          %212 = dma.hbm_to_vmem [thread:$0]  %s3, 2048, %s207, [#allocation11], 128, 128, 8
        $region20: #{tpu_custom_call.1} parent=11 // pred_fallthru
          _
        // Predicated region
        $region21: #{tpu_custom_call.1} parent=11 // pred_check
          %p213 = pneg %p148
        $region22: #{tpu_custom_call.1} parent=11 // pred_check_branch
          %215 = sbr.rel (%p213) target = $region24
        $region23: #{tpu_custom_call.1} parent=11 // pred_region
          %s217 = ssub.s32 2048, 2048
          %218 = vsyncadd [#allocation11], %s217
          %s219 = sshll.u32 [#allocation12], 4
          %s220 = int_to_ptr.vmem [resolvable:$true] %s219
          %225 = dma.hbm_to_vmem [thread:$0]  %s4, 2048, %s220, [#allocation11], 128, 128, 8
        $region24: #{tpu_custom_call.1} parent=11 // pred_fallthru
          _
      $region12: #{tpu_custom_call.1} parent=5 // pred_fallthru
        _
      %p226 = scmp.lt.s32.totalorder %s21, 4
      // Predicated region
      $region25: #{tpu_custom_call.1} parent=5 // pred_check
        %p227 = pneg %p226
      $region26: #{tpu_custom_call.1} parent=5 // pred_check_branch
        %229 = sbr.rel (%p227) target = $region28
      $region27: #{tpu_custom_call.1} parent=5 // pred_region
        // Predicated region
        $region29: #{tpu_custom_call.1} parent=27 // pred_check
          %p230 = pneg %p53
        $region30: #{tpu_custom_call.1} parent=27 // pred_check_branch
          %232 = sbr.rel (%p230) target = $region32
        $region31: #{tpu_custom_call.1} parent=27 // pred_region
          %s233 = sand.u32 %s43, 1
          %s234 = scalar_lea.sflag [#allocation5], %s233
          %s235 = sand.u32 %s43, 1
          %s236 = smul.addr %s235, 4
          %s237 = scalar_lea.vmem [#allocation4], %s236
          %s239 = ssub.s32 64, 64
          %240 = vsyncadd %s234, %s239
          %s241 = smul.addr %s29, 64
          %s242 = scalar_lea.hbm %s0, %s241
          %s244 = sshll.u32 %s237, 4
          %s245 = int_to_ptr.vmem [resolvable:$true] %s244
          %247 = dma.hbm_to_vmem [thread:$0]  %s242, 64, %s245, %s234
        $region32: #{tpu_custom_call.1} parent=27 // pred_fallthru
          _
        // Predicated region
        $region33: #{tpu_custom_call.1} parent=27 // pred_check
          %p248 = pneg %p79
        $region34: #{tpu_custom_call.1} parent=27 // pred_check_branch
          %250 = sbr.rel (%p248) target = $region36
        $region35: #{tpu_custom_call.1} parent=27 // pred_region
          %s251 = sand.u32 %s21, 1
          %s252 = scalar_lea.sflag [#allocation8], %s251
          %s253 = sand.u32 %s69, 1
          %s254 = smul.addr %s253, 8
          %s255 = scalar_lea.vmem [#allocation7], %s254
          %s257 = ssub.s32 128, 128
          %258 = vsyncadd %s252, %s257
          %s259 = smul.addr %s28, 128
          %s260 = scalar_lea.hbm %s1, %s259
          %s262 = sshll.u32 %s255, 4
          %s263 = int_to_ptr.vmem [resolvable:$true] %s262
          %265 = dma.hbm_to_vmem [thread:$0]  %s260, 128, %s263, %s252
        $region36: #{tpu_custom_call.1} parent=27 // pred_fallthru
          _
      $region28: #{tpu_custom_call.1} parent=5 // pred_fallthru
        _
      %p266 = scmp.le.s32.totalorder 1, %s21
      %p267 = scmp.lt.s32.totalorder %s21, 5
      %p268 = pnand %p266, %p267
      %p269 = pneg %p268
      // Predicated region
      $region37: #{tpu_custom_call.1} parent=5 // pred_check
        _
      $region38: #{tpu_custom_call.1} parent=5 // pred_check_branch
        %271 = sbr.rel (%p268) target = $region40
      $region39: #{tpu_custom_call.1} parent=5 // pred_region
        %s272 = ssub.s32 %s21, 1
        %s273 = sand.u32 %s46, 1
        %s274 = scalar_lea.sflag [#allocation5], %s273
        %s275 = sand.u32 %s46, 1
        %s276 = smul.addr %s275, 4
        %s277 = scalar_lea.vmem [#allocation4], %s276
        // Predicated region
        $region41: #{tpu_custom_call.1} parent=39 // pred_check
          %p278 = pneg %p59
        $region42: #{tpu_custom_call.1} parent=39 // pred_check_branch
          %280 = sbr.rel (%p278) target = $region44
        $region43: #{tpu_custom_call.1} parent=39 // pred_region
          %281 = dma.done %s274, 64
        $region44: #{tpu_custom_call.1} parent=39 // pred_fallthru
          _
        %s282 = sand.u32 %s26, 1
        %s283 = scalar_lea.sflag [#allocation8], %s282
        %s284 = sand.u32 %s72, 1
        %s285 = smul.addr %s284, 8
        %s286 = scalar_lea.vmem [#allocation7], %s285
        // Predicated region
        $region45: #{tpu_custom_call.1} parent=39 // pred_check
          %p287 = pneg %p85
        $region46: #{tpu_custom_call.1} parent=39 // pred_check_branch
          %289 = sbr.rel (%p287) target = $region48
        $region47: #{tpu_custom_call.1} parent=39 // pred_region
          %290 = dma.done %s283, 128
        $region48: #{tpu_custom_call.1} parent=39 // pred_fallthru
          _
        // Predicated region
        $region49: #{tpu_custom_call.1} parent=39 // pred_check
          %p291 = pneg %p106
        $region50: #{tpu_custom_call.1} parent=39 // pred_check_branch
          %293 = sbr.rel (%p291) target = $region52
        $region51: #{tpu_custom_call.1} parent=39 // pred_region
          %294 = dma.done [#allocation8], 64
        $region52: #{tpu_custom_call.1} parent=39 // pred_fallthru
          _
        // Predicated region
        $region53: #{tpu_custom_call.1} parent=39 // pred_check
          %p295 = pneg %p127
        $region54: #{tpu_custom_call.1} parent=39 // pred_check_branch
          %297 = sbr.rel (%p295) target = $region56
        $region55: #{tpu_custom_call.1} parent=39 // pred_region
          %298 = dma.done [#allocation11], 2048
        $region56: #{tpu_custom_call.1} parent=39 // pred_fallthru
          _
        // Predicated region
        $region57: #{tpu_custom_call.1} parent=39 // pred_check
          %p299 = pneg %p148
        $region58: #{tpu_custom_call.1} parent=39 // pred_check_branch
          %301 = sbr.rel (%p299) target = $region60
        $region59: #{tpu_custom_call.1} parent=39 // pred_region
          %302 = dma.done [#allocation11], 2048
        $region60: #{tpu_custom_call.1} parent=39 // pred_fallthru
          _
        %s303 = sand.u32 %s46, 1
        %s304 = scalar_lea.sflag [#allocation5], %s303
        %s305 = sand.u32 %s46, 1
        %s306 = smul.addr %s305, 4
        %s307 = scalar_lea.vmem [#allocation4], %s306
        %p308 = pneg %p59
        %p309 = pneg %p56
        %s310 = sand.u32 %s26, 1
        %s311 = scalar_lea.sflag [#allocation8], %s310
        %s312 = sand.u32 %s72, 1
        %s313 = smul.addr %s312, 8
        %s314 = scalar_lea.vmem [#allocation7], %s313
        %p315 = pneg %p85
        %p316 = pneg %p82
        %p317 = pneg %p106
        %p318 = pneg %p103
        %p319 = pneg %p127
        %p320 = pneg %p124
        %p321 = pneg %p148
        %p322 = pneg %p145
        %p323 = pneg %p174
        %p324 = pneg %p171
        %s325 = sand.u32 %s161, 1
        %s326 = scalar_lea.sflag [#allocation6], %s325
        %s327 = sand.u32 %s161, 1
        %s328 = smul.addr %s327, 8
        %s329 = scalar_lea.vmem [#allocation13], %s328
        %p330 = scmp.eq.s32.totalorder %s31, 0
        // Predicated region
        $region61: #{tpu_custom_call.1} parent=39 // pred_check
          %p331 = pneg %p330
        $region62: #{tpu_custom_call.1} parent=39 // pred_check_branch
          %333 = sbr.rel (%p331) target = $region64
        $region63: #{tpu_custom_call.1} parent=39 // pred_region
          %334 = vst [vmem:[#allocation2] sm:$0xff] 0.0
          %vm335 = vcmask 7168
          %336 = vst.msk [vmem:[#allocation3] sm:$0xff] %vm335, 0.0
        $region64: #{tpu_custom_call.1} parent=39 // pred_fallthru
          _
        %v337 = vld [vmem:[%s277] sm:$0x7]
        %v338 = vld [vmem:[%s286] sm:$0xff]
        %v339 = vld [vmem:[#allocation9] sm:$0x7]
        %v340 = vld [vmem:[#allocation10] sm:$0xff]
        %v341 = vld [vmem:[#allocation10 + $0x8] sm:$0xff]
        %v342 = vld [vmem:[#allocation10 + $0x10] sm:$0xff]
        %v343 = vld [vmem:[#allocation10 + $0x18] sm:$0xff]
        %v344 = vld [vmem:[#allocation10 + $0x20] sm:$0xff]
        %v345 = vld [vmem:[#allocation10 + $0x28] sm:$0xff]
        %v346 = vld [vmem:[#allocation10 + $0x30] sm:$0xff]
        %v347 = vld [vmem:[#allocation10 + $0x38] sm:$0xff]
        %v348 = vld [vmem:[#allocation10 + $0x40] sm:$0xff]
        %v349 = vld [vmem:[#allocation10 + $0x48] sm:$0xff]
        %v350 = vld [vmem:[#allocation10 + $0x50] sm:$0xff]
        %v351 = vld [vmem:[#allocation10 + $0x58] sm:$0xff]
        %v352 = vld [vmem:[#allocation10 + $0x60] sm:$0xff]
        %v353 = vld [vmem:[#allocation10 + $0x68] sm:$0xff]
        %v354 = vld [vmem:[#allocation10 + $0x70] sm:$0xff]
        %v355 = vld [vmem:[#allocation10 + $0x78] sm:$0xff]
        %v356 = vmul.f32 %v337, %v337
        %vm357 = vcmask 1042432
        %v358 = vsel %vm357, %v356, 0.0
        %v359 = vrot.slane %v358, 4
        %v360 = vadd.f32 %v358, %v359
        %v361 = vrot.slane %v360, 2
        %v362 = vadd.f32 %v360, %v361
        %v363 = vrot.slane %v362, 1
        %v364 = vadd.f32 %v362, %v363
        %v365 = vmul.f32 %v338, %v338
        %vm366 = vcmask 23552
        %v367 = vsel %vm366, %v365, 0.0
        %368 = vadd.xlane.f32.xlu0 %v367
        %v369 = vpop.xlane.xlu0 %368
        %v370 = vmul.f32 %v339, %v339
        %v371 = vsel %vm357, %v370, 0.0
        %v372 = vrot.slane %v371, 4
        %v373 = vadd.f32 %v371, %v372
        %v374 = vrot.slane %v373, 2
        %v375 = vadd.f32 %v373, %v374
        %v376 = vrot.slane %v375, 1
        %v377 = vadd.f32 %v375, %v376
        %v379 = vsel %vm366, %v338, 0
        %v382 = vsel %vm357, %v337, 0
        %384 = vmatprep.subr.mxu0 0.0
        %v385 = vand.u32 %v382, 4294901760
        %386 = vmatpush1.msra.mxu0 %v385
        %387 = vmatprep.subr.mxu0 0.0
        %388 = vmatpush1.msra.mxu0 0.0
        %389 = vmatprep.subr.mxu0 0.0
        %390 = vmatpush1.msra.mxu0 0.0
        %391 = vmatprep.subr.mxu0 0.0
        %392 = vmatpush1.msra.mxu0 0.0
        %393 = vmatprep.subr.mxu0 0.0
        %394 = vmatpush1.msra.mxu0 0.0
        %395 = vmatprep.subr.mxu0 0.0
        %396 = vmatpush1.msra.mxu0 0.0
        %397 = vmatprep.subr.mxu0 0.0
        %398 = vmatpush1.msra.mxu0 0.0
        %399 = vmatprep.subr.mxu0 0.0
        %400 = vmatpush1.msra.mxu0 0.0
        %401 = vmatprep.subr.mxu0 0.0
        %402 = vmatpush1.msra.mxu0 0.0
        %403 = vmatprep.subr.mxu0 0.0
        %404 = vmatpush1.msra.mxu0 0.0
        %405 = vmatprep.subr.mxu0 0.0
        %406 = vmatpush1.msra.mxu0 0.0
        %407 = vmatprep.subr.mxu0 0.0
        %408 = vmatpush1.msra.mxu0 0.0
        %409 = vmatprep.subr.mxu0 0.0
        %410 = vmatpush1.msra.mxu0 0.0
        %411 = vmatprep.subr.mxu0 0.0
        %412 = vmatpush1.msra.mxu0 0.0
        %413 = vmatprep.subr.mxu0 0.0
        %414 = vmatpush1.msra.mxu0 0.0
        %415 = vmatprep.subr.mxu0 0.0
        %416 = vmatpush1.msra.mxu0 0.0
        %417 = vmatprep.subr.mxu0 0.0
        %418 = vmatpush1.msra.mxu0 0.0
        %419 = vmatprep.subr.mxu0 0.0
        %420 = vmatpush1.msra.mxu0 0.0
        %421 = vmatprep.subr.mxu0 0.0
        %422 = vmatpush1.msra.mxu0 0.0
        %423 = vmatprep.subr.mxu0 0.0
        %424 = vmatpush1.msra.mxu0 0.0
        %425 = vmatprep.subr.mxu0 0.0
        %426 = vmatpush1.msra.mxu0 0.0
        %427 = vmatprep.subr.mxu0 0.0
        %428 = vmatpush1.msra.mxu0 0.0
        %429 = vmatprep.subr.mxu0 0.0
        %430 = vmatpush1.msra.mxu0 0.0
        %431 = vmatprep.subr.mxu0 0.0
        %432 = vmatpush1.msra.mxu0 0.0
        %433 = vmatprep.subr.mxu0 0.0
        %434 = vmatpush1.msra.mxu0 0.0
        %435 = vmatprep.subr.mxu0 0.0
        %436 = vmatpush1.msra.mxu0 0.0
        %437 = vmatprep.subr.mxu0 0.0
        %438 = vmatpush1.msra.mxu0 0.0
        %439 = vmatprep.subr.mxu0 0.0
        %440 = vmatpush1.msra.mxu0 0.0
        %441 = vmatprep.subr.mxu0 0.0
        %442 = vmatpush1.msra.mxu0 0.0
        %443 = vmatprep.subr.mxu0 0.0
        %444 = vmatpush1.msra.mxu0 0.0
        %445 = vmatprep.subr.mxu0 0.0
        %446 = vmatpush1.msra.mxu0 0.0
        %447 = vmatprep.subr.mxu0 0.0
        %448 = vmatpush1.msra.mxu0 0.0
        %449 = vmatprep.mubr.f32.mxu0 0.0
        %v450 = vand.u32 %v379, 4294901760
        %v451 = vsub.f32 %v379, %v450
        %v452 = vand.u32 %v451, 4294901760
        %v453 = vsub.f32 %v451, %v452
        %v454 = vand.u32 %v453, 4294901760
        %455 = vmatmul.mubr.f32.gmra.mrb[0].mxu0 %v454
        %v456 = vpop.f32.mrb[0].mxu0
        %v457 = vadd.f32 0.0, %v456
        %v458 = vpop.f32.mrb[0].mxu0
        %459 = vdwg.mxu0
        %460 = vmatprep.subr.mxu0 0.0
        %v461 = vand.u32 %v382, 4294901760
        %v462 = vsub.f32 %v382, %v461
        %v463 = vand.u32 %v462, 4294901760
        %v464 = vsub.f32 %v462, %v463
        %v465 = vand.u32 %v464, 4294901760
        %466 = vmatpush1.msra.mxu0 %v465
        %467 = vmatprep.subr.mxu0 0.0
        %468 = vmatpush1.msra.mxu0 0.0
        %469 = vmatprep.subr.mxu0 0.0
        %470 = vmatpush1.msra.mxu0 0.0
        %471 = vmatprep.subr.mxu0 0.0
        %472 = vmatpush1.msra.mxu0 0.0
        %473 = vmatprep.subr.mxu0 0.0
        %474 = vmatpush1.msra.mxu0 0.0
        %475 = vmatprep.subr.mxu0 0.0
        %476 = vmatpush1.msra.mxu0 0.0
        %477 = vmatprep.subr.mxu0 0.0
        %478 = vmatpush1.msra.mxu0 0.0
        %479 = vmatprep.subr.mxu0 0.0
        %480 = vmatpush1.msra.mxu0 0.0
        %481 = vmatprep.subr.mxu0 0.0
        %482 = vmatpush1.msra.mxu0 0.0
        %483 = vmatprep.subr.mxu0 0.0
        %484 = vmatpush1.msra.mxu0 0.0
        %485 = vmatprep.subr.mxu0 0.0
        %486 = vmatpush1.msra.mxu0 0.0
        %487 = vmatprep.subr.mxu0 0.0
        %488 = vmatpush1.msra.mxu0 0.0
        %489 = vmatprep.subr.mxu0 0.0
        %490 = vmatpush1.msra.mxu0 0.0
        %491 = vmatprep.subr.mxu0 0.0
        %492 = vmatpush1.msra.mxu0 0.0
        %493 = vmatprep.subr.mxu0 0.0
        %494 = vmatpush1.msra.mxu0 0.0
        %495 = vmatprep.subr.mxu0 0.0
        %496 = vmatpush1.msra.mxu0 0.0
        %497 = vmatprep.subr.mxu0 0.0
        %498 = vmatpush1.msra.mxu0 0.0
        %499 = vmatprep.subr.mxu0 0.0
        %500 = vmatpush1.msra.mxu0 0.0
        %501 = vmatprep.subr.mxu0 0.0
        %502 = vmatpush1.msra.mxu0 0.0
        %503 = vmatprep.subr.mxu0 0.0
        %504 = vmatpush1.msra.mxu0 0.0
        %505 = vmatprep.subr.mxu0 0.0
        %506 = vmatpush1.msra.mxu0 0.0
        %507 = vmatprep.subr.mxu0 0.0
        %508 = vmatpush1.msra.mxu0 0.0
        %509 = vmatprep.subr.mxu0 0.0
        %510 = vmatpush1.msra.mxu0 0.0
        %511 = vmatprep.subr.mxu0 0.0
        %512 = vmatpush1.msra.mxu0 0.0
        %513 = vmatprep.subr.mxu0 0.0
        %514 = vmatpush1.msra.mxu0 0.0
        %515 = vmatprep.subr.mxu0 0.0
        %516 = vmatpush1.msra.mxu0 0.0
        %517 = vmatprep.subr.mxu0 0.0
        %518 = vmatpush1.msra.mxu0 0.0
        %519 = vmatprep.subr.mxu0 0.0
        %520 = vmatpush1.msra.mxu0 0.0
        %521 = vmatprep.subr.mxu0 0.0
        %522 = vmatpush1.msra.mxu0 0.0
        %523 = vmatprep.subr.mxu0 0.0
        %524 = vmatpush1.msra.mxu0 0.0
        %525 = vmatprep.subr.mxu0 0.0
        %526 = vmatpush1.msra.mxu0 0.0
        %527 = vmatprep.subr.mxu0 0.0
        %528 = vmatpush1.msra.mxu0 0.0
        %529 = vmatprep.mubr.f32.mxu0 0.0
        %v530 = vand.u32 %v379, 4294901760
        %531 = vmatmul.mubr.f32.gmra.mrb[0].mxu0 %v530
        %v532 = vpop.f32.mrb[0].mxu0
        %v533 = vadd.f32 %v457, %v532
        %v534 = vpop.f32.mrb[0].mxu0
        %535 = vdwg.mxu0
        %536 = vmatprep.subr.mxu0 0.0
        %v537 = vand.u32 %v382, 4294901760
        %v538 = vsub.f32 %v382, %v537
        %539 = vmatpush1.msra.mxu0 %v538
        %540 = vmatprep.subr.mxu0 0.0
        %541 = vmatpush1.msra.mxu0 0.0
        %542 = vmatprep.subr.mxu0 0.0
        %543 = vmatpush1.msra.mxu0 0.0
        %544 = vmatprep.subr.mxu0 0.0
        %545 = vmatpush1.msra.mxu0 0.0
        %546 = vmatprep.subr.mxu0 0.0
        %547 = vmatpush1.msra.mxu0 0.0
        %548 = vmatprep.subr.mxu0 0.0
        %549 = vmatpush1.msra.mxu0 0.0
        %550 = vmatprep.subr.mxu0 0.0
        %551 = vmatpush1.msra.mxu0 0.0
        %552 = vmatprep.subr.mxu0 0.0
        %553 = vmatpush1.msra.mxu0 0.0
        %554 = vmatprep.subr.mxu0 0.0
        %555 = vmatpush1.msra.mxu0 0.0
        %556 = vmatprep.subr.mxu0 0.0
        %557 = vmatpush1.msra.mxu0 0.0
        %558 = vmatprep.subr.mxu0 0.0
        %559 = vmatpush1.msra.mxu0 0.0
        %560 = vmatprep.subr.mxu0 0.0
        %561 = vmatpush1.msra.mxu0 0.0
        %562 = vmatprep.subr.mxu0 0.0
        %563 = vmatpush1.msra.mxu0 0.0
        %564 = vmatprep.subr.mxu0 0.0
        %565 = vmatpush1.msra.mxu0 0.0
        %566 = vmatprep.subr.mxu0 0.0
        %567 = vmatpush1.msra.mxu0 0.0
        %568 = vmatprep.subr.mxu0 0.0
        %569 = vmatpush1.msra.mxu0 0.0
        %570 = vmatprep.subr.mxu0 0.0
        %571 = vmatpush1.msra.mxu0 0.0
        %572 = vmatprep.subr.mxu0 0.0
        %573 = vmatpush1.msra.mxu0 0.0
        %574 = vmatprep.subr.mxu0 0.0
        %575 = vmatpush1.msra.mxu0 0.0
        %576 = vmatprep.subr.mxu0 0.0
        %577 = vmatpush1.msra.mxu0 0.0
        %578 = vmatprep.subr.mxu0 0.0
        %579 = vmatpush1.msra.mxu0 0.0
        %580 = vmatprep.subr.mxu0 0.0
        %581 = vmatpush1.msra.mxu0 0.0
        %582 = vmatprep.subr.mxu0 0.0
        %583 = vmatpush1.msra.mxu0 0.0
        %584 = vmatprep.subr.mxu0 0.0
        %585 = vmatpush1.msra.mxu0 0.0
        %586 = vmatprep.subr.mxu0 0.0
        %587 = vmatpush1.msra.mxu0 0.0
        %588 = vmatprep.subr.mxu0 0.0
        %589 = vmatpush1.msra.mxu0 0.0
        %590 = vmatprep.subr.mxu0 0.0
        %591 = vmatpush1.msra.mxu0 0.0
        %592 = vmatprep.subr.mxu0 0.0
        %593 = vmatpush1.msra.mxu0 0.0
        %594 = vmatprep.subr.mxu0 0.0
        %595 = vmatpush1.msra.mxu0 0.0
        %596 = vmatprep.subr.mxu0 0.0
        %597 = vmatpush1.msra.mxu0 0.0
        %598 = vmatprep.subr.mxu0 0.0
        %599 = vmatpush1.msra.mxu0 0.0
        %600 = vmatprep.subr.mxu0 0.0
        %601 = vmatpush1.msra.mxu0 0.0
        %602 = vmatprep.mubr.f32.mxu0 0.0
        %v603 = vand.u32 %v379, 4294901760
        %v604 = vsub.f32 %v379, %v603
        %605 = vmatmul.mubr.f32.gmra.mrb[0].mxu0 %v604
        %v606 = vpop.f32.mrb[0].mxu0
        %v607 = vadd.f32 %v533, %v606
        %v608 = vpop.f32.mrb[0].mxu0
        %609 = vdwg.mxu0
        %610 = vmatprep.subr.mxu0 0.0
        %v611 = vand.u32 %v382, 4294901760
        %612 = vmatpush1.msra.mxu0 %v611
        %613 = vmatprep.subr.mxu0 0.0
        %614 = vmatpush1.msra.mxu0 0.0
        %615 = vmatprep.subr.mxu0 0.0
        %616 = vmatpush1.msra.mxu0 0.0
        %617 = vmatprep.subr.mxu0 0.0
        %618 = vmatpush1.msra.mxu0 0.0
        %619 = vmatprep.subr.mxu0 0.0
        %620 = vmatpush1.msra.mxu0 0.0
        %621 = vmatprep.subr.mxu0 0.0
        %622 = vmatpush1.msra.mxu0 0.0
        %623 = vmatprep.subr.mxu0 0.0
        %624 = vmatpush1.msra.mxu0 0.0
        %625 = vmatprep.subr.mxu0 0.0
        %626 = vmatpush1.msra.mxu0 0.0
        %627 = vmatprep.subr.mxu0 0.0
        %628 = vmatpush1.msra.mxu0 0.0
        %629 = vmatprep.subr.mxu0 0.0
        %630 = vmatpush1.msra.mxu0 0.0
        %631 = vmatprep.subr.mxu0 0.0
        %632 = vmatpush1.msra.mxu0 0.0
        %633 = vmatprep.subr.mxu0 0.0
        %634 = vmatpush1.msra.mxu0 0.0
        %635 = vmatprep.subr.mxu0 0.0
        %636 = vmatpush1.msra.mxu0 0.0
        %637 = vmatprep.subr.mxu0 0.0
        %638 = vmatpush1.msra.mxu0 0.0
        %639 = vmatprep.subr.mxu0 0.0
        %640 = vmatpush1.msra.mxu0 0.0
        %641 = vmatprep.subr.mxu0 0.0
        %642 = vmatpush1.msra.mxu0 0.0
        %643 = vmatprep.subr.mxu0 0.0
        %644 = vmatpush1.msra.mxu0 0.0
        %645 = vmatprep.subr.mxu0 0.0
        %646 = vmatpush1.msra.mxu0 0.0
        %647 = vmatprep.subr.mxu0 0.0
        %648 = vmatpush1.msra.mxu0 0.0
        %649 = vmatprep.subr.mxu0 0.0
        %650 = vmatpush1.msra.mxu0 0.0
        %651 = vmatprep.subr.mxu0 0.0
        %652 = vmatpush1.msra.mxu0 0.0
        %653 = vmatprep.subr.mxu0 0.0
        %654 = vmatpush1.msra.mxu0 0.0
        %655 = vmatprep.subr.mxu0 0.0
        %656 = vmatpush1.msra.mxu0 0.0
        %657 = vmatprep.subr.mxu0 0.0
        %658 = vmatpush1.msra.mxu0 0.0
        %659 = vmatprep.subr.mxu0 0.0
        %660 = vmatpush1.msra.mxu0 0.0
        %661 = vmatprep.subr.mxu0 0.0
        %662 = vmatpush1.msra.mxu0 0.0
        %663 = vmatprep.subr.mxu0 0.0
        %664 = vmatpush1.msra.mxu0 0.0
        %665 = vmatprep.subr.mxu0 0.0
        %666 = vmatpush1.msra.mxu0 0.0
        %667 = vmatprep.subr.mxu0 0.0
        %668 = vmatpush1.msra.mxu0 0.0
        %669 = vmatprep.subr.mxu0 0.0
        %670 = vmatpush1.msra.mxu0 0.0
        %671 = vmatprep.subr.mxu0 0.0
        %672 = vmatpush1.msra.mxu0 0.0
        %673 = vmatprep.subr.mxu0 0.0
        %674 = vmatpush1.msra.mxu0 0.0
        %675 = vmatprep.mubr.f32.mxu0 0.0
        %v676 = vand.u32 %v379, 4294901760
        %v677 = vsub.f32 %v379, %v676
        %v678 = vand.u32 %v677, 4294901760
        %679 = vmatmul.mubr.f32.gmra.mrb[0].mxu0 %v678
        %v680 = vpop.f32.mrb[0].mxu0
        %v681 = vadd.f32 %v607, %v680
        %v682 = vpop.f32.mrb[0].mxu0
        %683 = vdwg.mxu0
        %684 = vmatprep.subr.mxu0 0.0
        %v685 = vand.u32 %v382, 4294901760
        %v686 = vsub.f32 %v382, %v685
        %v687 = vand.u32 %v686, 4294901760
        %688 = vmatpush1.msra.mxu0 %v687
        %689 = vmatprep.subr.mxu0 0.0
        %690 = vmatpush1.msra.mxu0 0.0
        %691 = vmatprep.subr.mxu0 0.0
        %692 = vmatpush1.msra.mxu0 0.0
        %693 = vmatprep.subr.mxu0 0.0
        %694 = vmatpush1.msra.mxu0 0.0
        %695 = vmatprep.subr.mxu0 0.0
        %696 = vmatpush1.msra.mxu0 0.0
        %697 = vmatprep.subr.mxu0 0.0
        %698 = vmatpush1.msra.mxu0 0.0
        %699 = vmatprep.subr.mxu0 0.0
        %700 = vmatpush1.msra.mxu0 0.0
        %701 = vmatprep.subr.mxu0 0.0
        %702 = vmatpush1.msra.mxu0 0.0
        %703 = vmatprep.subr.mxu0 0.0
        %704 = vmatpush1.msra.mxu0 0.0
        %705 = vmatprep.subr.mxu0 0.0
        %706 = vmatpush1.msra.mxu0 0.0
        %707 = vmatprep.subr.mxu0 0.0
        %708 = vmatpush1.msra.mxu0 0.0
        %709 = vmatprep.subr.mxu0 0.0
        %710 = vmatpush1.msra.mxu0 0.0
        %711 = vmatprep.subr.mxu0 0.0
        %712 = vmatpush1.msra.mxu0 0.0
        %713 = vmatprep.subr.mxu0 0.0
        %714 = vmatpush1.msra.mxu0 0.0
        %715 = vmatprep.subr.mxu0 0.0
        %716 = vmatpush1.msra.mxu0 0.0
        %717 = vmatprep.subr.mxu0 0.0
        %718 = vmatpush1.msra.mxu0 0.0
        %719 = vmatprep.subr.mxu0 0.0
        %720 = vmatpush1.msra.mxu0 0.0
        %721 = vmatprep.subr.mxu0 0.0
        %722 = vmatpush1.msra.mxu0 0.0
        %723 = vmatprep.subr.mxu0 0.0
        %724 = vmatpush1.msra.mxu0 0.0
        %725 = vmatprep.subr.mxu0 0.0
        %726 = vmatpush1.msra.mxu0 0.0
        %727 = vmatprep.subr.mxu0 0.0
        %728 = vmatpush1.msra.mxu0 0.0
        %729 = vmatprep.subr.mxu0 0.0
        %730 = vmatpush1.msra.mxu0 0.0
        %731 = vmatprep.subr.mxu0 0.0
        %732 = vmatpush1.msra.mxu0 0.0
        %733 = vmatprep.subr.mxu0 0.0
        %734 = vmatpush1.msra.mxu0 0.0
        %735 = vmatprep.subr.mxu0 0.0
        %736 = vmatpush1.msra.mxu0 0.0
        %737 = vmatprep.subr.mxu0 0.0
        %738 = vmatpush1.msra.mxu0 0.0
        %739 = vmatprep.subr.mxu0 0.0
        %740 = vmatpush1.msra.mxu0 0.0
        %741 = vmatprep.subr.mxu0 0.0
        %742 = vmatpush1.msra.mxu0 0.0
        %743 = vmatprep.subr.mxu0 0.0
        %744 = vmatpush1.msra.mxu0 0.0
        %745 = vmatprep.subr.mxu0 0.0
        %746 = vmatpush1.msra.mxu0 0.0
        %747 = vmatprep.subr.mxu0 0.0
        %748 = vmatpush1.msra.mxu0 0.0
        %749 = vmatprep.subr.mxu0 0.0
        %750 = vmatpush1.msra.mxu0 0.0
        %751 = vmatprep.mubr.f32.mxu0 0.0
        %v752 = vand.u32 %v379, 4294901760
        %753 = vmatmul.mubr.f32.gmra.mrb[0].mxu0 %v752
        %v754 = vpop.f32.mrb[0].mxu0
        %v755 = vadd.f32 %v681, %v754
        %v756 = vpop.f32.mrb[0].mxu0
        %757 = vdwg.mxu0
        %758 = vmatprep.subr.mxu0 0.0
        %v759 = vand.u32 %v382, 4294901760
        %760 = vmatpush1.msra.mxu0 %v759
        %761 = vmatprep.subr.mxu0 0.0
        %762 = vmatpush1.msra.mxu0 0.0
        %763 = vmatprep.subr.mxu0 0.0
        %764 = vmatpush1.msra.mxu0 0.0
        %765 = vmatprep.subr.mxu0 0.0
        %766 = vmatpush1.msra.mxu0 0.0
        %767 = vmatprep.subr.mxu0 0.0
        %768 = vmatpush1.msra.mxu0 0.0
        %769 = vmatprep.subr.mxu0 0.0
        %770 = vmatpush1.msra.mxu0 0.0
        %771 = vmatprep.subr.mxu0 0.0
        %772 = vmatpush1.msra.mxu0 0.0
        %773 = vmatprep.subr.mxu0 0.0
        %774 = vmatpush1.msra.mxu0 0.0
        %775 = vmatprep.subr.mxu0 0.0
        %776 = vmatpush1.msra.mxu0 0.0
        %777 = vmatprep.subr.mxu0 0.0
        %778 = vmatpush1.msra.mxu0 0.0
        %779 = vmatprep.subr.mxu0 0.0
        %780 = vmatpush1.msra.mxu0 0.0
        %781 = vmatprep.subr.mxu0 0.0
        %782 = vmatpush1.msra.mxu0 0.0
        %783 = vmatprep.subr.mxu0 0.0
        %784 = vmatpush1.msra.mxu0 0.0
        %785 = vmatprep.subr.mxu0 0.0
        %786 = vmatpush1.msra.mxu0 0.0
        %787 = vmatprep.subr.mxu0 0.0
        %788 = vmatpush1.msra.mxu0 0.0
        %789 = vmatprep.subr.mxu0 0.0
        %790 = vmatpush1.msra.mxu0 0.0
        %791 = vmatprep.subr.mxu0 0.0
        %792 = vmatpush1.msra.mxu0 0.0
        %793 = vmatprep.subr.mxu0 0.0
        %794 = vmatpush1.msra.mxu0 0.0
        %795 = vmatprep.subr.mxu0 0.0
        %796 = vmatpush1.msra.mxu0 0.0
        %797 = vmatprep.subr.mxu0 0.0
        %798 = vmatpush1.msra.mxu0 0.0
        %799 = vmatprep.subr.mxu0 0.0
        %800 = vmatpush1.msra.mxu0 0.0
        %801 = vmatprep.subr.mxu0 0.0
        %802 = vmatpush1.msra.mxu0 0.0
        %803 = vmatprep.subr.mxu0 0.0
        %804 = vmatpush1.msra.mxu0 0.0
        %805 = vmatprep.subr.mxu0 0.0
        %806 = vmatpush1.msra.mxu0 0.0
        %807 = vmatprep.subr.mxu0 0.0
        %808 = vmatpush1.msra.mxu0 0.0
        %809 = vmatprep.subr.mxu0 0.0
        %810 = vmatpush1.msra.mxu0 0.0
        %811 = vmatprep.subr.mxu0 0.0
        %812 = vmatpush1.msra.mxu0 0.0
        %813 = vmatprep.subr.mxu0 0.0
        %814 = vmatpush1.msra.mxu0 0.0
        %815 = vmatprep.subr.mxu0 0.0
        %816 = vmatpush1.msra.mxu0 0.0
        %817 = vmatprep.subr.mxu0 0.0
        %818 = vmatpush1.msra.mxu0 0.0
        %819 = vmatprep.subr.mxu0 0.0
        %820 = vmatpush1.msra.mxu0 0.0
        %821 = vmatprep.subr.mxu0 0.0
        %822 = vmatpush1.msra.mxu0 0.0
        %823 = vmatprep.mubr.f32.mxu0 0.0
        %v824 = vand.u32 %v379, 4294901760
        %825 = vmatmul.mubr.f32.gmra.mrb[0].mxu0 %v824
        %v826 = vpop.f32.mrb[0].mxu0
        %v827 = vadd.f32 %v755, %v826
        %v828 = vpop.f32.mrb[0].mxu0
        %829 = vdwg.mxu0
        %v831 = vsel %vm357, %v339, 0
        %833 = vmatprep.subr.mxu0 0.0
        %v834 = vand.u32 %v831, 4294901760
        %835 = vmatpush1.msra.mxu0 %v834
        %836 = vmatprep.subr.mxu0 0.0
        %837 = vmatpush1.msra.mxu0 0.0
        %838 = vmatprep.subr.mxu0 0.0
        %839 = vmatpush1.msra.mxu0 0.0
        %840 = vmatprep.subr.mxu0 0.0
        %841 = vmatpush1.msra.mxu0 0.0
        %842 = vmatprep.subr.mxu0 0.0
        %843 = vmatpush1.msra.mxu0 0.0
        %844 = vmatprep.subr.mxu0 0.0
        %845 = vmatpush1.msra.mxu0 0.0
        %846 = vmatprep.subr.mxu0 0.0
        %847 = vmatpush1.msra.mxu0 0.0
        %848 = vmatprep.subr.mxu0 0.0
        %849 = vmatpush1.msra.mxu0 0.0
        %850 = vmatprep.subr.mxu0 0.0
        %851 = vmatpush1.msra.mxu0 0.0
        %852 = vmatprep.subr.mxu0 0.0
        %853 = vmatpush1.msra.mxu0 0.0
        %854 = vmatprep.subr.mxu0 0.0
        %855 = vmatpush1.msra.mxu0 0.0
        %856 = vmatprep.subr.mxu0 0.0
        %857 = vmatpush1.msra.mxu0 0.0
        %858 = vmatprep.subr.mxu0 0.0
        %859 = vmatpush1.msra.mxu0 0.0
        %860 = vmatprep.subr.mxu0 0.0
        %861 = vmatpush1.msra.mxu0 0.0
        %862 = vmatprep.subr.mxu0 0.0
        %863 = vmatpush1.msra.mxu0 0.0
        %864 = vmatprep.subr.mxu0 0.0
        %865 = vmatpush1.msra.mxu0 0.0
        %866 = vmatprep.subr.mxu0 0.0
        %867 = vmatpush1.msra.mxu0 0.0
        %868 = vmatprep.subr.mxu0 0.0
        %869 = vmatpush1.msra.mxu0 0.0
        %870 = vmatprep.subr.mxu0 0.0
        %871 = vmatpush1.msra.mxu0 0.0
        %872 = vmatprep.subr.mxu0 0.0
        %873 = vmatpush1.msra.mxu0 0.0
        %874 = vmatprep.subr.mxu0 0.0
        %875 = vmatpush1.msra.mxu0 0.0
        %876 = vmatprep.subr.mxu0 0.0
        %877 = vmatpush1.msra.mxu0 0.0
        %878 = vmatprep.subr.mxu0 0.0
        %879 = vmatpush1.msra.mxu0 0.0
        %880 = vmatprep.subr.mxu0 0.0
        %881 = vmatpush1.msra.mxu0 0.0
        %882 = vmatprep.subr.mxu0 0.0
        %883 = vmatpush1.msra.mxu0 0.0
        %884 = vmatprep.subr.mxu0 0.0
        %885 = vmatpush1.msra.mxu0 0.0
        %886 = vmatprep.subr.mxu0 0.0
        %887 = vmatpush1.msra.mxu0 0.0
        %888 = vmatprep.subr.mxu0 0.0
        %889 = vmatpush1.msra.mxu0 0.0
        %890 = vmatprep.subr.mxu0 0.0
        %891 = vmatpush1.msra.mxu0 0.0
        %892 = vmatprep.subr.mxu0 0.0
        %893 = vmatpush1.msra.mxu0 0.0
        %894 = vmatprep.subr.mxu0 0.0
        %895 = vmatpush1.msra.mxu0 0.0
        %896 = vmatprep.subr.mxu0 0.0
        %897 = vmatpush1.msra.mxu0 0.0
        %898 = vmatprep.mubr.f32.mxu0 0.0
        %v899 = vand.u32 %v379, 4294901760
        %v900 = vsub.f32 %v379, %v899
        %v901 = vand.u32 %v900, 4294901760
        %v902 = vsub.f32 %v900, %v901
        %v903 = vand.u32 %v902, 4294901760
        %904 = vmatmul.mubr.f32.gmra.mrb[0].mxu0 %v903
        %v905 = vpop.f32.mrb[0].mxu0
        %v906 = vadd.f32 0.0, %v905
        %v907 = vpop.f32.mrb[0].mxu0
        %908 = vdwg.mxu0
        %909 = vmatprep.subr.mxu0 0.0
        %v910 = vand.u32 %v831, 4294901760
        %v911 = vsub.f32 %v831, %v910
        %v912 = vand.u32 %v911, 4294901760
        %v913 = vsub.f32 %v911, %v912
        %v914 = vand.u32 %v913, 4294901760
        %915 = vmatpush1.msra.mxu0 %v914
        %916 = vmatprep.subr.mxu0 0.0
        %917 = vmatpush1.msra.mxu0 0.0
        %918 = vmatprep.subr.mxu0 0.0
        %919 = vmatpush1.msra.mxu0 0.0
        %920 = vmatprep.subr.mxu0 0.0
        %921 = vmatpush1.msra.mxu0 0.0
        %922 = vmatprep.subr.mxu0 0.0
        %923 = vmatpush1.msra.mxu0 0.0
        %924 = vmatprep.subr.mxu0 0.0
        %925 = vmatpush1.msra.mxu0 0.0
        %926 = vmatprep.subr.mxu0 0.0
        %927 = vmatpush1.msra.mxu0 0.0
        %928 = vmatprep.subr.mxu0 0.0
        %929 = vmatpush1.msra.mxu0 0.0
        %930 = vmatprep.subr.mxu0 0.0
        %931 = vmatpush1.msra.mxu0 0.0
        %932 = vmatprep.subr.mxu0 0.0
        %933 = vmatpush1.msra.mxu0 0.0
        %934 = vmatprep.subr.mxu0 0.0
        %935 = vmatpush1.msra.mxu0 0.0
        %936 = vmatprep.subr.mxu0 0.0
        %937 = vmatpush1.msra.mxu0 0.0
        %938 = vmatprep.subr.mxu0 0.0
        %939 = vmatpush1.msra.mxu0 0.0
        %940 = vmatprep.subr.mxu0 0.0
        %941 = vmatpush1.msra.mxu0 0.0
        %942 = vmatprep.subr.mxu0 0.0
        %943 = vmatpush1.msra.mxu0 0.0
        %944 = vmatprep.subr.mxu0 0.0
        %945 = vmatpush1.msra.mxu0 0.0
        %946 = vmatprep.subr.mxu0 0.0
        %947 = vmatpush1.msra.mxu0 0.0
        %948 = vmatprep.subr.mxu0 0.0
        %949 = vmatpush1.msra.mxu0 0.0
        %950 = vmatprep.subr.mxu0 0.0
        %951 = vmatpush1.msra.mxu0 0.0
        %952 = vmatprep.subr.mxu0 0.0
        %953 = vmatpush1.msra.mxu0 0.0
        %954 = vmatprep.subr.mxu0 0.0
        %955 = vmatpush1.msra.mxu0 0.0
        %956 = vmatprep.subr.mxu0 0.0
        %957 = vmatpush1.msra.mxu0 0.0
        %958 = vmatprep.subr.mxu0 0.0
        %959 = vmatpush1.msra.mxu0 0.0
        %960 = vmatprep.subr.mxu0 0.0
        %961 = vmatpush1.msra.mxu0 0.0
        %962 = vmatprep.subr.mxu0 0.0
        %963 = vmatpush1.msra.mxu0 0.0
        %964 = vmatprep.subr.mxu0 0.0
        %965 = vmatpush1.msra.mxu0 0.0
        %966 = vmatprep.subr.mxu0 0.0
        %967 = vmatpush1.msra.mxu0 0.0
        %968 = vmatprep.subr.mxu0 0.0
        %969 = vmatpush1.msra.mxu0 0.0
        %970 = vmatprep.subr.mxu0 0.0
        %971 = vmatpush1.msra.mxu0 0.0
        %972 = vmatprep.subr.mxu0 0.0
        %973 = vmatpush1.msra.mxu0 0.0
        %974 = vmatprep.subr.mxu0 0.0
        %975 = vmatpush1.msra.mxu0 0.0
        %976 = vmatprep.subr.mxu0 0.0
        %977 = vmatpush1.msra.mxu0 0.0
        %978 = vmatprep.mubr.f32.mxu0 0.0
        %v979 = vand.u32 %v379, 4294901760
        %980 = vmatmul.mubr.f32.gmra.mrb[0].mxu0 %v979
        %v981 = vpop.f32.mrb[0].mxu0
        %v982 = vadd.f32 %v906, %v981
        %v983 = vpop.f32.mrb[0].mxu0
        %984 = vdwg.mxu0
        %985 = vmatprep.subr.mxu0 0.0
        %v986 = vand.u32 %v831, 4294901760
        %v987 = vsub.f32 %v831, %v986
        %988 = vmatpush1.msra.mxu0 %v987
        %989 = vmatprep.subr.mxu0 0.0
        %990 = vmatpush1.msra.mxu0 0.0
        %991 = vmatprep.subr.mxu0 0.0
        %992 = vmatpush1.msra.mxu0 0.0
        %993 = vmatprep.subr.mxu0 0.0
        %994 = vmatpush1.msra.mxu0 0.0
        %995 = vmatprep.subr.mxu0 0.0
        %996 = vmatpush1.msra.mxu0 0.0
        %997 = vmatprep.subr.mxu0 0.0
        %998 = vmatpush1.msra.mxu0 0.0
        %999 = vmatprep.subr.mxu0 0.0
        %1000 = vmatpush1.msra.mxu0 0.0
        %1001 = vmatprep.subr.mxu0 0.0
        %1002 = vmatpush1.msra.mxu0 0.0
        %1003 = vmatprep.subr.mxu0 0.0
        %1004 = vmatpush1.msra.mxu0 0.0
        %1005 = vmatprep.subr.mxu0 0.0
        %1006 = vmatpush1.msra.mxu0 0.0
        %1007 = vmatprep.subr.mxu0 0.0
        %1008 = vmatpush1.msra.mxu0 0.0
        %1009 = vmatprep.subr.mxu0 0.0
        %1010 = vmatpush1.msra.mxu0 0.0
        %1011 = vmatprep.subr.mxu0 0.0
        %1012 = vmatpush1.msra.mxu0 0.0
        %1013 = vmatprep.subr.mxu0 0.0
        %1014 = vmatpush1.msra.mxu0 0.0
        %1015 = vmatprep.subr.mxu0 0.0
        %1016 = vmatpush1.msra.mxu0 0.0
        %1017 = vmatprep.subr.mxu0 0.0
        %1018 = vmatpush1.msra.mxu0 0.0
        %1019 = vmatprep.subr.mxu0 0.0
        %1020 = vmatpush1.msra.mxu0 0.0
        %1021 = vmatprep.subr.mxu0 0.0
        %1022 = vmatpush1.msra.mxu0 0.0
        %1023 = vmatprep.subr.mxu0 0.0
        %1024 = vmatpush1.msra.mxu0 0.0
        %1025 = vmatprep.subr.mxu0 0.0
        %1026 = vmatpush1.msra.mxu0 0.0
        %1027 = vmatprep.subr.mxu0 0.0
        %1028 = vmatpush1.msra.mxu0 0.0
        %1029 = vmatprep.subr.mxu0 0.0
        %1030 = vmatpush1.msra.mxu0 0.0
        %1031 = vmatprep.subr.mxu0 0.0
        %1032 = vmatpush1.msra.mxu0 0.0
        %1033 = vmatprep.subr.mxu0 0.0
        %1034 = vmatpush1.msra.mxu0 0.0
        %1035 = vmatprep.subr.mxu0 0.0
        %1036 = vmatpush1.msra.mxu0 0.0
        %1037 = vmatprep.subr.mxu0 0.0
        %1038 = vmatpush1.msra.mxu0 0.0
        %1039 = vmatprep.subr.mxu0 0.0
        %1040 = vmatpush1.msra.mxu0 0.0
        %1041 = vmatprep.subr.mxu0 0.0
        %1042 = vmatpush1.msra.mxu0 0.0
        %1043 = vmatprep.subr.mxu0 0.0
        %1044 = vmatpush1.msra.mxu0 0.0
        %1045 = vmatprep.subr.mxu0 0.0
        %1046 = vmatpush1.msra.mxu0 0.0
        %1047 = vmatprep.subr.mxu0 0.0
        %1048 = vmatpush1.msra.mxu0 0.0
        %1049 = vmatprep.subr.mxu0 0.0
        %1050 = vmatpush1.msra.mxu0 0.0
        %1051 = vmatprep.mubr.f32.mxu0 0.0
        %v1052 = vand.u32 %v379, 4294901760
        %v1053 = vsub.f32 %v379, %v1052
        %1054 = vmatmul.mubr.f32.gmra.mrb[0].mxu0 %v1053
        %v1055 = vpop.f32.mrb[0].mxu0
        %v1056 = vadd.f32 %v982, %v1055
        %v1057 = vpop.f32.mrb[0].mxu0
        %1058 = vdwg.mxu0
        %1059 = vmatprep.subr.mxu0 0.0
        %v1060 = vand.u32 %v831, 4294901760
        %1061 = vmatpush1.msra.mxu0 %v1060
        %1062 = vmatprep.subr.mxu0 0.0
        %1063 = vmatpush1.msra.mxu0 0.0
        %1064 = vmatprep.subr.mxu0 0.0
        %1065 = vmatpush1.msra.mxu0 0.0
        %1066 = vmatprep.subr.mxu0 0.0
        %1067 = vmatpush1.msra.mxu0 0.0
        %1068 = vmatprep.subr.mxu0 0.0
        %1069 = vmatpush1.msra.mxu0 0.0
        %1070 = vmatprep.subr.mxu0 0.0
        %1071 = vmatpush1.msra.mxu0 0.0
        %1072 = vmatprep.subr.mxu0 0.0
        %1073 = vmatpush1.msra.mxu0 0.0
        %1074 = vmatprep.subr.mxu0 0.0
        %1075 = vmatpush1.msra.mxu0 0.0
        %1076 = vmatprep.subr.mxu0 0.0
        %1077 = vmatpush1.msra.mxu0 0.0
        %1078 = vmatprep.subr.mxu0 0.0
        %1079 = vmatpush1.msra.mxu0 0.0
        %1080 = vmatprep.subr.mxu0 0.0
        %1081 = vmatpush1.msra.mxu0 0.0
        %1082 = vmatprep.subr.mxu0 0.0
        %1083 = vmatpush1.msra.mxu0 0.0
        %1084 = vmatprep.subr.mxu0 0.0
        %1085 = vmatpush1.msra.mxu0 0.0
        %1086 = vmatprep.subr.mxu0 0.0
        %1087 = vmatpush1.msra.mxu0 0.0
        %1088 = vmatprep.subr.mxu0 0.0
        %1089 = vmatpush1.msra.mxu0 0.0
        %1090 = vmatprep.subr.mxu0 0.0
        %1091 = vmatpush1.msra.mxu0 0.0
        %1092 = vmatprep.subr.mxu0 0.0
        %1093 = vmatpush1.msra.mxu0 0.0
        %1094 = vmatprep.subr.mxu0 0.0
        %1095 = vmatpush1.msra.mxu0 0.0
        %1096 = vmatprep.subr.mxu0 0.0
        %1097 = vmatpush1.msra.mxu0 0.0
        %1098 = vmatprep.subr.mxu0 0.0
        %1099 = vmatpush1.msra.mxu0 0.0
        %1100 = vmatprep.subr.mxu0 0.0
        %1101 = vmatpush1.msra.mxu0 0.0
        %1102 = vmatprep.subr.mxu0 0.0
        %1103 = vmatpush1.msra.mxu0 0.0
        %1104 = vmatprep.subr.mxu0 0.0
        %1105 = vmatpush1.msra.mxu0 0.0
        %1106 = vmatprep.subr.mxu0 0.0
        %1107 = vmatpush1.msra.mxu0 0.0
        %1108 = vmatprep.subr.mxu0 0.0
        %1109 = vmatpush1.msra.mxu0 0.0
        %1110 = vmatprep.subr.mxu0 0.0
        %1111 = vmatpush1.msra.mxu0 0.0
        %1112 = vmatprep.subr.mxu0 0.0
        %1113 = vmatpush1.msra.mxu0 0.0
        %1114 = vmatprep.subr.mxu0 0.0
        %1115 = vmatpush1.msra.mxu0 0.0
        %1116 = vmatprep.subr.mxu0 0.0
        %1117 = vmatpush1.msra.mxu0 0.0
        %1118 = vmatprep.subr.mxu0 0.0
        %1119 = vmatpush1.msra.mxu0 0.0
        %1120 = vmatprep.subr.mxu0 0.0
        %1121 = vmatpush1.msra.mxu0 0.0
        %1122 = vmatprep.subr.mxu0 0.0
        %1123 = vmatpush1.msra.mxu0 0.0
        %1124 = vmatprep.mubr.f32.mxu0 0.0
        %v1125 = vand.u32 %v379, 4294901760
        %v1126 = vsub.f32 %v379, %v1125
        %v1127 = vand.u32 %v1126, 4294901760
        %1128 = vmatmul.mubr.f32.gmra.mrb[0].mxu0 %v1127
        %v1129 = vpop.f32.mrb[0].mxu0
        %v1130 = vadd.f32 %v1056, %v1129
        %v1131 = vpop.f32.mrb[0].mxu0
        %1132 = vdwg.mxu0
        %1133 = vmatprep.subr.mxu0 0.0
        %v1134 = vand.u32 %v831, 4294901760
        %v1135 = vsub.f32 %v831, %v1134
        %v1136 = vand.u32 %v1135, 4294901760
        %1137 = vmatpush1.msra.mxu0 %v1136
        %1138 = vmatprep.subr.mxu0 0.0
        %1139 = vmatpush1.msra.mxu0 0.0
        %1140 = vmatprep.subr.mxu0 0.0
        %1141 = vmatpush1.msra.mxu0 0.0
        %1142 = vmatprep.subr.mxu0 0.0
        %1143 = vmatpush1.msra.mxu0 0.0
        %1144 = vmatprep.subr.mxu0 0.0
        %1145 = vmatpush1.msra.mxu0 0.0
        %1146 = vmatprep.subr.mxu0 0.0
        %1147 = vmatpush1.msra.mxu0 0.0
        %1148 = vmatprep.subr.mxu0 0.0
        %1149 = vmatpush1.msra.mxu0 0.0
        %1150 = vmatprep.subr.mxu0 0.0
        %1151 = vmatpush1.msra.mxu0 0.0
        %1152 = vmatprep.subr.mxu0 0.0
        %1153 = vmatpush1.msra.mxu0 0.0
        %1154 = vmatprep.subr.mxu0 0.0
        %1155 = vmatpush1.msra.mxu0 0.0
        %1156 = vmatprep.subr.mxu0 0.0
        %1157 = vmatpush1.msra.mxu0 0.0
        %1158 = vmatprep.subr.mxu0 0.0
        %1159 = vmatpush1.msra.mxu0 0.0
        %1160 = vmatprep.subr.mxu0 0.0
        %1161 = vmatpush1.msra.mxu0 0.0
        %1162 = vmatprep.subr.mxu0 0.0
        %1163 = vmatpush1.msra.mxu0 0.0
        %1164 = vmatprep.subr.mxu0 0.0
        %1165 = vmatpush1.msra.mxu0 0.0
        %1166 = vmatprep.subr.mxu0 0.0
        %1167 = vmatpush1.msra.mxu0 0.0
        %1168 = vmatprep.subr.mxu0 0.0
        %1169 = vmatpush1.msra.mxu0 0.0
        %1170 = vmatprep.subr.mxu0 0.0
        %1171 = vmatpush1.msra.mxu0 0.0
        %1172 = vmatprep.subr.mxu0 0.0
        %1173 = vmatpush1.msra.mxu0 0.0
        %1174 = vmatprep.subr.mxu0 0.0
        %1175 = vmatpush1.msra.mxu0 0.0
        %1176 = vmatprep.subr.mxu0 0.0
        %1177 = vmatpush1.msra.mxu0 0.0
        %1178 = vmatprep.subr.mxu0 0.0
        %1179 = vmatpush1.msra.mxu0 0.0
        %1180 = vmatprep.subr.mxu0 0.0
        %1181 = vmatpush1.msra.mxu0 0.0
        %1182 = vmatprep.subr.mxu0 0.0
        %1183 = vmatpush1.msra.mxu0 0.0
        %1184 = vmatprep.subr.mxu0 0.0
        %1185 = vmatpush1.msra.mxu0 0.0
        %1186 = vmatprep.subr.mxu0 0.0
        %1187 = vmatpush1.msra.mxu0 0.0
        %1188 = vmatprep.subr.mxu0 0.0
        %1189 = vmatpush1.msra.mxu0 0.0
        %1190 = vmatprep.subr.mxu0 0.0
        %1191 = vmatpush1.msra.mxu0 0.0
        %1192 = vmatprep.subr.mxu0 0.0
        %1193 = vmatpush1.msra.mxu0 0.0
        %1194 = vmatprep.subr.mxu0 0.0
        %1195 = vmatpush1.msra.mxu0 0.0
        %1196 = vmatprep.subr.mxu0 0.0
        %1197 = vmatpush1.msra.mxu0 0.0
        %1198 = vmatprep.subr.mxu0 0.0
        %1199 = vmatpush1.msra.mxu0 0.0
        %1200 = vmatprep.mubr.f32.mxu0 0.0
        %v1201 = vand.u32 %v379, 4294901760
        %1202 = vmatmul.mubr.f32.gmra.mrb[0].mxu0 %v1201
        %v1203 = vpop.f32.mrb[0].mxu0
        %v1204 = vadd.f32 %v1130, %v1203
        %v1205 = vpop.f32.mrb[0].mxu0
        %1206 = vdwg.mxu0
        %1207 = vmatprep.subr.mxu0 0.0
        %v1208 = vand.u32 %v831, 4294901760
        %1209 = vmatpush1.msra.mxu0 %v1208
        %1210 = vmatprep.subr.mxu0 0.0
        %1211 = vmatpush1.msra.mxu0 0.0
        %1212 = vmatprep.subr.mxu0 0.0
        %1213 = vmatpush1.msra.mxu0 0.0
        %1214 = vmatprep.subr.mxu0 0.0
        %1215 = vmatpush1.msra.mxu0 0.0
        %1216 = vmatprep.subr.mxu0 0.0
        %1217 = vmatpush1.msra.mxu0 0.0
        %1218 = vmatprep.subr.mxu0 0.0
        %1219 = vmatpush1.msra.mxu0 0.0
        %1220 = vmatprep.subr.mxu0 0.0
        %1221 = vmatpush1.msra.mxu0 0.0
        %1222 = vmatprep.subr.mxu0 0.0
        %1223 = vmatpush1.msra.mxu0 0.0
        %1224 = vmatprep.subr.mxu0 0.0
        %1225 = vmatpush1.msra.mxu0 0.0
        %1226 = vmatprep.subr.mxu0 0.0
        %1227 = vmatpush1.msra.mxu0 0.0
        %1228 = vmatprep.subr.mxu0 0.0
        %1229 = vmatpush1.msra.mxu0 0.0
        %1230 = vmatprep.subr.mxu0 0.0
        %1231 = vmatpush1.msra.mxu0 0.0
        %1232 = vmatprep.subr.mxu0 0.0
        %1233 = vmatpush1.msra.mxu0 0.0
        %1234 = vmatprep.subr.mxu0 0.0
        %1235 = vmatpush1.msra.mxu0 0.0
        %1236 = vmatprep.subr.mxu0 0.0
        %1237 = vmatpush1.msra.mxu0 0.0
        %1238 = vmatprep.subr.mxu0 0.0
        %1239 = vmatpush1.msra.mxu0 0.0
        %1240 = vmatprep.subr.mxu0 0.0
        %1241 = vmatpush1.msra.mxu0 0.0
        %1242 = vmatprep.subr.mxu0 0.0
        %1243 = vmatpush1.msra.mxu0 0.0
        %1244 = vmatprep.subr.mxu0 0.0
        %1245 = vmatpush1.msra.mxu0 0.0
        %1246 = vmatprep.subr.mxu0 0.0
        %1247 = vmatpush1.msra.mxu0 0.0
        %1248 = vmatprep.subr.mxu0 0.0
        %1249 = vmatpush1.msra.mxu0 0.0
        %1250 = vmatprep.subr.mxu0 0.0
        %1251 = vmatpush1.msra.mxu0 0.0
        %1252 = vmatprep.subr.mxu0 0.0
        %1253 = vmatpush1.msra.mxu0 0.0
        %1254 = vmatprep.subr.mxu0 0.0
        %1255 = vmatpush1.msra.mxu0 0.0
        %1256 = vmatprep.subr.mxu0 0.0
        %1257 = vmatpush1.msra.mxu0 0.0
        %1258 = vmatprep.subr.mxu0 0.0
        %1259 = vmatpush1.msra.mxu0 0.0
        %1260 = vmatprep.subr.mxu0 0.0
        %1261 = vmatpush1.msra.mxu0 0.0
        %1262 = vmatprep.subr.mxu0 0.0
        %1263 = vmatpush1.msra.mxu0 0.0
        %1264 = vmatprep.subr.mxu0 0.0
        %1265 = vmatpush1.msra.mxu0 0.0
        %1266 = vmatprep.subr.mxu0 0.0
        %1267 = vmatpush1.msra.mxu0 0.0
        %1268 = vmatprep.subr.mxu0 0.0
        %1269 = vmatpush1.msra.mxu0 0.0
        %1270 = vmatprep.subr.mxu0 0.0
        %1271 = vmatpush1.msra.mxu0 0.0
        %1272 = vmatprep.mubr.f32.mxu0 0.0
        %v1273 = vand.u32 %v379, 4294901760
        %1274 = vmatmul.mubr.f32.gmra.mrb[0].mxu0 %v1273
        %v1275 = vpop.f32.mrb[0].mxu0
        %v1276 = vadd.f32 %v1204, %v1275
        %v1277 = vpop.f32.mrb[0].mxu0
        %1278 = vdwg.mxu0
        %v1280 = vsel %vm366, %v340, 0
        %v1283 = vsel %vm366, %v341, 0
        %v1286 = vsel %vm366, %v342, 0
        %v1289 = vsel %vm366, %v343, 0
        %v1292 = vsel %vm366, %v344, 0
        %v1295 = vsel %vm366, %v345, 0
        %v1298 = vsel %vm366, %v346, 0
        %v1301 = vsel %vm366, %v347, 0
        %v1304 = vsel %vm366, %v348, 0
        %v1307 = vsel %vm366, %v349, 0
        %v1310 = vsel %vm366, %v350, 0
        %v1313 = vsel %vm366, %v351, 0
        %v1316 = vsel %vm366, %v352, 0
        %v1319 = vsel %vm366, %v353, 0
        %v1322 = vsel %vm366, %v354, 0
        %v1325 = vsel %vm366, %v355, 0
        %1327 = vmatprep.subr.mxu0 0.0
        %v1328 = vand.u32 %v382, 4294901760
        %1329 = vmatpush1.msra.mxu0 %v1328
        %1330 = vmatprep.subr.mxu0 0.0
        %1331 = vmatpush1.msra.mxu0 0.0
        %1332 = vmatprep.subr.mxu0 0.0
        %1333 = vmatpush1.msra.mxu0 0.0
        %1334 = vmatprep.subr.mxu0 0.0
        %1335 = vmatpush1.msra.mxu0 0.0
        %1336 = vmatprep.subr.mxu0 0.0
        %1337 = vmatpush1.msra.mxu0 0.0
        %1338 = vmatprep.subr.mxu0 0.0
        %1339 = vmatpush1.msra.mxu0 0.0
        %1340 = vmatprep.subr.mxu0 0.0
        %1341 = vmatpush1.msra.mxu0 0.0
        %1342 = vmatprep.subr.mxu0 0.0
        %1343 = vmatpush1.msra.mxu0 0.0
        %1344 = vmatprep.subr.mxu0 0.0
        %1345 = vmatpush1.msra.mxu0 0.0
        %1346 = vmatprep.subr.mxu0 0.0
        %1347 = vmatpush1.msra.mxu0 0.0
        %1348 = vmatprep.subr.mxu0 0.0
        %1349 = vmatpush1.msra.mxu0 0.0
        %1350 = vmatprep.subr.mxu0 0.0
        %1351 = vmatpush1.msra.mxu0 0.0
        %1352 = vmatprep.subr.mxu0 0.0
        %1353 = vmatpush1.msra.mxu0 0.0
        %1354 = vmatprep.subr.mxu0 0.0
        %1355 = vmatpush1.msra.mxu0 0.0
        %1356 = vmatprep.subr.mxu0 0.0
        %1357 = vmatpush1.msra.mxu0 0.0
        %1358 = vmatprep.subr.mxu0 0.0
        %1359 = vmatpush1.msra.mxu0 0.0
        %1360 = vmatprep.subr.mxu0 0.0
        %1361 = vmatpush1.msra.mxu0 0.0
        %1362 = vmatprep.subr.mxu0 0.0
        %1363 = vmatpush1.msra.mxu0 0.0
        %1364 = vmatprep.subr.mxu0 0.0
        %1365 = vmatpush1.msra.mxu0 0.0
        %1366 = vmatprep.subr.mxu0 0.0
        %1367 = vmatpush1.msra.mxu0 0.0
        %1368 = vmatprep.subr.mxu0 0.0
        %1369 = vmatpush1.msra.mxu0 0.0
        %1370 = vmatprep.subr.mxu0 0.0
        %1371 = vmatpush1.msra.mxu0 0.0
        %1372 = vmatprep.subr.mxu0 0.0
        %1373 = vmatpush1.msra.mxu0 0.0
        %1374 = vmatprep.subr.mxu0 0.0
        %1375 = vmatpush1.msra.mxu0 0.0
        %1376 = vmatprep.subr.mxu0 0.0
        %1377 = vmatpush1.msra.mxu0 0.0
        %1378 = vmatprep.subr.mxu0 0.0
        %1379 = vmatpush1.msra.mxu0 0.0
        %1380 = vmatprep.subr.mxu0 0.0
        %1381 = vmatpush1.msra.mxu0 0.0
        %1382 = vmatprep.subr.mxu0 0.0
        %1383 = vmatpush1.msra.mxu0 0.0
        %1384 = vmatprep.subr.mxu0 0.0
        %1385 = vmatpush1.msra.mxu0 0.0
        %1386 = vmatprep.subr.mxu0 0.0
        %1387 = vmatpush1.msra.mxu0 0.0
        %1388 = vmatprep.subr.mxu0 0.0
        %1389 = vmatpush1.msra.mxu0 0.0
        %1390 = vmatprep.subr.mxu0 0.0
        %1391 = vmatpush1.msra.mxu0 0.0
        %1392 = vmatprep.mubr.f32.mxu0 0.0
        %v1393 = vand.u32 %v1280, 4294901760
        %v1394 = vsub.f32 %v1280, %v1393
        %v1395 = vand.u32 %v1394, 4294901760
        %v1396 = vsub.f32 %v1394, %v1395
        %v1397 = vand.u32 %v1396, 4294901760
        %1398 = vmatmul.mubr.f32.gmra.mrb[0].mxu0 %v1397
        %v1399 = vpop.f32.mrb[0].mxu0
        %v1400 = vadd.f32 0.0, %v1399
        %v1401 = vpop.f32.mrb[0].mxu0
        %1402 = vmatprep.mubr.f32.mxu0 0.0
        %v1403 = vand.u32 %v1283, 4294901760
        %v1404 = vsub.f32 %v1283, %v1403
        %v1405 = vand.u32 %v1404, 4294901760
        %v1406 = vsub.f32 %v1404, %v1405
        %v1407 = vand.u32 %v1406, 4294901760
        %1408 = vmatmul.mubr.f32.gmra.mrb[0].mxu0 %v1407
        %v1409 = vpop.f32.mrb[0].mxu0
        %v1410 = vadd.f32 0.0, %v1409
        %v1411 = vpop.f32.mrb[0].mxu0
        %1412 = vmatprep.mubr.f32.mxu0 0.0
        %v1413 = vand.u32 %v1286, 4294901760
        %v1414 = vsub.f32 %v1286, %v1413
        %v1415 = vand.u32 %v1414, 4294901760
        %v1416 = vsub.f32 %v1414, %v1415
        %v1417 = vand.u32 %v1416, 4294901760
        %1418 = vmatmul.mubr.f32.gmra.mrb[0].mxu0 %v1417
        %v1419 = vpop.f32.mrb[0].mxu0
        %v1420 = vadd.f32 0.0, %v1419
        %v1421 = vpop.f32.mrb[0].mxu0
        %1422 = vmatprep.mubr.f32.mxu0 0.0
        %v1423 = vand.u32 %v1289, 4294901760
        %v1424 = vsub.f32 %v1289, %v1423
        %v1425 = vand.u32 %v1424, 4294901760
        %v1426 = vsub.f32 %v1424, %v1425
        %v1427 = vand.u32 %v1426, 4294901760
        %1428 = vmatmul.mubr.f32.gmra.mrb[0].mxu0 %v1427
        %v1429 = vpop.f32.mrb[0].mxu0
        %v1430 = vadd.f32 0.0, %v1429
        %v1431 = vpop.f32.mrb[0].mxu0
        %1432 = vmatprep.mubr.f32.mxu0 0.0
        %v1433 = vand.u32 %v1292, 4294901760
        %v1434 = vsub.f32 %v1292, %v1433
        %v1435 = vand.u32 %v1434, 4294901760
        %v1436 = vsub.f32 %v1434, %v1435
        %v1437 = vand.u32 %v1436, 4294901760
        %1438 = vmatmul.mubr.f32.gmra.mrb[0].mxu0 %v1437
        %v1439 = vpop.f32.mrb[0].mxu0
        %v1440 = vadd.f32 0.0, %v1439
        %v1441 = vpop.f32.mrb[0].mxu0
        %1442 = vmatprep.mubr.f32.mxu0 0.0
        %v1443 = vand.u32 %v1295, 4294901760
        %v1444 = vsub.f32 %v1295, %v1443
        %v1445 = vand.u32 %v1444, 4294901760
        %v1446 = vsub.f32 %v1444, %v1445
        %v1447 = vand.u32 %v1446, 4294901760
        %1448 = vmatmul.mubr.f32.gmra.mrb[0].mxu0 %v1447
        %v1449 = vpop.f32.mrb[0].mxu0
        %v1450 = vadd.f32 0.0, %v1449
        %v1451 = vpop.f32.mrb[0].mxu0
        %1452 = vmatprep.mubr.f32.mxu0 0.0
        %v1453 = vand.u32 %v1298, 4294901760
        %v1454 = vsub.f32 %v1298, %v1453
        %v1455 = vand.u32 %v1454, 4294901760
        %v1456 = vsub.f32 %v1454, %v1455
        %v1457 = vand.u32 %v1456, 4294901760
        %1458 = vmatmul.mubr.f32.gmra.mrb[0].mxu0 %v1457
        %v1459 = vpop.f32.mrb[0].mxu0
        %v1460 = vadd.f32 0.0, %v1459
        %v1461 = vpop.f32.mrb[0].mxu0
        %1462 = vmatprep.mubr.f32.mxu0 0.0
        %v1463 = vand.u32 %v1301, 4294901760
        %v1464 = vsub.f32 %v1301, %v1463
        %v1465 = vand.u32 %v1464, 4294901760
        %v1466 = vsub.f32 %v1464, %v1465
        %v1467 = vand.u32 %v1466, 4294901760
        %1468 = vmatmul.mubr.f32.gmra.mrb[0].mxu0 %v1467
        %v1469 = vpop.f32.mrb[0].mxu0
        %v1470 = vadd.f32 0.0, %v1469
        %v1471 = vpop.f32.mrb[0].mxu0
        %1472 = vmatprep.mubr.f32.mxu0 0.0
        %v1473 = vand.u32 %v1304, 4294901760
        %v1474 = vsub.f32 %v1304, %v1473
        %v1475 = vand.u32 %v1474, 4294901760
        %v1476 = vsub.f32 %v1474, %v1475
        %v1477 = vand.u32 %v1476, 4294901760
        %1478 = vmatmul.mubr.f32.gmra.mrb[0].mxu0 %v1477
        %v1479 = vpop.f32.mrb[0].mxu0
        %v1480 = vadd.f32 0.0, %v1479
        %v1481 = vpop.f32.mrb[0].mxu0
        %1482 = vmatprep.mubr.f32.mxu0 0.0
        %v1483 = vand.u32 %v1307, 4294901760
        %v1484 = vsub.f32 %v1307, %v1483
        %v1485 = vand.u32 %v1484, 4294901760
        %v1486 = vsub.f32 %v1484, %v1485
        %v1487 = vand.u32 %v1486, 4294901760
        %1488 = vmatmul.mubr.f32.gmra.mrb[0].mxu0 %v1487
        %v1489 = vpop.f32.mrb[0].mxu0
        %v1490 = vadd.f32 0.0, %v1489
        %v1491 = vpop.f32.mrb[0].mxu0
        %1492 = vmatprep.mubr.f32.mxu0 0.0
        %v1493 = vand.u32 %v1310, 4294901760
        %v1494 = vsub.f32 %v1310, %v1493
        %v1495 = vand.u32 %v1494, 4294901760
        %v1496 = vsub.f32 %v1494, %v1495
        %v1497 = vand.u32 %v1496, 4294901760
        %1498 = vmatmul.mubr.f32.gmra.mrb[0].mxu0 %v1497
        %v1499 = vpop.f32.mrb[0].mxu0
        %v1500 = vadd.f32 0.0, %v1499
        %v1501 = vpop.f32.mrb[0].mxu0
        %1502 = vmatprep.mubr.f32.mxu0 0.0
        %v1503 = vand.u32 %v1313, 4294901760
        %v1504 = vsub.f32 %v1313, %v1503
        %v1505 = vand.u32 %v1504, 4294901760
        %v1506 = vsub.f32 %v1504, %v1505
        %v1507 = vand.u32 %v1506, 4294901760
        %1508 = vmatmul.mubr.f32.gmra.mrb[0].mxu0 %v1507
        %v1509 = vpop.f32.mrb[0].mxu0
        %v1510 = vadd.f32 0.0, %v1509
        %v1511 = vpop.f32.mrb[0].mxu0
        %1512 = vmatprep.mubr.f32.mxu0 0.0
        %v1513 = vand.u32 %v1316, 4294901760
        %v1514 = vsub.f32 %v1316, %v1513
        %v1515 = vand.u32 %v1514, 4294901760
        %v1516 = vsub.f32 %v1514, %v1515
        %v1517 = vand.u32 %v1516, 4294901760
        %1518 = vmatmul.mubr.f32.gmra.mrb[0].mxu0 %v1517
        %v1519 = vpop.f32.mrb[0].mxu0
        %v1520 = vadd.f32 0.0, %v1519
        %v1521 = vpop.f32.mrb[0].mxu0
        %1522 = vmatprep.mubr.f32.mxu0 0.0
        %v1523 = vand.u32 %v1319, 4294901760
        %v1524 = vsub.f32 %v1319, %v1523
        %v1525 = vand.u32 %v1524, 4294901760
        %v1526 = vsub.f32 %v1524, %v1525
        %v1527 = vand.u32 %v1526, 4294901760
        %1528 = vmatmul.mubr.f32.gmra.mrb[0].mxu0 %v1527
        %v1529 = vpop.f32.mrb[0].mxu0
        %v1530 = vadd.f32 0.0, %v1529
        %v1531 = vpop.f32.mrb[0].mxu0
        %1532 = vmatprep.mubr.f32.mxu0 0.0
        %v1533 = vand.u32 %v1322, 4294901760
        %v1534 = vsub.f32 %v1322, %v1533
        %v1535 = vand.u32 %v1534, 4294901760
        %v1536 = vsub.f32 %v1534, %v1535
        %v1537 = vand.u32 %v1536, 4294901760
        %1538 = vmatmul.mubr.f32.gmra.mrb[0].mxu0 %v1537
        %v1539 = vpop.f32.mrb[0].mxu0
        %v1540 = vadd.f32 0.0, %v1539
        %v1541 = vpop.f32.mrb[0].mxu0
        %1542 = vmatprep.mubr.f32.mxu0 0.0
        %v1543 = vand.u32 %v1325, 4294901760
        %v1544 = vsub.f32 %v1325, %v1543
        %v1545 = vand.u32 %v1544, 4294901760
        %v1546 = vsub.f32 %v1544, %v1545
        %v1547 = vand.u32 %v1546, 4294901760
        %1548 = vmatmul.mubr.f32.gmra.mrb[0].mxu0 %v1547
        %v1549 = vpop.f32.mrb[0].mxu0
        %v1550 = vadd.f32 0.0, %v1549
        %v1551 = vpop.f32.mrb[0].mxu0
        %1552 = vdwg.mxu0
        %1553 = vmatprep.subr.mxu0 0.0
        %v1554 = vand.u32 %v382, 4294901760
        %v1555 = vsub.f32 %v382, %v1554
        %v1556 = vand.u32 %v1555, 4294901760
        %v1557 = vsub.f32 %v1555, %v1556
        %v1558 = vand.u32 %v1557, 4294901760
        %1559 = vmatpush1.msra.mxu0 %v1558
        %1560 = vmatprep.subr.mxu0 0.0
        %1561 = vmatpush1.msra.mxu0 0.0
        %1562 = vmatprep.subr.mxu0 0.0
        %1563 = vmatpush1.msra.mxu0 0.0
        %1564 = vmatprep.subr.mxu0 0.0
        %1565 = vmatpush1.msra.mxu0 0.0
        %1566 = vmatprep.subr.mxu0 0.0
        %1567 = vmatpush1.msra.mxu0 0.0
        %1568 = vmatprep.subr.mxu0 0.0
        %1569 = vmatpush1.msra.mxu0 0.0
        %1570 = vmatprep.subr.mxu0 0.0
        %1571 = vmatpush1.msra.mxu0 0.0
        %1572 = vmatprep.subr.mxu0 0.0
        %1573 = vmatpush1.msra.mxu0 0.0
        %1574 = vmatprep.subr.mxu0 0.0
        %1575 = vmatpush1.msra.mxu0 0.0
        %1576 = vmatprep.subr.mxu0 0.0
        %1577 = vmatpush1.msra.mxu0 0.0
        %1578 = vmatprep.subr.mxu0 0.0
        %1579 = vmatpush1.msra.mxu0 0.0
        %1580 = vmatprep.subr.mxu0 0.0
        %1581 = vmatpush1.msra.mxu0 0.0
        %1582 = vmatprep.subr.mxu0 0.0
        %1583 = vmatpush1.msra.mxu0 0.0
        %1584 = vmatprep.subr.mxu0 0.0
        %1585 = vmatpush1.msra.mxu0 0.0
        %1586 = vmatprep.subr.mxu0 0.0
        %1587 = vmatpush1.msra.mxu0 0.0
        %1588 = vmatprep.subr.mxu0 0.0
        %1589 = vmatpush1.msra.mxu0 0.0
        %1590 = vmatprep.subr.mxu0 0.0
        %1591 = vmatpush1.msra.mxu0 0.0
        %1592 = vmatprep.subr.mxu0 0.0
        %1593 = vmatpush1.msra.mxu0 0.0
        %1594 = vmatprep.subr.mxu0 0.0
        %1595 = vmatpush1.msra.mxu0 0.0
        %1596 = vmatprep.subr.mxu0 0.0
        %1597 = vmatpush1.msra.mxu0 0.0
        %1598 = vmatprep.subr.mxu0 0.0
        %1599 = vmatpush1.msra.mxu0 0.0
        %1600 = vmatprep.subr.mxu0 0.0
        %1601 = vmatpush1.msra.mxu0 0.0
        %1602 = vmatprep.subr.mxu0 0.0
        %1603 = vmatpush1.msra.mxu0 0.0
        %1604 = vmatprep.subr.mxu0 0.0
        %1605 = vmatpush1.msra.mxu0 0.0
        %1606 = vmatprep.subr.mxu0 0.0
        %1607 = vmatpush1.msra.mxu0 0.0
        %1608 = vmatprep.subr.mxu0 0.0
        %1609 = vmatpush1.msra.mxu0 0.0
        %1610 = vmatprep.subr.mxu0 0.0
        %1611 = vmatpush1.msra.mxu0 0.0
        %1612 = vmatprep.subr.mxu0 0.0
        %1613 = vmatpush1.msra.mxu0 0.0
        %1614 = vmatprep.subr.mxu0 0.0
        %1615 = vmatpush1.msra.mxu0 0.0
        %1616 = vmatprep.subr.mxu0 0.0
        %1617 = vmatpush1.msra.mxu0 0.0
        %1618 = vmatprep.subr.mxu0 0.0
        %1619 = vmatpush1.msra.mxu0 0.0
        %1620 = vmatprep.subr.mxu0 0.0
        %1621 = vmatpush1.msra.mxu0 0.0
        %1622 = vmatprep.mubr.f32.mxu0 0.0
        %v1623 = vand.u32 %v1280, 4294901760
        %1624 = vmatmul.mubr.f32.gmra.mrb[0].mxu0 %v1623
        %v1625 = vpop.f32.mrb[0].mxu0
        %v1626 = vadd.f32 %v1400, %v1625
        %v1627 = vpop.f32.mrb[0].mxu0
        %1628 = vmatprep.mubr.f32.mxu0 0.0
        %v1629 = vand.u32 %v1283, 4294901760
        %1630 = vmatmul.mubr.f32.gmra.mrb[0].mxu0 %v1629
        %v1631 = vpop.f32.mrb[0].mxu0
        %v1632 = vadd.f32 %v1410, %v1631
        %v1633 = vpop.f32.mrb[0].mxu0
        %1634 = vmatprep.mubr.f32.mxu0 0.0
        %v1635 = vand.u32 %v1286, 4294901760
        %1636 = vmatmul.mubr.f32.gmra.mrb[0].mxu0 %v1635
        %v1637 = vpop.f32.mrb[0].mxu0
        %v1638 = vadd.f32 %v1420, %v1637
        %v1639 = vpop.f32.mrb[0].mxu0
        %1640 = vmatprep.mubr.f32.mxu0 0.0
        %v1641 = vand.u32 %v1289, 4294901760
        %1642 = vmatmul.mubr.f32.gmra.mrb[0].mxu0 %v1641
        %v1643 = vpop.f32.mrb[0].mxu0
        %v1644 = vadd.f32 %v1430, %v1643
        %v1645 = vpop.f32.mrb[0].mxu0
        %1646 = vmatprep.mubr.f32.mxu0 0.0
        %v1647 = vand.u32 %v1292, 4294901760
        %1648 = vmatmul.mubr.f32.gmra.mrb[0].mxu0 %v1647
        %v1649 = vpop.f32.mrb[0].mxu0
        %v1650 = vadd.f32 %v1440, %v1649
        %v1651 = vpop.f32.mrb[0].mxu0
        %1652 = vmatprep.mubr.f32.mxu0 0.0
        %v1653 = vand.u32 %v1295, 4294901760
        %1654 = vmatmul.mubr.f32.gmra.mrb[0].mxu0 %v1653
        %v1655 = vpop.f32.mrb[0].mxu0
        %v1656 = vadd.f32 %v1450, %v1655
        %v1657 = vpop.f32.mrb[0].mxu0
        %1658 = vmatprep.mubr.f32.mxu0 0.0
        %v1659 = vand.u32 %v1298, 4294901760
        %1660 = vmatmul.mubr.f32.gmra.mrb[0].mxu0 %v1659
        %v1661 = vpop.f32.mrb[0].mxu0
        %v1662 = vadd.f32 %v1460, %v1661
        %v1663 = vpop.f32.mrb[0].mxu0
        %1664 = vmatprep.mubr.f32.mxu0 0.0
        %v1665 = vand.u32 %v1301, 4294901760
        %1666 = vmatmul.mubr.f32.gmra.mrb[0].mxu0 %v1665
        %v1667 = vpop.f32.mrb[0].mxu0
        %v1668 = vadd.f32 %v1470, %v1667
        %v1669 = vpop.f32.mrb[0].mxu0
        %1670 = vmatprep.mubr.f32.mxu0 0.0
        %v1671 = vand.u32 %v1304, 4294901760
        %1672 = vmatmul.mubr.f32.gmra.mrb[0].mxu0 %v1671
        %v1673 = vpop.f32.mrb[0].mxu0
        %v1674 = vadd.f32 %v1480, %v1673
        %v1675 = vpop.f32.mrb[0].mxu0
        %1676 = vmatprep.mubr.f32.mxu0 0.0
        %v1677 = vand.u32 %v1307, 4294901760
        %1678 = vmatmul.mubr.f32.gmra.mrb[0].mxu0 %v1677
        %v1679 = vpop.f32.mrb[0].mxu0
        %v1680 = vadd.f32 %v1490, %v1679
        %v1681 = vpop.f32.mrb[0].mxu0
        %1682 = vmatprep.mubr.f32.mxu0 0.0
        %v1683 = vand.u32 %v1310, 4294901760
        %1684 = vmatmul.mubr.f32.gmra.mrb[0].mxu0 %v1683
        %v1685 = vpop.f32.mrb[0].mxu0
        %v1686 = vadd.f32 %v1500, %v1685
        %v1687 = vpop.f32.mrb[0].mxu0
        %1688 = vmatprep.mubr.f32.mxu0 0.0
        %v1689 = vand.u32 %v1313, 4294901760
        %1690 = vmatmul.mubr.f32.gmra.mrb[0].mxu0 %v1689
        %v1691 = vpop.f32.mrb[0].mxu0
        %v1692 = vadd.f32 %v1510, %v1691
        %v1693 = vpop.f32.mrb[0].mxu0
        %1694 = vmatprep.mubr.f32.mxu0 0.0
        %v1695 = vand.u32 %v1316, 4294901760
        %1696 = vmatmul.mubr.f32.gmra.mrb[0].mxu0 %v1695
        %v1697 = vpop.f32.mrb[0].mxu0
        %v1698 = vadd.f32 %v1520, %v1697
        %v1699 = vpop.f32.mrb[0].mxu0
        %1700 = vmatprep.mubr.f32.mxu0 0.0
        %v1701 = vand.u32 %v1319, 4294901760
        %1702 = vmatmul.mubr.f32.gmra.mrb[0].mxu0 %v1701
        %v1703 = vpop.f32.mrb[0].mxu0
        %v1704 = vadd.f32 %v1530, %v1703
        %v1705 = vpop.f32.mrb[0].mxu0
        %1706 = vmatprep.mubr.f32.mxu0 0.0
        %v1707 = vand.u32 %v1322, 4294901760
        %1708 = vmatmul.mubr.f32.gmra.mrb[0].mxu0 %v1707
        %v1709 = vpop.f32.mrb[0].mxu0
        %v1710 = vadd.f32 %v1540, %v1709
        %v1711 = vpop.f32.mrb[0].mxu0
        %1712 = vmatprep.mubr.f32.mxu0 0.0
        %v1713 = vand.u32 %v1325, 4294901760
        %1714 = vmatmul.mubr.f32.gmra.mrb[0].mxu0 %v1713
        %v1715 = vpop.f32.mrb[0].mxu0
        %v1716 = vadd.f32 %v1550, %v1715
        %v1717 = vpop.f32.mrb[0].mxu0
        %1718 = vdwg.mxu0
        %1719 = vmatprep.subr.mxu0 0.0
        %v1720 = vand.u32 %v382, 4294901760
        %v1721 = vsub.f32 %v382, %v1720
        %1722 = vmatpush1.msra.mxu0 %v1721
        %1723 = vmatprep.subr.mxu0 0.0
        %1724 = vmatpush1.msra.mxu0 0.0
        %1725 = vmatprep.subr.mxu0 0.0
        %1726 = vmatpush1.msra.mxu0 0.0
        %1727 = vmatprep.subr.mxu0 0.0
        %1728 = vmatpush1.msra.mxu0 0.0
        %1729 = vmatprep.subr.mxu0 0.0
        %1730 = vmatpush1.msra.mxu0 0.0
        %1731 = vmatprep.subr.mxu0 0.0
        %1732 = vmatpush1.msra.mxu0 0.0
        %1733 = vmatprep.subr.mxu0 0.0
        %1734 = vmatpush1.msra.mxu0 0.0
        %1735 = vmatprep.subr.mxu0 0.0
        %1736 = vmatpush1.msra.mxu0 0.0
        %1737 = vmatprep.subr.mxu0 0.0
        %1738 = vmatpush1.msra.mxu0 0.0
        %1739 = vmatprep.subr.mxu0 0.0
        %1740 = vmatpush1.msra.mxu0 0.0
        %1741 = vmatprep.subr.mxu0 0.0
        %1742 = vmatpush1.msra.mxu0 0.0
        %1743 = vmatprep.subr.mxu0 0.0
        %1744 = vmatpush1.msra.mxu0 0.0
        %1745 = vmatprep.subr.mxu0 0.0
        %1746 = vmatpush1.msra.mxu0 0.0
        %1747 = vmatprep.subr.mxu0 0.0
        %1748 = vmatpush1.msra.mxu0 0.0
        %1749 = vmatprep.subr.mxu0 0.0
        %1750 = vmatpush1.msra.mxu0 0.0
        %1751 = vmatprep.subr.mxu0 0.0
        %1752 = vmatpush1.msra.mxu0 0.0
        %1753 = vmatprep.subr.mxu0 0.0
        %1754 = vmatpush1.msra.mxu0 0.0
        %1755 = vmatprep.subr.mxu0 0.0
        %1756 = vmatpush1.msra.mxu0 0.0
        %1757 = vmatprep.subr.mxu0 0.0
        %1758 = vmatpush1.msra.mxu0 0.0
        %1759 = vmatprep.subr.mxu0 0.0
        %1760 = vmatpush1.msra.mxu0 0.0
        %1761 = vmatprep.subr.mxu0 0.0
        %1762 = vmatpush1.msra.mxu0 0.0
        %1763 = vmatprep.subr.mxu0 0.0
        %1764 = vmatpush1.msra.mxu0 0.0
        %1765 = vmatprep.subr.mxu0 0.0
        %1766 = vmatpush1.msra.mxu0 0.0
        %1767 = vmatprep.subr.mxu0 0.0
        %1768 = vmatpush1.msra.mxu0 0.0
        %1769 = vmatprep.subr.mxu0 0.0
        %1770 = vmatpush1.msra.mxu0 0.0
        %1771 = vmatprep.subr.mxu0 0.0
        %1772 = vmatpush1.msra.mxu0 0.0
        %1773 = vmatprep.subr.mxu0 0.0
        %1774 = vmatpush1.msra.mxu0 0.0
        %1775 = vmatprep.subr.mxu0 0.0
        %1776 = vmatpush1.msra.mxu0 0.0
        %1777 = vmatprep.subr.mxu0 0.0
        %1778 = vmatpush1.msra.mxu0 0.0
        %1779 = vmatprep.subr.mxu0 0.0
        %1780 = vmatpush1.msra.mxu0 0.0
        %1781 = vmatprep.subr.mxu0 0.0
        %1782 = vmatpush1.msra.mxu0 0.0
        %1783 = vmatprep.subr.mxu0 0.0
        %1784 = vmatpush1.msra.mxu0 0.0
        %1785 = vmatprep.mubr.f32.mxu0 0.0
        %v1786 = vand.u32 %v1280, 4294901760
        %v1787 = vsub.f32 %v1280, %v1786
        %1788 = vmatmul.mubr.f32.gmra.mrb[0].mxu0 %v1787
        %v1789 = vpop.f32.mrb[0].mxu0
        %v1790 = vadd.f32 %v1626, %v1789
        %v1791 = vpop.f32.mrb[0].mxu0
        %1792 = vmatprep.mubr.f32.mxu0 0.0
        %v1793 = vand.u32 %v1283, 4294901760
        %v1794 = vsub.f32 %v1283, %v1793
        %1795 = vmatmul.mubr.f32.gmra.mrb[0].mxu0 %v1794
        %v1796 = vpop.f32.mrb[0].mxu0
        %v1797 = vadd.f32 %v1632, %v1796
        %v1798 = vpop.f32.mrb[0].mxu0
        %1799 = vmatprep.mubr.f32.mxu0 0.0
        %v1800 = vand.u32 %v1286, 4294901760
        %v1801 = vsub.f32 %v1286, %v1800
        %1802 = vmatmul.mubr.f32.gmra.mrb[0].mxu0 %v1801
        %v1803 = vpop.f32.mrb[0].mxu0
        %v1804 = vadd.f32 %v1638, %v1803
        %v1805 = vpop.f32.mrb[0].mxu0
        %1806 = vmatprep.mubr.f32.mxu0 0.0
        %v1807 = vand.u32 %v1289, 4294901760
        %v1808 = vsub.f32 %v1289, %v1807
        %1809 = vmatmul.mubr.f32.gmra.mrb[0].mxu0 %v1808
        %v1810 = vpop.f32.mrb[0].mxu0
        %v1811 = vadd.f32 %v1644, %v1810
        %v1812 = vpop.f32.mrb[0].mxu0
        %1813 = vmatprep.mubr.f32.mxu0 0.0
        %v1814 = vand.u32 %v1292, 4294901760
        %v1815 = vsub.f32 %v1292, %v1814
        %1816 = vmatmul.mubr.f32.gmra.mrb[0].mxu0 %v1815
        %v1817 = vpop.f32.mrb[0].mxu0
        %v1818 = vadd.f32 %v1650, %v1817
        %v1819 = vpop.f32.mrb[0].mxu0
        %1820 = vmatprep.mubr.f32.mxu0 0.0
        %v1821 = vand.u32 %v1295, 4294901760
        %v1822 = vsub.f32 %v1295, %v1821
        %1823 = vmatmul.mubr.f32.gmra.mrb[0].mxu0 %v1822
        %v1824 = vpop.f32.mrb[0].mxu0
        %v1825 = vadd.f32 %v1656, %v1824
        %v1826 = vpop.f32.mrb[0].mxu0
        %1827 = vmatprep.mubr.f32.mxu0 0.0
        %v1828 = vand.u32 %v1298, 4294901760
        %v1829 = vsub.f32 %v1298, %v1828
        %1830 = vmatmul.mubr.f32.gmra.mrb[0].mxu0 %v1829
        %v1831 = vpop.f32.mrb[0].mxu0
        %v1832 = vadd.f32 %v1662, %v1831
        %v1833 = vpop.f32.mrb[0].mxu0
        %1834 = vmatprep.mubr.f32.mxu0 0.0
        %v1835 = vand.u32 %v1301, 4294901760
        %v1836 = vsub.f32 %v1301, %v1835
        %1837 = vmatmul.mubr.f32.gmra.mrb[0].mxu0 %v1836
        %v1838 = vpop.f32.mrb[0].mxu0
        %v1839 = vadd.f32 %v1668, %v1838
        %v1840 = vpop.f32.mrb[0].mxu0
        %1841 = vmatprep.mubr.f32.mxu0 0.0
        %v1842 = vand.u32 %v1304, 4294901760
        %v1843 = vsub.f32 %v1304, %v1842
        %1844 = vmatmul.mubr.f32.gmra.mrb[0].mxu0 %v1843
        %v1845 = vpop.f32.mrb[0].mxu0
        %v1846 = vadd.f32 %v1674, %v1845
        %v1847 = vpop.f32.mrb[0].mxu0
        %1848 = vmatprep.mubr.f32.mxu0 0.0
        %v1849 = vand.u32 %v1307, 4294901760
        %v1850 = vsub.f32 %v1307, %v1849
        %1851 = vmatmul.mubr.f32.gmra.mrb[0].mxu0 %v1850
        %v1852 = vpop.f32.mrb[0].mxu0
        %v1853 = vadd.f32 %v1680, %v1852
        %v1854 = vpop.f32.mrb[0].mxu0
        %1855 = vmatprep.mubr.f32.mxu0 0.0
        %v1856 = vand.u32 %v1310, 4294901760
        %v1857 = vsub.f32 %v1310, %v1856
        %1858 = vmatmul.mubr.f32.gmra.mrb[0].mxu0 %v1857
        %v1859 = vpop.f32.mrb[0].mxu0
        %v1860 = vadd.f32 %v1686, %v1859
        %v1861 = vpop.f32.mrb[0].mxu0
        %1862 = vmatprep.mubr.f32.mxu0 0.0
        %v1863 = vand.u32 %v1313, 4294901760
        %v1864 = vsub.f32 %v1313, %v1863
        %1865 = vmatmul.mubr.f32.gmra.mrb[0].mxu0 %v1864
        %v1866 = vpop.f32.mrb[0].mxu0
        %v1867 = vadd.f32 %v1692, %v1866
        %v1868 = vpop.f32.mrb[0].mxu0
        %1869 = vmatprep.mubr.f32.mxu0 0.0
        %v1870 = vand.u32 %v1316, 4294901760
        %v1871 = vsub.f32 %v1316, %v1870
        %1872 = vmatmul.mubr.f32.gmra.mrb[0].mxu0 %v1871
        %v1873 = vpop.f32.mrb[0].mxu0
        %v1874 = vadd.f32 %v1698, %v1873
        %v1875 = vpop.f32.mrb[0].mxu0
        %1876 = vmatprep.mubr.f32.mxu0 0.0
        %v1877 = vand.u32 %v1319, 4294901760
        %v1878 = vsub.f32 %v1319, %v1877
        %1879 = vmatmul.mubr.f32.gmra.mrb[0].mxu0 %v1878
        %v1880 = vpop.f32.mrb[0].mxu0
        %v1881 = vadd.f32 %v1704, %v1880
        %v1882 = vpop.f32.mrb[0].mxu0
        %1883 = vmatprep.mubr.f32.mxu0 0.0
        %v1884 = vand.u32 %v1322, 4294901760
        %v1885 = vsub.f32 %v1322, %v1884
        %1886 = vmatmul.mubr.f32.gmra.mrb[0].mxu0 %v1885
        %v1887 = vpop.f32.mrb[0].mxu0
        %v1888 = vadd.f32 %v1710, %v1887
        %v1889 = vpop.f32.mrb[0].mxu0
        %1890 = vmatprep.mubr.f32.mxu0 0.0
        %v1891 = vand.u32 %v1325, 4294901760
        %v1892 = vsub.f32 %v1325, %v1891
        %1893 = vmatmul.mubr.f32.gmra.mrb[0].mxu0 %v1892
        %v1894 = vpop.f32.mrb[0].mxu0
        %v1895 = vadd.f32 %v1716, %v1894
        %v1896 = vpop.f32.mrb[0].mxu0
        %1897 = vdwg.mxu0
        %1898 = vmatprep.subr.mxu0 0.0
        %v1899 = vand.u32 %v382, 4294901760
        %1900 = vmatpush1.msra.mxu0 %v1899
        %1901 = vmatprep.subr.mxu0 0.0
        %1902 = vmatpush1.msra.mxu0 0.0
        %1903 = vmatprep.subr.mxu0 0.0
        %1904 = vmatpush1.msra.mxu0 0.0
        %1905 = vmatprep.subr.mxu0 0.0
        %1906 = vmatpush1.msra.mxu0 0.0
        %1907 = vmatprep.subr.mxu0 0.0
        %1908 = vmatpush1.msra.mxu0 0.0
        %1909 = vmatprep.subr.mxu0 0.0
        %1910 = vmatpush1.msra.mxu0 0.0
        %1911 = vmatprep.subr.mxu0 0.0
        %1912 = vmatpush1.msra.mxu0 0.0
        %1913 = vmatprep.subr.mxu0 0.0
        %1914 = vmatpush1.msra.mxu0 0.0
        %1915 = vmatprep.subr.mxu0 0.0
        %1916 = vmatpush1.msra.mxu0 0.0
        %1917 = vmatprep.subr.mxu0 0.0
        %1918 = vmatpush1.msra.mxu0 0.0
        %1919 = vmatprep.subr.mxu0 0.0
        %1920 = vmatpush1.msra.mxu0 0.0
        %1921 = vmatprep.subr.mxu0 0.0
        %1922 = vmatpush1.msra.mxu0 0.0
        %1923 = vmatprep.subr.mxu0 0.0
        %1924 = vmatpush1.msra.mxu0 0.0
        %1925 = vmatprep.subr.mxu0 0.0
        %1926 = vmatpush1.msra.mxu0 0.0
        %1927 = vmatprep.subr.mxu0 0.0
        %1928 = vmatpush1.msra.mxu0 0.0
        %1929 = vmatprep.subr.mxu0 0.0
        %1930 = vmatpush1.msra.mxu0 0.0
        %1931 = vmatprep.subr.mxu0 0.0
        %1932 = vmatpush1.msra.mxu0 0.0
        %1933 = vmatprep.subr.mxu0 0.0
        %1934 = vmatpush1.msra.mxu0 0.0
        %1935 = vmatprep.subr.mxu0 0.0
        %1936 = vmatpush1.msra.mxu0 0.0
        %1937 = vmatprep.subr.mxu0 0.0
        %1938 = vmatpush1.msra.mxu0 0.0
        %1939 = vmatprep.subr.mxu0 0.0
        %1940 = vmatpush1.msra.mxu0 0.0
        %1941 = vmatprep.subr.mxu0 0.0
        %1942 = vmatpush1.msra.mxu0 0.0
        %1943 = vmatprep.subr.mxu0 0.0
        %1944 = vmatpush1.msra.mxu0 0.0
        %1945 = vmatprep.subr.mxu0 0.0
        %1946 = vmatpush1.msra.mxu0 0.0
        %1947 = vmatprep.subr.mxu0 0.0
        %1948 = vmatpush1.msra.mxu0 0.0
        %1949 = vmatprep.subr.mxu0 0.0
        %1950 = vmatpush1.msra.mxu0 0.0
        %1951 = vmatprep.subr.mxu0 0.0
        %1952 = vmatpush1.msra.mxu0 0.0
        %1953 = vmatprep.subr.mxu0 0.0
        %1954 = vmatpush1.msra.mxu0 0.0
        %1955 = vmatprep.subr.mxu0 0.0
        %1956 = vmatpush1.msra.mxu0 0.0
        %1957 = vmatprep.subr.mxu0 0.0
        %1958 = vmatpush1.msra.mxu0 0.0
        %1959 = vmatprep.subr.mxu0 0.0
        %1960 = vmatpush1.msra.mxu0 0.0
        %1961 = vmatprep.subr.mxu0 0.0
        %1962 = vmatpush1.msra.mxu0 0.0
        %1963 = vmatprep.mubr.f32.mxu0 0.0
        %v1964 = vand.u32 %v1280, 4294901760
        %v1965 = vsub.f32 %v1280, %v1964
        %v1966 = vand.u32 %v1965, 4294901760
        %1967 = vmatmul.mubr.f32.gmra.mrb[0].mxu0 %v1966
        %v1968 = vpop.f32.mrb[0].mxu0
        %v1969 = vadd.f32 %v1790, %v1968
        %v1970 = vpop.f32.mrb[0].mxu0
        %1971 = vmatprep.mubr.f32.mxu0 0.0
        %v1972 = vand.u32 %v1283, 4294901760
        %v1973 = vsub.f32 %v1283, %v1972
        %v1974 = vand.u32 %v1973, 4294901760
        %1975 = vmatmul.mubr.f32.gmra.mrb[0].mxu0 %v1974
        %v1976 = vpop.f32.mrb[0].mxu0
        %v1977 = vadd.f32 %v1797, %v1976
        %v1978 = vpop.f32.mrb[0].mxu0
        %1979 = vmatprep.mubr.f32.mxu0 0.0
        %v1980 = vand.u32 %v1286, 4294901760
        %v1981 = vsub.f32 %v1286, %v1980
        %v1982 = vand.u32 %v1981, 4294901760
        %1983 = vmatmul.mubr.f32.gmra.mrb[0].mxu0 %v1982
        %v1984 = vpop.f32.mrb[0].mxu0
        %v1985 = vadd.f32 %v1804, %v1984
        %v1986 = vpop.f32.mrb[0].mxu0
        %1987 = vmatprep.mubr.f32.mxu0 0.0
        %v1988 = vand.u32 %v1289, 4294901760
        %v1989 = vsub.f32 %v1289, %v1988
        %v1990 = vand.u32 %v1989, 4294901760
        %1991 = vmatmul.mubr.f32.gmra.mrb[0].mxu0 %v1990
        %v1992 = vpop.f32.mrb[0].mxu0
        %v1993 = vadd.f32 %v1811, %v1992
        %v1994 = vpop.f32.mrb[0].mxu0
        %1995 = vmatprep.mubr.f32.mxu0 0.0
        %v1996 = vand.u32 %v1292, 4294901760
        %v1997 = vsub.f32 %v1292, %v1996
        %v1998 = vand.u32 %v1997, 4294901760
        %1999 = vmatmul.mubr.f32.gmra.mrb[0].mxu0 %v1998
        %v2000 = vpop.f32.mrb[0].mxu0
        %v2001 = vadd.f32 %v1818, %v2000
        %v2002 = vpop.f32.mrb[0].mxu0
        %2003 = vmatprep.mubr.f32.mxu0 0.0
        %v2004 = vand.u32 %v1295, 4294901760
        %v2005 = vsub.f32 %v1295, %v2004
        %v2006 = vand.u32 %v2005, 4294901760
        %2007 = vmatmul.mubr.f32.gmra.mrb[0].mxu0 %v2006
        %v2008 = vpop.f32.mrb[0].mxu0
        %v2009 = vadd.f32 %v1825, %v2008
        %v2010 = vpop.f32.mrb[0].mxu0
        %2011 = vmatprep.mubr.f32.mxu0 0.0
        %v2012 = vand.u32 %v1298, 4294901760
        %v2013 = vsub.f32 %v1298, %v2012
        %v2014 = vand.u32 %v2013, 4294901760
        %2015 = vmatmul.mubr.f32.gmra.mrb[0].mxu0 %v2014
        %v2016 = vpop.f32.mrb[0].mxu0
        %v2017 = vadd.f32 %v1832, %v2016
        %v2018 = vpop.f32.mrb[0].mxu0
        %2019 = vmatprep.mubr.f32.mxu0 0.0
        %v2020 = vand.u32 %v1301, 4294901760
        %v2021 = vsub.f32 %v1301, %v2020
        %v2022 = vand.u32 %v2021, 4294901760
        %2023 = vmatmul.mubr.f32.gmra.mrb[0].mxu0 %v2022
        %v2024 = vpop.f32.mrb[0].mxu0
        %v2025 = vadd.f32 %v1839, %v2024
        %v2026 = vpop.f32.mrb[0].mxu0
        %2027 = vmatprep.mubr.f32.mxu0 0.0
        %v2028 = vand.u32 %v1304, 4294901760
        %v2029 = vsub.f32 %v1304, %v2028
        %v2030 = vand.u32 %v2029, 4294901760
        %2031 = vmatmul.mubr.f32.gmra.mrb[0].mxu0 %v2030
        %v2032 = vpop.f32.mrb[0].mxu0
        %v2033 = vadd.f32 %v1846, %v2032
        %v2034 = vpop.f32.mrb[0].mxu0
        %2035 = vmatprep.mubr.f32.mxu0 0.0
        %v2036 = vand.u32 %v1307, 4294901760
        %v2037 = vsub.f32 %v1307, %v2036
        %v2038 = vand.u32 %v2037, 4294901760
        %2039 = vmatmul.mubr.f32.gmra.mrb[0].mxu0 %v2038
        %v2040 = vpop.f32.mrb[0].mxu0
        %v2041 = vadd.f32 %v1853, %v2040
        %v2042 = vpop.f32.mrb[0].mxu0
        %2043 = vmatprep.mubr.f32.mxu0 0.0
        %v2044 = vand.u32 %v1310, 4294901760
        %v2045 = vsub.f32 %v1310, %v2044
        %v2046 = vand.u32 %v2045, 4294901760
        %2047 = vmatmul.mubr.f32.gmra.mrb[0].mxu0 %v2046
        %v2048 = vpop.f32.mrb[0].mxu0
        %v2049 = vadd.f32 %v1860, %v2048
        %v2050 = vpop.f32.mrb[0].mxu0
        %2051 = vmatprep.mubr.f32.mxu0 0.0
        %v2052 = vand.u32 %v1313, 4294901760
        %v2053 = vsub.f32 %v1313, %v2052
        %v2054 = vand.u32 %v2053, 4294901760
        %2055 = vmatmul.mubr.f32.gmra.mrb[0].mxu0 %v2054
        %v2056 = vpop.f32.mrb[0].mxu0
        %v2057 = vadd.f32 %v1867, %v2056
        %v2058 = vpop.f32.mrb[0].mxu0
        %2059 = vmatprep.mubr.f32.mxu0 0.0
        %v2060 = vand.u32 %v1316, 4294901760
        %v2061 = vsub.f32 %v1316, %v2060
        %v2062 = vand.u32 %v2061, 4294901760
        %2063 = vmatmul.mubr.f32.gmra.mrb[0].mxu0 %v2062
        %v2064 = vpop.f32.mrb[0].mxu0
        %v2065 = vadd.f32 %v1874, %v2064
        %v2066 = vpop.f32.mrb[0].mxu0
        %2067 = vmatprep.mubr.f32.mxu0 0.0
        %v2068 = vand.u32 %v1319, 4294901760
        %v2069 = vsub.f32 %v1319, %v2068
        %v2070 = vand.u32 %v2069, 4294901760
        %2071 = vmatmul.mubr.f32.gmra.mrb[0].mxu0 %v2070
        %v2072 = vpop.f32.mrb[0].mxu0
        %v2073 = vadd.f32 %v1881, %v2072
        %v2074 = vpop.f32.mrb[0].mxu0
        %2075 = vmatprep.mubr.f32.mxu0 0.0
        %v2076 = vand.u32 %v1322, 4294901760
        %v2077 = vsub.f32 %v1322, %v2076
        %v2078 = vand.u32 %v2077, 4294901760
        %2079 = vmatmul.mubr.f32.gmra.mrb[0].mxu0 %v2078
        %v2080 = vpop.f32.mrb[0].mxu0
        %v2081 = vadd.f32 %v1888, %v2080
        %v2082 = vpop.f32.mrb[0].mxu0
        %2083 = vmatprep.mubr.f32.mxu0 0.0
        %v2084 = vand.u32 %v1325, 4294901760
        %v2085 = vsub.f32 %v1325, %v2084
        %v2086 = vand.u32 %v2085, 4294901760
        %2087 = vmatmul.mubr.f32.gmra.mrb[0].mxu0 %v2086
        %v2088 = vpop.f32.mrb[0].mxu0
        %v2089 = vadd.f32 %v1895, %v2088
        %v2090 = vpop.f32.mrb[0].mxu0
        %2091 = vdwg.mxu0
        %2092 = vmatprep.subr.mxu0 0.0
        %v2093 = vand.u32 %v382, 4294901760
        %v2094 = vsub.f32 %v382, %v2093
        %v2095 = vand.u32 %v2094, 4294901760
        %2096 = vmatpush1.msra.mxu0 %v2095
        %2097 = vmatprep.subr.mxu0 0.0
        %2098 = vmatpush1.msra.mxu0 0.0
        %2099 = vmatprep.subr.mxu0 0.0
        %2100 = vmatpush1.msra.mxu0 0.0
        %2101 = vmatprep.subr.mxu0 0.0
        %2102 = vmatpush1.msra.mxu0 0.0
        %2103 = vmatprep.subr.mxu0 0.0
        %2104 = vmatpush1.msra.mxu0 0.0
        %2105 = vmatprep.subr.mxu0 0.0
        %2106 = vmatpush1.msra.mxu0 0.0
        %2107 = vmatprep.subr.mxu0 0.0
        %2108 = vmatpush1.msra.mxu0 0.0
        %2109 = vmatprep.subr.mxu0 0.0
        %2110 = vmatpush1.msra.mxu0 0.0
        %2111 = vmatprep.subr.mxu0 0.0
        %2112 = vmatpush1.msra.mxu0 0.0
        %2113 = vmatprep.subr.mxu0 0.0
        %2114 = vmatpush1.msra.mxu0 0.0
        %2115 = vmatprep.subr.mxu0 0.0
        %2116 = vmatpush1.msra.mxu0 0.0
        %2117 = vmatprep.subr.mxu0 0.0
        %2118 = vmatpush1.msra.mxu0 0.0
        %2119 = vmatprep.subr.mxu0 0.0
        %2120 = vmatpush1.msra.mxu0 0.0
        %2121 = vmatprep.subr.mxu0 0.0
        %2122 = vmatpush1.msra.mxu0 0.0
        %2123 = vmatprep.subr.mxu0 0.0
        %2124 = vmatpush1.msra.mxu0 0.0
        %2125 = vmatprep.subr.mxu0 0.0
        %2126 = vmatpush1.msra.mxu0 0.0
        %2127 = vmatprep.subr.mxu0 0.0
        %2128 = vmatpush1.msra.mxu0 0.0
        %2129 = vmatprep.subr.mxu0 0.0
        %2130 = vmatpush1.msra.mxu0 0.0
        %2131 = vmatprep.subr.mxu0 0.0
        %2132 = vmatpush1.msra.mxu0 0.0
        %2133 = vmatprep.subr.mxu0 0.0
        %2134 = vmatpush1.msra.mxu0 0.0
        %2135 = vmatprep.subr.mxu0 0.0
        %2136 = vmatpush1.msra.mxu0 0.0
        %2137 = vmatprep.subr.mxu0 0.0
        %2138 = vmatpush1.msra.mxu0 0.0
        %2139 = vmatprep.subr.mxu0 0.0
        %2140 = vmatpush1.msra.mxu0 0.0
        %2141 = vmatprep.subr.mxu0 0.0
        %2142 = vmatpush1.msra.mxu0 0.0
        %2143 = vmatprep.subr.mxu0 0.0
        %2144 = vmatpush1.msra.mxu0 0.0
        %2145 = vmatprep.subr.mxu0 0.0
        %2146 = vmatpush1.msra.mxu0 0.0
        %2147 = vmatprep.subr.mxu0 0.0
        %2148 = vmatpush1.msra.mxu0 0.0
        %2149 = vmatprep.subr.mxu0 0.0
        %2150 = vmatpush1.msra.mxu0 0.0
        %2151 = vmatprep.subr.mxu0 0.0
        %2152 = vmatpush1.msra.mxu0 0.0
        %2153 = vmatprep.subr.mxu0 0.0
        %2154 = vmatpush1.msra.mxu0 0.0
        %2155 = vmatprep.subr.mxu0 0.0
        %2156 = vmatpush1.msra.mxu0 0.0
        %2157 = vmatprep.subr.mxu0 0.0
        %2158 = vmatpush1.msra.mxu0 0.0
        %2159 = vmatprep.mubr.f32.mxu0 0.0
        %v2160 = vand.u32 %v1280, 4294901760
        %2161 = vmatmul.mubr.f32.gmra.mrb[0].mxu0 %v2160
        %v2162 = vpop.f32.mrb[0].mxu0
        %v2163 = vadd.f32 %v1969, %v2162
        %v2164 = vpop.f32.mrb[0].mxu0
        %2165 = vmatprep.mubr.f32.mxu0 0.0
        %v2166 = vand.u32 %v1283, 4294901760
        %2167 = vmatmul.mubr.f32.gmra.mrb[0].mxu0 %v2166
        %v2168 = vpop.f32.mrb[0].mxu0
        %v2169 = vadd.f32 %v1977, %v2168
        %v2170 = vpop.f32.mrb[0].mxu0
        %2171 = vmatprep.mubr.f32.mxu0 0.0
        %v2172 = vand.u32 %v1286, 4294901760
        %2173 = vmatmul.mubr.f32.gmra.mrb[0].mxu0 %v2172
        %v2174 = vpop.f32.mrb[0].mxu0
        %v2175 = vadd.f32 %v1985, %v2174
        %v2176 = vpop.f32.mrb[0].mxu0
        %2177 = vmatprep.mubr.f32.mxu0 0.0
        %v2178 = vand.u32 %v1289, 4294901760
        %2179 = vmatmul.mubr.f32.gmra.mrb[0].mxu0 %v2178
        %v2180 = vpop.f32.mrb[0].mxu0
        %v2181 = vadd.f32 %v1993, %v2180
        %v2182 = vpop.f32.mrb[0].mxu0
        %2183 = vmatprep.mubr.f32.mxu0 0.0
        %v2184 = vand.u32 %v1292, 4294901760
        %2185 = vmatmul.mubr.f32.gmra.mrb[0].mxu0 %v2184
        %v2186 = vpop.f32.mrb[0].mxu0
        %v2187 = vadd.f32 %v2001, %v2186
        %v2188 = vpop.f32.mrb[0].mxu0
        %2189 = vmatprep.mubr.f32.mxu0 0.0
        %v2190 = vand.u32 %v1295, 4294901760
        %2191 = vmatmul.mubr.f32.gmra.mrb[0].mxu0 %v2190
        %v2192 = vpop.f32.mrb[0].mxu0
        %v2193 = vadd.f32 %v2009, %v2192
        %v2194 = vpop.f32.mrb[0].mxu0
        %2195 = vmatprep.mubr.f32.mxu0 0.0
        %v2196 = vand.u32 %v1298, 4294901760
        %2197 = vmatmul.mubr.f32.gmra.mrb[0].mxu0 %v2196
        %v2198 = vpop.f32.mrb[0].mxu0
        %v2199 = vadd.f32 %v2017, %v2198
        %v2200 = vpop.f32.mrb[0].mxu0
        %2201 = vmatprep.mubr.f32.mxu0 0.0
        %v2202 = vand.u32 %v1301, 4294901760
        %2203 = vmatmul.mubr.f32.gmra.mrb[0].mxu0 %v2202
        %v2204 = vpop.f32.mrb[0].mxu0
        %v2205 = vadd.f32 %v2025, %v2204
        %v2206 = vpop.f32.mrb[0].mxu0
        %2207 = vmatprep.mubr.f32.mxu0 0.0
        %v2208 = vand.u32 %v1304, 4294901760
        %2209 = vmatmul.mubr.f32.gmra.mrb[0].mxu0 %v2208
        %v2210 = vpop.f32.mrb[0].mxu0
        %v2211 = vadd.f32 %v2033, %v2210
        %v2212 = vpop.f32.mrb[0].mxu0
        %2213 = vmatprep.mubr.f32.mxu0 0.0
        %v2214 = vand.u32 %v1307, 4294901760
        %2215 = vmatmul.mubr.f32.gmra.mrb[0].mxu0 %v2214
        %v2216 = vpop.f32.mrb[0].mxu0
        %v2217 = vadd.f32 %v2041, %v2216
        %v2218 = vpop.f32.mrb[0].mxu0
        %2219 = vmatprep.mubr.f32.mxu0 0.0
        %v2220 = vand.u32 %v1310, 4294901760
        %2221 = vmatmul.mubr.f32.gmra.mrb[0].mxu0 %v2220
        %v2222 = vpop.f32.mrb[0].mxu0
        %v2223 = vadd.f32 %v2049, %v2222
        %v2224 = vpop.f32.mrb[0].mxu0
        %2225 = vmatprep.mubr.f32.mxu0 0.0
        %v2226 = vand.u32 %v1313, 4294901760
        %2227 = vmatmul.mubr.f32.gmra.mrb[0].mxu0 %v2226
        %v2228 = vpop.f32.mrb[0].mxu0
        %v2229 = vadd.f32 %v2057, %v2228
        %v2230 = vpop.f32.mrb[0].mxu0
        %2231 = vmatprep.mubr.f32.mxu0 0.0
        %v2232 = vand.u32 %v1316, 4294901760
        %2233 = vmatmul.mubr.f32.gmra.mrb[0].mxu0 %v2232
        %v2234 = vpop.f32.mrb[0].mxu0
        %v2235 = vadd.f32 %v2065, %v2234
        %v2236 = vpop.f32.mrb[0].mxu0
        %2237 = vmatprep.mubr.f32.mxu0 0.0
        %v2238 = vand.u32 %v1319, 4294901760
        %2239 = vmatmul.mubr.f32.gmra.mrb[0].mxu0 %v2238
        %v2240 = vpop.f32.mrb[0].mxu0
        %v2241 = vadd.f32 %v2073, %v2240
        %v2242 = vpop.f32.mrb[0].mxu0
        %2243 = vmatprep.mubr.f32.mxu0 0.0
        %v2244 = vand.u32 %v1322, 4294901760
        %2245 = vmatmul.mubr.f32.gmra.mrb[0].mxu0 %v2244
        %v2246 = vpop.f32.mrb[0].mxu0
        %v2247 = vadd.f32 %v2081, %v2246
        %v2248 = vpop.f32.mrb[0].mxu0
        %2249 = vmatprep.mubr.f32.mxu0 0.0
        %v2250 = vand.u32 %v1325, 4294901760
        %2251 = vmatmul.mubr.f32.gmra.mrb[0].mxu0 %v2250
        %v2252 = vpop.f32.mrb[0].mxu0
        %v2253 = vadd.f32 %v2089, %v2252
        %v2254 = vpop.f32.mrb[0].mxu0
        %2255 = vdwg.mxu0
        %2256 = vmatprep.subr.mxu0 0.0
        %v2257 = vand.u32 %v382, 4294901760
        %2258 = vmatpush1.msra.mxu0 %v2257
        %2259 = vmatprep.subr.mxu0 0.0
        %2260 = vmatpush1.msra.mxu0 0.0
        %2261 = vmatprep.subr.mxu0 0.0
        %2262 = vmatpush1.msra.mxu0 0.0
        %2263 = vmatprep.subr.mxu0 0.0
        %2264 = vmatpush1.msra.mxu0 0.0
        %2265 = vmatprep.subr.mxu0 0.0
        %2266 = vmatpush1.msra.mxu0 0.0
        %2267 = vmatprep.subr.mxu0 0.0
        %2268 = vmatpush1.msra.mxu0 0.0
        %2269 = vmatprep.subr.mxu0 0.0
        %2270 = vmatpush1.msra.mxu0 0.0
        %2271 = vmatprep.subr.mxu0 0.0
        %2272 = vmatpush1.msra.mxu0 0.0
        %2273 = vmatprep.subr.mxu0 0.0
        %2274 = vmatpush1.msra.mxu0 0.0
        %2275 = vmatprep.subr.mxu0 0.0
        %2276 = vmatpush1.msra.mxu0 0.0
        %2277 = vmatprep.subr.mxu0 0.0
        %2278 = vmatpush1.msra.mxu0 0.0
        %2279 = vmatprep.subr.mxu0 0.0
        %2280 = vmatpush1.msra.mxu0 0.0
        %2281 = vmatprep.subr.mxu0 0.0
        %2282 = vmatpush1.msra.mxu0 0.0
        %2283 = vmatprep.subr.mxu0 0.0
        %2284 = vmatpush1.msra.mxu0 0.0
        %2285 = vmatprep.subr.mxu0 0.0
        %2286 = vmatpush1.msra.mxu0 0.0
        %2287 = vmatprep.subr.mxu0 0.0
        %2288 = vmatpush1.msra.mxu0 0.0
        %2289 = vmatprep.subr.mxu0 0.0
        %2290 = vmatpush1.msra.mxu0 0.0
        %2291 = vmatprep.subr.mxu0 0.0
        %2292 = vmatpush1.msra.mxu0 0.0
        %2293 = vmatprep.subr.mxu0 0.0
        %2294 = vmatpush1.msra.mxu0 0.0
        %2295 = vmatprep.subr.mxu0 0.0
        %2296 = vmatpush1.msra.mxu0 0.0
        %2297 = vmatprep.subr.mxu0 0.0
        %2298 = vmatpush1.msra.mxu0 0.0
        %2299 = vmatprep.subr.mxu0 0.0
        %2300 = vmatpush1.msra.mxu0 0.0
        %2301 = vmatprep.subr.mxu0 0.0
        %2302 = vmatpush1.msra.mxu0 0.0
        %2303 = vmatprep.subr.mxu0 0.0
        %2304 = vmatpush1.msra.mxu0 0.0
        %2305 = vmatprep.subr.mxu0 0.0
        %2306 = vmatpush1.msra.mxu0 0.0
        %2307 = vmatprep.subr.mxu0 0.0
        %2308 = vmatpush1.msra.mxu0 0.0
        %2309 = vmatprep.subr.mxu0 0.0
        %2310 = vmatpush1.msra.mxu0 0.0
        %2311 = vmatprep.subr.mxu0 0.0
        %2312 = vmatpush1.msra.mxu0 0.0
        %2313 = vmatprep.subr.mxu0 0.0
        %2314 = vmatpush1.msra.mxu0 0.0
        %2315 = vmatprep.subr.mxu0 0.0
        %2316 = vmatpush1.msra.mxu0 0.0
        %2317 = vmatprep.subr.mxu0 0.0
        %2318 = vmatpush1.msra.mxu0 0.0
        %2319 = vmatprep.subr.mxu0 0.0
        %2320 = vmatpush1.msra.mxu0 0.0
        %2321 = vmatprep.mubr.f32.mxu0 0.0
        %v2322 = vand.u32 %v1280, 4294901760
        %2323 = vmatmul.mubr.f32.gmra.mrb[0].mxu0 %v2322
        %v2324 = vpop.f32.mrb[0].mxu0
        %v2325 = vadd.f32 %v2163, %v2324
        %v2326 = vpop.f32.mrb[0].mxu0
        %2327 = vmatprep.mubr.f32.mxu0 0.0
        %v2328 = vand.u32 %v1283, 4294901760
        %2329 = vmatmul.mubr.f32.gmra.mrb[0].mxu0 %v2328
        %v2330 = vpop.f32.mrb[0].mxu0
        %v2331 = vadd.f32 %v2169, %v2330
        %v2332 = vpop.f32.mrb[0].mxu0
        %2333 = vmatprep.mubr.f32.mxu0 0.0
        %v2334 = vand.u32 %v1286, 4294901760
        %2335 = vmatmul.mubr.f32.gmra.mrb[0].mxu0 %v2334
        %v2336 = vpop.f32.mrb[0].mxu0
        %v2337 = vadd.f32 %v2175, %v2336
        %v2338 = vpop.f32.mrb[0].mxu0
        %2339 = vmatprep.mubr.f32.mxu0 0.0
        %v2340 = vand.u32 %v1289, 4294901760
        %2341 = vmatmul.mubr.f32.gmra.mrb[0].mxu0 %v2340
        %v2342 = vpop.f32.mrb[0].mxu0
        %v2343 = vadd.f32 %v2181, %v2342
        %v2344 = vpop.f32.mrb[0].mxu0
        %2345 = vmatprep.mubr.f32.mxu0 0.0
        %v2346 = vand.u32 %v1292, 4294901760
        %2347 = vmatmul.mubr.f32.gmra.mrb[0].mxu0 %v2346
        %v2348 = vpop.f32.mrb[0].mxu0
        %v2349 = vadd.f32 %v2187, %v2348
        %v2350 = vpop.f32.mrb[0].mxu0
        %2351 = vmatprep.mubr.f32.mxu0 0.0
        %v2352 = vand.u32 %v1295, 4294901760
        %2353 = vmatmul.mubr.f32.gmra.mrb[0].mxu0 %v2352
        %v2354 = vpop.f32.mrb[0].mxu0
        %v2355 = vadd.f32 %v2193, %v2354
        %v2356 = vpop.f32.mrb[0].mxu0
        %2357 = vmatprep.mubr.f32.mxu0 0.0
        %v2358 = vand.u32 %v1298, 4294901760
        %2359 = vmatmul.mubr.f32.gmra.mrb[0].mxu0 %v2358
        %v2360 = vpop.f32.mrb[0].mxu0
        %v2361 = vadd.f32 %v2199, %v2360
        %v2362 = vpop.f32.mrb[0].mxu0
        %2363 = vmatprep.mubr.f32.mxu0 0.0
        %v2364 = vand.u32 %v1301, 4294901760
        %2365 = vmatmul.mubr.f32.gmra.mrb[0].mxu0 %v2364
        %v2366 = vpop.f32.mrb[0].mxu0
        %v2367 = vadd.f32 %v2205, %v2366
        %v2368 = vpop.f32.mrb[0].mxu0
        %2369 = vmatprep.mubr.f32.mxu0 0.0
        %v2370 = vand.u32 %v1304, 4294901760
        %2371 = vmatmul.mubr.f32.gmra.mrb[0].mxu0 %v2370
        %v2372 = vpop.f32.mrb[0].mxu0
        %v2373 = vadd.f32 %v2211, %v2372
        %v2374 = vpop.f32.mrb[0].mxu0
        %2375 = vmatprep.mubr.f32.mxu0 0.0
        %v2376 = vand.u32 %v1307, 4294901760
        %2377 = vmatmul.mubr.f32.gmra.mrb[0].mxu0 %v2376
        %v2378 = vpop.f32.mrb[0].mxu0
        %v2379 = vadd.f32 %v2217, %v2378
        %v2380 = vpop.f32.mrb[0].mxu0
        %2381 = vmatprep.mubr.f32.mxu0 0.0
        %v2382 = vand.u32 %v1310, 4294901760
        %2383 = vmatmul.mubr.f32.gmra.mrb[0].mxu0 %v2382
        %v2384 = vpop.f32.mrb[0].mxu0
        %v2385 = vadd.f32 %v2223, %v2384
        %v2386 = vpop.f32.mrb[0].mxu0
        %2387 = vmatprep.mubr.f32.mxu0 0.0
        %v2388 = vand.u32 %v1313, 4294901760
        %2389 = vmatmul.mubr.f32.gmra.mrb[0].mxu0 %v2388
        %v2390 = vpop.f32.mrb[0].mxu0
        %v2391 = vadd.f32 %v2229, %v2390
        %v2392 = vpop.f32.mrb[0].mxu0
        %2393 = vmatprep.mubr.f32.mxu0 0.0
        %v2394 = vand.u32 %v1316, 4294901760
        %2395 = vmatmul.mubr.f32.gmra.mrb[0].mxu0 %v2394
        %v2396 = vpop.f32.mrb[0].mxu0
        %v2397 = vadd.f32 %v2235, %v2396
        %v2398 = vpop.f32.mrb[0].mxu0
        %2399 = vmatprep.mubr.f32.mxu0 0.0
        %v2400 = vand.u32 %v1319, 4294901760
        %2401 = vmatmul.mubr.f32.gmra.mrb[0].mxu0 %v2400
        %v2402 = vpop.f32.mrb[0].mxu0
        %v2403 = vadd.f32 %v2241, %v2402
        %v2404 = vpop.f32.mrb[0].mxu0
        %2405 = vmatprep.mubr.f32.mxu0 0.0
        %v2406 = vand.u32 %v1322, 4294901760
        %2407 = vmatmul.mubr.f32.gmra.mrb[0].mxu0 %v2406
        %v2408 = vpop.f32.mrb[0].mxu0
        %v2409 = vadd.f32 %v2247, %v2408
        %v2410 = vpop.f32.mrb[0].mxu0
        %2411 = vmatprep.mubr.f32.mxu0 0.0
        %v2412 = vand.u32 %v1325, 4294901760
        %2413 = vmatmul.mubr.f32.gmra.mrb[0].mxu0 %v2412
        %v2414 = vpop.f32.mrb[0].mxu0
        %v2415 = vadd.f32 %v2253, %v2414
        %v2416 = vpop.f32.mrb[0].mxu0
        %2417 = vdwg.mxu0
        %v2418 = vadd.f32 %v369, %v364
        %v2419 = vmul.f32 %v827, 2.0
        %v2420 = vsub.f32 %v2418, %v2419
        %vm2421 = vcmp.lt.f32.partialorder %v2420, 1.0
        %v2422 = vsel %vm2421, 1, 0
        %v2423 = vcvt.s32.f32 %v2422
        %v2424 = vld [vmem:[#allocation3] sm:$0xff]
        %2425 = vadd.xlane.f32.xlu0 %v2423
        %v2426 = vpop.xlane.xlu0 %2425
        %v2427 = vadd.f32 %v2424, %v2426
        %vm2428 = vcmask 7168
        %2429 = vst.msk [vmem:[#allocation3] sm:$0xff] %vm2428, %v2427
        %v2430 = vmul.f32 %v1276, 2.0
        %v2431 = vadd.f32 %v377, %v2430
        %v2433 = vcombine.high %v2420, %v2420
        %v2435 = vunpack.c.l.s4 1966171168
        %v2436 = vunpack.c.0.s8 %v2435
        %v2437 = vlaneseq
        %v2438 = vshrl.u32 %v2437, 7
        %v2439 = vsub.s32 %v2436, %v2438
        %v2440 = vrot.slane %v2420, %v2439
        %v2442 = vunpack.c.l.s4 1966171168
        %v2443 = vunpack.c.0.s8 %v2442
        %v2444 = vlaneseq
        %v2445 = vshrl.u32 %v2444, 7
        %v2446 = vsub.s32 %v2443, %v2445
        %v2447 = vrot.slane %v2433, %v2446
        %v2448 = vcombine.high %v2440, %v2440
        %v2449 = vcombine.high %v2447, %v2447
        %v2451 = vunpack.c.l.s4 1966171168
        %v2452 = vunpack.c.0.s8 %v2451
        %v2453 = vlaneseq
        %v2454 = vshrl.u32 %v2453, 7
        %v2455 = vsub.s32 %v2452, %v2454
        %v2456 = vrot.slane %v2440, %v2455
        %v2458 = vunpack.c.l.s4 1966171168
        %v2459 = vunpack.c.0.s8 %v2458
        %v2460 = vlaneseq
        %v2461 = vshrl.u32 %v2460, 7
        %v2462 = vsub.s32 %v2459, %v2461
        %v2463 = vrot.slane %v2447, %v2462
        %v2465 = vunpack.c.l.s4 1966171168
        %v2466 = vunpack.c.0.s8 %v2465
        %v2467 = vlaneseq
        %v2468 = vshrl.u32 %v2467, 7
        %v2469 = vsub.s32 %v2466, %v2468
        %v2470 = vrot.slane %v2448, %v2469
        %v2472 = vunpack.c.l.s4 1966171168
        %v2473 = vunpack.c.0.s8 %v2472
        %v2474 = vlaneseq
        %v2475 = vshrl.u32 %v2474, 7
        %v2476 = vsub.s32 %v2473, %v2475
        %v2477 = vrot.slane %v2449, %v2476
        %v2478 = vcombine.high %v2456, %v2456
        %v2479 = vcombine.high %v2463, %v2463
        %v2480 = vcombine.high %v2470, %v2470
        %v2481 = vcombine.high %v2477, %v2477
        %v2482 = vlaneseq
        %v2483 = vshrl.u32 %v2482, 7
        %v2484 = vsub.s32 0, %v2483
        %v2485 = vrot.slane %v2431, %v2484
        %2487 = vbcast.lane.b32.xlu0 %v2485, 256
        %v2488 = vpop.permute.xlu0 %2487
        %s2490 = sor.u32 256, 8
        %2491 = vbcast.lane.b32.xlu0 %v2485, %s2490
        %v2492 = vpop.permute.xlu0 %2491
        %s2494 = sor.u32 256, 16
        %2495 = vbcast.lane.b32.xlu0 %v2485, %s2494
        %v2496 = vpop.permute.xlu0 %2495
        %s2498 = sor.u32 256, 24
        %2499 = vbcast.lane.b32.xlu0 %v2485, %s2498
        %v2500 = vpop.permute.xlu0 %2499
        %s2502 = sor.u32 256, 32
        %2503 = vbcast.lane.b32.xlu0 %v2485, %s2502
        %v2504 = vpop.permute.xlu0 %2503
        %s2506 = sor.u32 256, 40
        %2507 = vbcast.lane.b32.xlu0 %v2485, %s2506
        %v2508 = vpop.permute.xlu0 %2507
        %s2510 = sor.u32 256, 48
        %2511 = vbcast.lane.b32.xlu0 %v2485, %s2510
        %v2512 = vpop.permute.xlu0 %2511
        %s2514 = sor.u32 256, 56
        %2515 = vbcast.lane.b32.xlu0 %v2485, %s2514
        %v2516 = vpop.permute.xlu0 %2515
        %s2518 = sor.u32 256, 64
        %2519 = vbcast.lane.b32.xlu0 %v2485, %s2518
        %v2520 = vpop.permute.xlu0 %2519
        %s2522 = sor.u32 256, 72
        %2523 = vbcast.lane.b32.xlu0 %v2485, %s2522
        %v2524 = vpop.permute.xlu0 %2523
        %s2526 = sor.u32 256, 80
        %2527 = vbcast.lane.b32.xlu0 %v2485, %s2526
        %v2528 = vpop.permute.xlu0 %2527
        %s2530 = sor.u32 256, 88
        %2531 = vbcast.lane.b32.xlu0 %v2485, %s2530
        %v2532 = vpop.permute.xlu0 %2531
        %s2534 = sor.u32 256, 96
        %2535 = vbcast.lane.b32.xlu0 %v2485, %s2534
        %v2536 = vpop.permute.xlu0 %2535
        %s2538 = sor.u32 256, 104
        %2539 = vbcast.lane.b32.xlu0 %v2485, %s2538
        %v2540 = vpop.permute.xlu0 %2539
        %s2542 = sor.u32 256, 112
        %2543 = vbcast.lane.b32.xlu0 %v2485, %s2542
        %v2544 = vpop.permute.xlu0 %2543
        %s2546 = sor.u32 256, 120
        %2547 = vbcast.lane.b32.xlu0 %v2485, %s2546
        %v2548 = vpop.permute.xlu0 %2547
        %v2549 = vlaneseq
        %v2550 = vshrl.u32 %v2549, 7
        %v2551 = vsub.s32 1, %v2550
        %v2552 = vrot.slane %v2431, %v2551
        %2554 = vbcast.lane.b32.xlu0 %v2552, 256
        %v2555 = vpop.permute.xlu0 %2554
        %s2557 = sor.u32 256, 8
        %2558 = vbcast.lane.b32.xlu0 %v2552, %s2557
        %v2559 = vpop.permute.xlu0 %2558
        %s2561 = sor.u32 256, 16
        %2562 = vbcast.lane.b32.xlu0 %v2552, %s2561
        %v2563 = vpop.permute.xlu0 %2562
        %s2565 = sor.u32 256, 24
        %2566 = vbcast.lane.b32.xlu0 %v2552, %s2565
        %v2567 = vpop.permute.xlu0 %2566
        %s2569 = sor.u32 256, 32
        %2570 = vbcast.lane.b32.xlu0 %v2552, %s2569
        %v2571 = vpop.permute.xlu0 %2570
        %s2573 = sor.u32 256, 40
        %2574 = vbcast.lane.b32.xlu0 %v2552, %s2573
        %v2575 = vpop.permute.xlu0 %2574
        %s2577 = sor.u32 256, 48
        %2578 = vbcast.lane.b32.xlu0 %v2552, %s2577
        %v2579 = vpop.permute.xlu0 %2578
        %s2581 = sor.u32 256, 56
        %2582 = vbcast.lane.b32.xlu0 %v2552, %s2581
        %v2583 = vpop.permute.xlu0 %2582
        %s2585 = sor.u32 256, 64
        %2586 = vbcast.lane.b32.xlu0 %v2552, %s2585
        %v2587 = vpop.permute.xlu0 %2586
        %s2589 = sor.u32 256, 72
        %2590 = vbcast.lane.b32.xlu0 %v2552, %s2589
        %v2591 = vpop.permute.xlu0 %2590
        %s2593 = sor.u32 256, 80
        %2594 = vbcast.lane.b32.xlu0 %v2552, %s2593
        %v2595 = vpop.permute.xlu0 %2594
        %s2597 = sor.u32 256, 88
        %2598 = vbcast.lane.b32.xlu0 %v2552, %s2597
        %v2599 = vpop.permute.xlu0 %2598
        %s2601 = sor.u32 256, 96
        %2602 = vbcast.lane.b32.xlu0 %v2552, %s2601
        %v2603 = vpop.permute.xlu0 %2602
        %s2605 = sor.u32 256, 104
        %2606 = vbcast.lane.b32.xlu0 %v2552, %s2605
        %v2607 = vpop.permute.xlu0 %2606
        %s2609 = sor.u32 256, 112
        %2610 = vbcast.lane.b32.xlu0 %v2552, %s2609
        %v2611 = vpop.permute.xlu0 %2610
        %s2613 = sor.u32 256, 120
        %2614 = vbcast.lane.b32.xlu0 %v2552, %s2613
        %v2615 = vpop.permute.xlu0 %2614
        %v2616 = vlaneseq
        %v2617 = vshrl.u32 %v2616, 7
        %v2618 = vsub.s32 2, %v2617
        %v2619 = vrot.slane %v2431, %v2618
        %2621 = vbcast.lane.b32.xlu0 %v2619, 256
        %v2622 = vpop.permute.xlu0 %2621
        %s2624 = sor.u32 256, 8
        %2625 = vbcast.lane.b32.xlu0 %v2619, %s2624
        %v2626 = vpop.permute.xlu0 %2625
        %s2628 = sor.u32 256, 16
        %2629 = vbcast.lane.b32.xlu0 %v2619, %s2628
        %v2630 = vpop.permute.xlu0 %2629
        %s2632 = sor.u32 256, 24
        %2633 = vbcast.lane.b32.xlu0 %v2619, %s2632
        %v2634 = vpop.permute.xlu0 %2633
        %s2636 = sor.u32 256, 32
        %2637 = vbcast.lane.b32.xlu0 %v2619, %s2636
        %v2638 = vpop.permute.xlu0 %2637
        %s2640 = sor.u32 256, 40
        %2641 = vbcast.lane.b32.xlu0 %v2619, %s2640
        %v2642 = vpop.permute.xlu0 %2641
        %s2644 = sor.u32 256, 48
        %2645 = vbcast.lane.b32.xlu0 %v2619, %s2644
        %v2646 = vpop.permute.xlu0 %2645
        %s2648 = sor.u32 256, 56
        %2649 = vbcast.lane.b32.xlu0 %v2619, %s2648
        %v2650 = vpop.permute.xlu0 %2649
        %s2652 = sor.u32 256, 64
        %2653 = vbcast.lane.b32.xlu0 %v2619, %s2652
        %v2654 = vpop.permute.xlu0 %2653
        %s2656 = sor.u32 256, 72
        %2657 = vbcast.lane.b32.xlu0 %v2619, %s2656
        %v2658 = vpop.permute.xlu0 %2657
        %s2660 = sor.u32 256, 80
        %2661 = vbcast.lane.b32.xlu0 %v2619, %s2660
        %v2662 = vpop.permute.xlu0 %2661
        %s2664 = sor.u32 256, 88
        %2665 = vbcast.lane.b32.xlu0 %v2619, %s2664
        %v2666 = vpop.permute.xlu0 %2665
        %s2668 = sor.u32 256, 96
        %2669 = vbcast.lane.b32.xlu0 %v2619, %s2668
        %v2670 = vpop.permute.xlu0 %2669
        %s2672 = sor.u32 256, 104
        %2673 = vbcast.lane.b32.xlu0 %v2619, %s2672
        %v2674 = vpop.permute.xlu0 %2673
        %s2676 = sor.u32 256, 112
        %2677 = vbcast.lane.b32.xlu0 %v2619, %s2676
        %v2678 = vpop.permute.xlu0 %2677
        %s2680 = sor.u32 256, 120
        %2681 = vbcast.lane.b32.xlu0 %v2619, %s2680
        %v2682 = vpop.permute.xlu0 %2681
        %v2683 = vlaneseq
        %v2684 = vshrl.u32 %v2683, 7
        %v2685 = vsub.s32 3, %v2684
        %v2686 = vrot.slane %v2431, %v2685
        %2688 = vbcast.lane.b32.xlu0 %v2686, 256
        %v2689 = vpop.permute.xlu0 %2688
        %s2691 = sor.u32 256, 8
        %2692 = vbcast.lane.b32.xlu0 %v2686, %s2691
        %v2693 = vpop.permute.xlu0 %2692
        %s2695 = sor.u32 256, 16
        %2696 = vbcast.lane.b32.xlu0 %v2686, %s2695
        %v2697 = vpop.permute.xlu0 %2696
        %s2699 = sor.u32 256, 24
        %2700 = vbcast.lane.b32.xlu0 %v2686, %s2699
        %v2701 = vpop.permute.xlu0 %2700
        %s2703 = sor.u32 256, 32
        %2704 = vbcast.lane.b32.xlu0 %v2686, %s2703
        %v2705 = vpop.permute.xlu0 %2704
        %s2707 = sor.u32 256, 40
        %2708 = vbcast.lane.b32.xlu0 %v2686, %s2707
        %v2709 = vpop.permute.xlu0 %2708
        %s2711 = sor.u32 256, 48
        %2712 = vbcast.lane.b32.xlu0 %v2686, %s2711
        %v2713 = vpop.permute.xlu0 %2712
        %s2715 = sor.u32 256, 56
        %2716 = vbcast.lane.b32.xlu0 %v2686, %s2715
        %v2717 = vpop.permute.xlu0 %2716
        %s2719 = sor.u32 256, 64
        %2720 = vbcast.lane.b32.xlu0 %v2686, %s2719
        %v2721 = vpop.permute.xlu0 %2720
        %s2723 = sor.u32 256, 72
        %2724 = vbcast.lane.b32.xlu0 %v2686, %s2723
        %v2725 = vpop.permute.xlu0 %2724
        %s2727 = sor.u32 256, 80
        %2728 = vbcast.lane.b32.xlu0 %v2686, %s2727
        %v2729 = vpop.permute.xlu0 %2728
        %s2731 = sor.u32 256, 88
        %2732 = vbcast.lane.b32.xlu0 %v2686, %s2731
        %v2733 = vpop.permute.xlu0 %2732
        %s2735 = sor.u32 256, 96
        %2736 = vbcast.lane.b32.xlu0 %v2686, %s2735
        %v2737 = vpop.permute.xlu0 %2736
        %s2739 = sor.u32 256, 104
        %2740 = vbcast.lane.b32.xlu0 %v2686, %s2739
        %v2741 = vpop.permute.xlu0 %2740
        %s2743 = sor.u32 256, 112
        %2744 = vbcast.lane.b32.xlu0 %v2686, %s2743
        %v2745 = vpop.permute.xlu0 %2744
        %s2747 = sor.u32 256, 120
        %2748 = vbcast.lane.b32.xlu0 %v2686, %s2747
        %v2749 = vpop.permute.xlu0 %2748
        %v2750 = vlaneseq
        %v2751 = vshrl.u32 %v2750, 7
        %v2752 = vsub.s32 4, %v2751
        %v2753 = vrot.slane %v2431, %v2752
        %2755 = vbcast.lane.b32.xlu0 %v2753, 256
        %v2756 = vpop.permute.xlu0 %2755
        %s2758 = sor.u32 256, 8
        %2759 = vbcast.lane.b32.xlu0 %v2753, %s2758
        %v2760 = vpop.permute.xlu0 %2759
        %s2762 = sor.u32 256, 16
        %2763 = vbcast.lane.b32.xlu0 %v2753, %s2762
        %v2764 = vpop.permute.xlu0 %2763
        %s2766 = sor.u32 256, 24
        %2767 = vbcast.lane.b32.xlu0 %v2753, %s2766
        %v2768 = vpop.permute.xlu0 %2767
        %s2770 = sor.u32 256, 32
        %2771 = vbcast.lane.b32.xlu0 %v2753, %s2770
        %v2772 = vpop.permute.xlu0 %2771
        %s2774 = sor.u32 256, 40
        %2775 = vbcast.lane.b32.xlu0 %v2753, %s2774
        %v2776 = vpop.permute.xlu0 %2775
        %s2778 = sor.u32 256, 48
        %2779 = vbcast.lane.b32.xlu0 %v2753, %s2778
        %v2780 = vpop.permute.xlu0 %2779
        %s2782 = sor.u32 256, 56
        %2783 = vbcast.lane.b32.xlu0 %v2753, %s2782
        %v2784 = vpop.permute.xlu0 %2783
        %s2786 = sor.u32 256, 64
        %2787 = vbcast.lane.b32.xlu0 %v2753, %s2786
        %v2788 = vpop.permute.xlu0 %2787
        %s2790 = sor.u32 256, 72
        %2791 = vbcast.lane.b32.xlu0 %v2753, %s2790
        %v2792 = vpop.permute.xlu0 %2791
        %s2794 = sor.u32 256, 80
        %2795 = vbcast.lane.b32.xlu0 %v2753, %s2794
        %v2796 = vpop.permute.xlu0 %2795
        %s2798 = sor.u32 256, 88
        %2799 = vbcast.lane.b32.xlu0 %v2753, %s2798
        %v2800 = vpop.permute.xlu0 %2799
        %s2802 = sor.u32 256, 96
        %2803 = vbcast.lane.b32.xlu0 %v2753, %s2802
        %v2804 = vpop.permute.xlu0 %2803
        %s2806 = sor.u32 256, 104
        %2807 = vbcast.lane.b32.xlu0 %v2753, %s2806
        %v2808 = vpop.permute.xlu0 %2807
        %s2810 = sor.u32 256, 112
        %2811 = vbcast.lane.b32.xlu0 %v2753, %s2810
        %v2812 = vpop.permute.xlu0 %2811
        %s2814 = sor.u32 256, 120
        %2815 = vbcast.lane.b32.xlu0 %v2753, %s2814
        %v2816 = vpop.permute.xlu0 %2815
        %v2817 = vlaneseq
        %v2818 = vshrl.u32 %v2817, 7
        %v2819 = vsub.s32 5, %v2818
        %v2820 = vrot.slane %v2431, %v2819
        %2822 = vbcast.lane.b32.xlu0 %v2820, 256
        %v2823 = vpop.permute.xlu0 %2822
        %s2825 = sor.u32 256, 8
        %2826 = vbcast.lane.b32.xlu0 %v2820, %s2825
        %v2827 = vpop.permute.xlu0 %2826
        %s2829 = sor.u32 256, 16
        %2830 = vbcast.lane.b32.xlu0 %v2820, %s2829
        %v2831 = vpop.permute.xlu0 %2830
        %s2833 = sor.u32 256, 24
        %2834 = vbcast.lane.b32.xlu0 %v2820, %s2833
        %v2835 = vpop.permute.xlu0 %2834
        %s2837 = sor.u32 256, 32
        %2838 = vbcast.lane.b32.xlu0 %v2820, %s2837
        %v2839 = vpop.permute.xlu0 %2838
        %s2841 = sor.u32 256, 40
        %2842 = vbcast.lane.b32.xlu0 %v2820, %s2841
        %v2843 = vpop.permute.xlu0 %2842
        %s2845 = sor.u32 256, 48
        %2846 = vbcast.lane.b32.xlu0 %v2820, %s2845
        %v2847 = vpop.permute.xlu0 %2846
        %s2849 = sor.u32 256, 56
        %2850 = vbcast.lane.b32.xlu0 %v2820, %s2849
        %v2851 = vpop.permute.xlu0 %2850
        %s2853 = sor.u32 256, 64
        %2854 = vbcast.lane.b32.xlu0 %v2820, %s2853
        %v2855 = vpop.permute.xlu0 %2854
        %s2857 = sor.u32 256, 72
        %2858 = vbcast.lane.b32.xlu0 %v2820, %s2857
        %v2859 = vpop.permute.xlu0 %2858
        %s2861 = sor.u32 256, 80
        %2862 = vbcast.lane.b32.xlu0 %v2820, %s2861
        %v2863 = vpop.permute.xlu0 %2862
        %s2865 = sor.u32 256, 88
        %2866 = vbcast.lane.b32.xlu0 %v2820, %s2865
        %v2867 = vpop.permute.xlu0 %2866
        %s2869 = sor.u32 256, 96
        %2870 = vbcast.lane.b32.xlu0 %v2820, %s2869
        %v2871 = vpop.permute.xlu0 %2870
        %s2873 = sor.u32 256, 104
        %2874 = vbcast.lane.b32.xlu0 %v2820, %s2873
        %v2875 = vpop.permute.xlu0 %2874
        %s2877 = sor.u32 256, 112
        %2878 = vbcast.lane.b32.xlu0 %v2820, %s2877
        %v2879 = vpop.permute.xlu0 %2878
        %s2881 = sor.u32 256, 120
        %2882 = vbcast.lane.b32.xlu0 %v2820, %s2881
        %v2883 = vpop.permute.xlu0 %2882
        %v2884 = vlaneseq
        %v2885 = vshrl.u32 %v2884, 7
        %v2886 = vsub.s32 6, %v2885
        %v2887 = vrot.slane %v2431, %v2886
        %2889 = vbcast.lane.b32.xlu0 %v2887, 256
        %v2890 = vpop.permute.xlu0 %2889
        %s2892 = sor.u32 256, 8
        %2893 = vbcast.lane.b32.xlu0 %v2887, %s2892
        %v2894 = vpop.permute.xlu0 %2893
        %s2896 = sor.u32 256, 16
        %2897 = vbcast.lane.b32.xlu0 %v2887, %s2896
        %v2898 = vpop.permute.xlu0 %2897
        %s2900 = sor.u32 256, 24
        %2901 = vbcast.lane.b32.xlu0 %v2887, %s2900
        %v2902 = vpop.permute.xlu0 %2901
        %s2904 = sor.u32 256, 32
        %2905 = vbcast.lane.b32.xlu0 %v2887, %s2904
        %v2906 = vpop.permute.xlu0 %2905
        %s2908 = sor.u32 256, 40
        %2909 = vbcast.lane.b32.xlu0 %v2887, %s2908
        %v2910 = vpop.permute.xlu0 %2909
        %s2912 = sor.u32 256, 48
        %2913 = vbcast.lane.b32.xlu0 %v2887, %s2912
        %v2914 = vpop.permute.xlu0 %2913
        %s2916 = sor.u32 256, 56
        %2917 = vbcast.lane.b32.xlu0 %v2887, %s2916
        %v2918 = vpop.permute.xlu0 %2917
        %s2920 = sor.u32 256, 64
        %2921 = vbcast.lane.b32.xlu0 %v2887, %s2920
        %v2922 = vpop.permute.xlu0 %2921
        %s2924 = sor.u32 256, 72
        %2925 = vbcast.lane.b32.xlu0 %v2887, %s2924
        %v2926 = vpop.permute.xlu0 %2925
        %s2928 = sor.u32 256, 80
        %2929 = vbcast.lane.b32.xlu0 %v2887, %s2928
        %v2930 = vpop.permute.xlu0 %2929
        %s2932 = sor.u32 256, 88
        %2933 = vbcast.lane.b32.xlu0 %v2887, %s2932
        %v2934 = vpop.permute.xlu0 %2933
        %s2936 = sor.u32 256, 96
        %2937 = vbcast.lane.b32.xlu0 %v2887, %s2936
        %v2938 = vpop.permute.xlu0 %2937
        %s2940 = sor.u32 256, 104
        %2941 = vbcast.lane.b32.xlu0 %v2887, %s2940
        %v2942 = vpop.permute.xlu0 %2941
        %s2944 = sor.u32 256, 112
        %2945 = vbcast.lane.b32.xlu0 %v2887, %s2944
        %v2946 = vpop.permute.xlu0 %2945
        %s2948 = sor.u32 256, 120
        %2949 = vbcast.lane.b32.xlu0 %v2887, %s2948
        %v2950 = vpop.permute.xlu0 %2949
        %v2951 = vlaneseq
        %v2952 = vshrl.u32 %v2951, 7
        %v2953 = vsub.s32 7, %v2952
        %v2954 = vrot.slane %v2431, %v2953
        %2956 = vbcast.lane.b32.xlu0 %v2954, 256
        %v2957 = vpop.permute.xlu0 %2956
        %s2959 = sor.u32 256, 8
        %2960 = vbcast.lane.b32.xlu0 %v2954, %s2959
        %v2961 = vpop.permute.xlu0 %2960
        %s2963 = sor.u32 256, 16
        %2964 = vbcast.lane.b32.xlu0 %v2954, %s2963
        %v2965 = vpop.permute.xlu0 %2964
        %s2967 = sor.u32 256, 24
        %2968 = vbcast.lane.b32.xlu0 %v2954, %s2967
        %v2969 = vpop.permute.xlu0 %2968
        %s2971 = sor.u32 256, 32
        %2972 = vbcast.lane.b32.xlu0 %v2954, %s2971
        %v2973 = vpop.permute.xlu0 %2972
        %s2975 = sor.u32 256, 40
        %2976 = vbcast.lane.b32.xlu0 %v2954, %s2975
        %v2977 = vpop.permute.xlu0 %2976
        %s2979 = sor.u32 256, 48
        %2980 = vbcast.lane.b32.xlu0 %v2954, %s2979
        %v2981 = vpop.permute.xlu0 %2980
        %s2983 = sor.u32 256, 56
        %2984 = vbcast.lane.b32.xlu0 %v2954, %s2983
        %v2985 = vpop.permute.xlu0 %2984
        %s2987 = sor.u32 256, 64
        %2988 = vbcast.lane.b32.xlu0 %v2954, %s2987
        %v2989 = vpop.permute.xlu0 %2988
        %s2991 = sor.u32 256, 72
        %2992 = vbcast.lane.b32.xlu0 %v2954, %s2991
        %v2993 = vpop.permute.xlu0 %2992
        %s2995 = sor.u32 256, 80
        %2996 = vbcast.lane.b32.xlu0 %v2954, %s2995
        %v2997 = vpop.permute.xlu0 %2996
        %s2999 = sor.u32 256, 88
        %3000 = vbcast.lane.b32.xlu0 %v2954, %s2999
        %v3001 = vpop.permute.xlu0 %3000
        %s3003 = sor.u32 256, 96
        %3004 = vbcast.lane.b32.xlu0 %v2954, %s3003
        %v3005 = vpop.permute.xlu0 %3004
        %s3007 = sor.u32 256, 104
        %3008 = vbcast.lane.b32.xlu0 %v2954, %s3007
        %v3009 = vpop.permute.xlu0 %3008
        %s3011 = sor.u32 256, 112
        %3012 = vbcast.lane.b32.xlu0 %v2954, %s3011
        %v3013 = vpop.permute.xlu0 %3012
        %s3015 = sor.u32 256, 120
        %3016 = vbcast.lane.b32.xlu0 %v2954, %s3015
        %v3017 = vpop.permute.xlu0 %3016
        %v3018 = vlaneseq
        %v3019 = vshrl.u32 %v3018, 7
        %v3020 = vsub.s32 0, %v3019
        %v3021 = vrot.slane %v2456, %v3020
        %v3022 = vlaneseq
        %v3023 = vshrl.u32 %v3022, 7
        %v3024 = vsub.s32 0, %v3023
        %v3025 = vrot.slane %v2470, %v3024
        %v3026 = vlaneseq
        %v3027 = vshrl.u32 %v3026, 7
        %v3028 = vsub.s32 0, %v3027
        %v3029 = vrot.slane %v2478, %v3028
        %v3030 = vlaneseq
        %v3031 = vshrl.u32 %v3030, 7
        %v3032 = vsub.s32 0, %v3031
        %v3033 = vrot.slane %v2480, %v3032
        %v3034 = vlaneseq
        %v3035 = vshrl.u32 %v3034, 7
        %v3036 = vsub.s32 0, %v3035
        %v3037 = vrot.slane %v2463, %v3036
        %v3038 = vlaneseq
        %v3039 = vshrl.u32 %v3038, 7
        %v3040 = vsub.s32 0, %v3039
        %v3041 = vrot.slane %v2477, %v3040
        %v3042 = vlaneseq
        %v3043 = vshrl.u32 %v3042, 7
        %v3044 = vsub.s32 0, %v3043
        %v3045 = vrot.slane %v2479, %v3044
        %v3046 = vlaneseq
        %v3047 = vshrl.u32 %v3046, 7
        %v3048 = vsub.s32 0, %v3047
        %v3049 = vrot.slane %v2481, %v3048
        %v3058 = vadd.f32 %v3021, %v2488
        %v3059 = vadd.f32 %v3021, %v2492
        %v3060 = vadd.f32 %v3021, %v2496
        %v3061 = vadd.f32 %v3021, %v2500
        %v3062 = vadd.f32 %v3021, %v2504
        %v3063 = vadd.f32 %v3021, %v2508
        %v3064 = vadd.f32 %v3021, %v2512
        %v3065 = vadd.f32 %v3021, %v2516
        %v3066 = vadd.f32 %v3021, %v2520
        %v3067 = vadd.f32 %v3021, %v2524
        %v3068 = vadd.f32 %v3021, %v2528
        %v3069 = vadd.f32 %v3021, %v2532
        %v3070 = vadd.f32 %v3021, %v2536
        %v3071 = vadd.f32 %v3021, %v2540
        %v3072 = vadd.f32 %v3021, %v2544
        %v3073 = vadd.f32 %v3021, %v2548
        %v3074 = vadd.f32 %v3025, %v2555
        %v3075 = vadd.f32 %v3025, %v2559
        %v3076 = vadd.f32 %v3025, %v2563
        %v3077 = vadd.f32 %v3025, %v2567
        %v3078 = vadd.f32 %v3025, %v2571
        %v3079 = vadd.f32 %v3025, %v2575
        %v3080 = vadd.f32 %v3025, %v2579
        %v3081 = vadd.f32 %v3025, %v2583
        %v3082 = vadd.f32 %v3025, %v2587
        %v3083 = vadd.f32 %v3025, %v2591
        %v3084 = vadd.f32 %v3025, %v2595
        %v3085 = vadd.f32 %v3025, %v2599
        %v3086 = vadd.f32 %v3025, %v2603
        %v3087 = vadd.f32 %v3025, %v2607
        %v3088 = vadd.f32 %v3025, %v2611
        %v3089 = vadd.f32 %v3025, %v2615
        %v3090 = vadd.f32 %v3029, %v2622
        %v3091 = vadd.f32 %v3029, %v2626
        %v3092 = vadd.f32 %v3029, %v2630
        %v3093 = vadd.f32 %v3029, %v2634
        %v3094 = vadd.f32 %v3029, %v2638
        %v3095 = vadd.f32 %v3029, %v2642
        %v3096 = vadd.f32 %v3029, %v2646
        %v3097 = vadd.f32 %v3029, %v2650
        %v3098 = vadd.f32 %v3029, %v2654
        %v3099 = vadd.f32 %v3029, %v2658
        %v3100 = vadd.f32 %v3029, %v2662
        %v3101 = vadd.f32 %v3029, %v2666
        %v3102 = vadd.f32 %v3029, %v2670
        %v3103 = vadd.f32 %v3029, %v2674
        %v3104 = vadd.f32 %v3029, %v2678
        %v3105 = vadd.f32 %v3029, %v2682
        %v3106 = vadd.f32 %v3033, %v2689
        %v3107 = vadd.f32 %v3033, %v2693
        %v3108 = vadd.f32 %v3033, %v2697
        %v3109 = vadd.f32 %v3033, %v2701
        %v3110 = vadd.f32 %v3033, %v2705
        %v3111 = vadd.f32 %v3033, %v2709
        %v3112 = vadd.f32 %v3033, %v2713
        %v3113 = vadd.f32 %v3033, %v2717
        %v3114 = vadd.f32 %v3033, %v2721
        %v3115 = vadd.f32 %v3033, %v2725
        %v3116 = vadd.f32 %v3033, %v2729
        %v3117 = vadd.f32 %v3033, %v2733
        %v3118 = vadd.f32 %v3033, %v2737
        %v3119 = vadd.f32 %v3033, %v2741
        %v3120 = vadd.f32 %v3033, %v2745
        %v3121 = vadd.f32 %v3033, %v2749
        %v3122 = vadd.f32 %v3037, %v2756
        %v3123 = vadd.f32 %v3037, %v2760
        %v3124 = vadd.f32 %v3037, %v2764
        %v3125 = vadd.f32 %v3037, %v2768
        %v3126 = vadd.f32 %v3037, %v2772
        %v3127 = vadd.f32 %v3037, %v2776
        %v3128 = vadd.f32 %v3037, %v2780
        %v3129 = vadd.f32 %v3037, %v2784
        %v3130 = vadd.f32 %v3037, %v2788
        %v3131 = vadd.f32 %v3037, %v2792
        %v3132 = vadd.f32 %v3037, %v2796
        %v3133 = vadd.f32 %v3037, %v2800
        %v3134 = vadd.f32 %v3037, %v2804
        %v3135 = vadd.f32 %v3037, %v2808
        %v3136 = vadd.f32 %v3037, %v2812
        %v3137 = vadd.f32 %v3037, %v2816
        %v3138 = vadd.f32 %v3041, %v2823
        %v3139 = vadd.f32 %v3041, %v2827
        %v3140 = vadd.f32 %v3041, %v2831
        %v3141 = vadd.f32 %v3041, %v2835
        %v3142 = vadd.f32 %v3041, %v2839
        %v3143 = vadd.f32 %v3041, %v2843
        %v3144 = vadd.f32 %v3041, %v2847
        %v3145 = vadd.f32 %v3041, %v2851
        %v3146 = vadd.f32 %v3041, %v2855
        %v3147 = vadd.f32 %v3041, %v2859
        %v3148 = vadd.f32 %v3041, %v2863
        %v3149 = vadd.f32 %v3041, %v2867
        %v3150 = vadd.f32 %v3041, %v2871
        %v3151 = vadd.f32 %v3041, %v2875
        %v3152 = vadd.f32 %v3041, %v2879
        %v3153 = vadd.f32 %v3041, %v2883
        %v3154 = vadd.f32 %v3045, %v2890
        %v3155 = vadd.f32 %v3045, %v2894
        %v3156 = vadd.f32 %v3045, %v2898
        %v3157 = vadd.f32 %v3045, %v2902
        %v3158 = vadd.f32 %v3045, %v2906
        %v3159 = vadd.f32 %v3045, %v2910
        %v3160 = vadd.f32 %v3045, %v2914
        %v3161 = vadd.f32 %v3045, %v2918
        %v3162 = vadd.f32 %v3045, %v2922
        %v3163 = vadd.f32 %v3045, %v2926
        %v3164 = vadd.f32 %v3045, %v2930
        %v3165 = vadd.f32 %v3045, %v2934
        %v3166 = vadd.f32 %v3045, %v2938
        %v3167 = vadd.f32 %v3045, %v2942
        %v3168 = vadd.f32 %v3045, %v2946
        %v3169 = vadd.f32 %v3045, %v2950
        %v3170 = vadd.f32 %v3049, %v2957
        %v3171 = vadd.f32 %v3049, %v2961
        %v3172 = vadd.f32 %v3049, %v2965
        %v3173 = vadd.f32 %v3049, %v2969
        %v3174 = vadd.f32 %v3049, %v2973
        %v3175 = vadd.f32 %v3049, %v2977
        %v3176 = vadd.f32 %v3049, %v2981
        %v3177 = vadd.f32 %v3049, %v2985
        %v3178 = vadd.f32 %v3049, %v2989
        %v3179 = vadd.f32 %v3049, %v2993
        %v3180 = vadd.f32 %v3049, %v2997
        %v3181 = vadd.f32 %v3049, %v3001
        %v3182 = vadd.f32 %v3049, %v3005
        %v3183 = vadd.f32 %v3049, %v3009
        %v3184 = vadd.f32 %v3049, %v3013
        %v3185 = vadd.f32 %v3049, %v3017
        %v3186 = vmul.f32 %v2325, 2.0
        %v3187 = vmul.f32 %v2331, 2.0
        %v3188 = vmul.f32 %v2337, 2.0
        %v3189 = vmul.f32 %v2343, 2.0
        %v3190 = vmul.f32 %v2349, 2.0
        %v3191 = vmul.f32 %v2355, 2.0
        %v3192 = vmul.f32 %v2361, 2.0
        %v3193 = vmul.f32 %v2367, 2.0
        %v3194 = vmul.f32 %v2373, 2.0
        %v3195 = vmul.f32 %v2379, 2.0
        %v3196 = vmul.f32 %v2385, 2.0
        %v3197 = vmul.f32 %v2391, 2.0
        %v3198 = vmul.f32 %v2397, 2.0
        %v3199 = vmul.f32 %v2403, 2.0
        %v3200 = vmul.f32 %v2409, 2.0
        %v3201 = vmul.f32 %v2415, 2.0
        %v3202 = vsub.f32 %v3058, %v3186
        %v3203 = vsub.f32 %v3059, %v3187
        %v3204 = vsub.f32 %v3060, %v3188
        %v3205 = vsub.f32 %v3061, %v3189
        %v3206 = vsub.f32 %v3062, %v3190
        %v3207 = vsub.f32 %v3063, %v3191
        %v3208 = vsub.f32 %v3064, %v3192
        %v3209 = vsub.f32 %v3065, %v3193
        %v3210 = vsub.f32 %v3066, %v3194
        %v3211 = vsub.f32 %v3067, %v3195
        %v3212 = vsub.f32 %v3068, %v3196
        %v3213 = vsub.f32 %v3069, %v3197
        %v3214 = vsub.f32 %v3070, %v3198
        %v3215 = vsub.f32 %v3071, %v3199
        %v3216 = vsub.f32 %v3072, %v3200
        %v3217 = vsub.f32 %v3073, %v3201
        %v3218 = vsub.f32 %v3074, %v3186
        %v3219 = vsub.f32 %v3075, %v3187
        %v3220 = vsub.f32 %v3076, %v3188
        %v3221 = vsub.f32 %v3077, %v3189
        %v3222 = vsub.f32 %v3078, %v3190
        %v3223 = vsub.f32 %v3079, %v3191
        %v3224 = vsub.f32 %v3080, %v3192
        %v3225 = vsub.f32 %v3081, %v3193
        %v3226 = vsub.f32 %v3082, %v3194
        %v3227 = vsub.f32 %v3083, %v3195
        %v3228 = vsub.f32 %v3084, %v3196
        %v3229 = vsub.f32 %v3085, %v3197
        %v3230 = vsub.f32 %v3086, %v3198
        %v3231 = vsub.f32 %v3087, %v3199
        %v3232 = vsub.f32 %v3088, %v3200
        %v3233 = vsub.f32 %v3089, %v3201
        %v3234 = vsub.f32 %v3090, %v3186
        %v3235 = vsub.f32 %v3091, %v3187
        %v3236 = vsub.f32 %v3092, %v3188
        %v3237 = vsub.f32 %v3093, %v3189
        %v3238 = vsub.f32 %v3094, %v3190
        %v3239 = vsub.f32 %v3095, %v3191
        %v3240 = vsub.f32 %v3096, %v3192
        %v3241 = vsub.f32 %v3097, %v3193
        %v3242 = vsub.f32 %v3098, %v3194
        %v3243 = vsub.f32 %v3099, %v3195
        %v3244 = vsub.f32 %v3100, %v3196
        %v3245 = vsub.f32 %v3101, %v3197
        %v3246 = vsub.f32 %v3102, %v3198
        %v3247 = vsub.f32 %v3103, %v3199
        %v3248 = vsub.f32 %v3104, %v3200
        %v3249 = vsub.f32 %v3105, %v3201
        %v3250 = vsub.f32 %v3106, %v3186
        %v3251 = vsub.f32 %v3107, %v3187
        %v3252 = vsub.f32 %v3108, %v3188
        %v3253 = vsub.f32 %v3109, %v3189
        %v3254 = vsub.f32 %v3110, %v3190
        %v3255 = vsub.f32 %v3111, %v3191
        %v3256 = vsub.f32 %v3112, %v3192
        %v3257 = vsub.f32 %v3113, %v3193
        %v3258 = vsub.f32 %v3114, %v3194
        %v3259 = vsub.f32 %v3115, %v3195
        %v3260 = vsub.f32 %v3116, %v3196
        %v3261 = vsub.f32 %v3117, %v3197
        %v3262 = vsub.f32 %v3118, %v3198
        %v3263 = vsub.f32 %v3119, %v3199
        %v3264 = vsub.f32 %v3120, %v3200
        %v3265 = vsub.f32 %v3121, %v3201
        %v3266 = vsub.f32 %v3122, %v3186
        %v3267 = vsub.f32 %v3123, %v3187
        %v3268 = vsub.f32 %v3124, %v3188
        %v3269 = vsub.f32 %v3125, %v3189
        %v3270 = vsub.f32 %v3126, %v3190
        %v3271 = vsub.f32 %v3127, %v3191
        %v3272 = vsub.f32 %v3128, %v3192
        %v3273 = vsub.f32 %v3129, %v3193
        %v3274 = vsub.f32 %v3130, %v3194
        %v3275 = vsub.f32 %v3131, %v3195
        %v3276 = vsub.f32 %v3132, %v3196
        %v3277 = vsub.f32 %v3133, %v3197
        %v3278 = vsub.f32 %v3134, %v3198
        %v3279 = vsub.f32 %v3135, %v3199
        %v3280 = vsub.f32 %v3136, %v3200
        %v3281 = vsub.f32 %v3137, %v3201
        %v3282 = vsub.f32 %v3138, %v3186
        %v3283 = vsub.f32 %v3139, %v3187
        %v3284 = vsub.f32 %v3140, %v3188
        %v3285 = vsub.f32 %v3141, %v3189
        %v3286 = vsub.f32 %v3142, %v3190
        %v3287 = vsub.f32 %v3143, %v3191
        %v3288 = vsub.f32 %v3144, %v3192
        %v3289 = vsub.f32 %v3145, %v3193
        %v3290 = vsub.f32 %v3146, %v3194
        %v3291 = vsub.f32 %v3147, %v3195
        %v3292 = vsub.f32 %v3148, %v3196
        %v3293 = vsub.f32 %v3149, %v3197
        %v3294 = vsub.f32 %v3150, %v3198
        %v3295 = vsub.f32 %v3151, %v3199
        %v3296 = vsub.f32 %v3152, %v3200
        %v3297 = vsub.f32 %v3153, %v3201
        %v3298 = vsub.f32 %v3154, %v3186
        %v3299 = vsub.f32 %v3155, %v3187
        %v3300 = vsub.f32 %v3156, %v3188
        %v3301 = vsub.f32 %v3157, %v3189
        %v3302 = vsub.f32 %v3158, %v3190
        %v3303 = vsub.f32 %v3159, %v3191
        %v3304 = vsub.f32 %v3160, %v3192
        %v3305 = vsub.f32 %v3161, %v3193
        %v3306 = vsub.f32 %v3162, %v3194
        %v3307 = vsub.f32 %v3163, %v3195
        %v3308 = vsub.f32 %v3164, %v3196
        %v3309 = vsub.f32 %v3165, %v3197
        %v3310 = vsub.f32 %v3166, %v3198
        %v3311 = vsub.f32 %v3167, %v3199
        %v3312 = vsub.f32 %v3168, %v3200
        %v3313 = vsub.f32 %v3169, %v3201
        %v3314 = vsub.f32 %v3170, %v3186
        %v3315 = vsub.f32 %v3171, %v3187
        %v3316 = vsub.f32 %v3172, %v3188
        %v3317 = vsub.f32 %v3173, %v3189
        %v3318 = vsub.f32 %v3174, %v3190
        %v3319 = vsub.f32 %v3175, %v3191
        %v3320 = vsub.f32 %v3176, %v3192
        %v3321 = vsub.f32 %v3177, %v3193
        %v3322 = vsub.f32 %v3178, %v3194
        %v3323 = vsub.f32 %v3179, %v3195
        %v3324 = vsub.f32 %v3180, %v3196
        %v3325 = vsub.f32 %v3181, %v3197
        %v3326 = vsub.f32 %v3182, %v3198
        %v3327 = vsub.f32 %v3183, %v3199
        %v3328 = vsub.f32 %v3184, %v3200
        %v3329 = vsub.f32 %v3185, %v3201
        %v3330 = vmul.f32 %v3202, -5.0
        %v3331 = vmul.f32 %v3203, -5.0
        %v3332 = vmul.f32 %v3204, -5.0
        %v3333 = vmul.f32 %v3205, -5.0
        %v3334 = vmul.f32 %v3206, -5.0
        %v3335 = vmul.f32 %v3207, -5.0
        %v3336 = vmul.f32 %v3208, -5.0
        %v3337 = vmul.f32 %v3209, -5.0
        %v3338 = vmul.f32 %v3210, -5.0
        %v3339 = vmul.f32 %v3211, -5.0
        %v3340 = vmul.f32 %v3212, -5.0
        %v3341 = vmul.f32 %v3213, -5.0
        %v3342 = vmul.f32 %v3214, -5.0
        %v3343 = vmul.f32 %v3215, -5.0
        %v3344 = vmul.f32 %v3216, -5.0
        %v3345 = vmul.f32 %v3217, -5.0
        %v3346 = vmul.f32 %v3218, -5.0
        %v3347 = vmul.f32 %v3219, -5.0
        %v3348 = vmul.f32 %v3220, -5.0
        %v3349 = vmul.f32 %v3221, -5.0
        %v3350 = vmul.f32 %v3222, -5.0
        %v3351 = vmul.f32 %v3223, -5.0
        %v3352 = vmul.f32 %v3224, -5.0
        %v3353 = vmul.f32 %v3225, -5.0
        %v3354 = vmul.f32 %v3226, -5.0
        %v3355 = vmul.f32 %v3227, -5.0
        %v3356 = vmul.f32 %v3228, -5.0
        %v3357 = vmul.f32 %v3229, -5.0
        %v3358 = vmul.f32 %v3230, -5.0
        %v3359 = vmul.f32 %v3231, -5.0
        %v3360 = vmul.f32 %v3232, -5.0
        %v3361 = vmul.f32 %v3233, -5.0
        %v3362 = vmul.f32 %v3234, -5.0
        %v3363 = vmul.f32 %v3235, -5.0
        %v3364 = vmul.f32 %v3236, -5.0
        %v3365 = vmul.f32 %v3237, -5.0
        %v3366 = vmul.f32 %v3238, -5.0
        %v3367 = vmul.f32 %v3239, -5.0
        %v3368 = vmul.f32 %v3240, -5.0
        %v3369 = vmul.f32 %v3241, -5.0
        %v3370 = vmul.f32 %v3242, -5.0
        %v3371 = vmul.f32 %v3243, -5.0
        %v3372 = vmul.f32 %v3244, -5.0
        %v3373 = vmul.f32 %v3245, -5.0
        %v3374 = vmul.f32 %v3246, -5.0
        %v3375 = vmul.f32 %v3247, -5.0
        %v3376 = vmul.f32 %v3248, -5.0
        %v3377 = vmul.f32 %v3249, -5.0
        %v3378 = vmul.f32 %v3250, -5.0
        %v3379 = vmul.f32 %v3251, -5.0
        %v3380 = vmul.f32 %v3252, -5.0
        %v3381 = vmul.f32 %v3253, -5.0
        %v3382 = vmul.f32 %v3254, -5.0
        %v3383 = vmul.f32 %v3255, -5.0
        %v3384 = vmul.f32 %v3256, -5.0
        %v3385 = vmul.f32 %v3257, -5.0
        %v3386 = vmul.f32 %v3258, -5.0
        %v3387 = vmul.f32 %v3259, -5.0
        %v3388 = vmul.f32 %v3260, -5.0
        %v3389 = vmul.f32 %v3261, -5.0
        %v3390 = vmul.f32 %v3262, -5.0
        %v3391 = vmul.f32 %v3263, -5.0
        %v3392 = vmul.f32 %v3264, -5.0
        %v3393 = vmul.f32 %v3265, -5.0
        %v3394 = vmul.f32 %v3266, -5.0
        %v3395 = vmul.f32 %v3267, -5.0
        %v3396 = vmul.f32 %v3268, -5.0
        %v3397 = vmul.f32 %v3269, -5.0
        %v3398 = vmul.f32 %v3270, -5.0
        %v3399 = vmul.f32 %v3271, -5.0
        %v3400 = vmul.f32 %v3272, -5.0
        %v3401 = vmul.f32 %v3273, -5.0
        %v3402 = vmul.f32 %v3274, -5.0
        %v3403 = vmul.f32 %v3275, -5.0
        %v3404 = vmul.f32 %v3276, -5.0
        %v3405 = vmul.f32 %v3277, -5.0
        %v3406 = vmul.f32 %v3278, -5.0
        %v3407 = vmul.f32 %v3279, -5.0
        %v3408 = vmul.f32 %v3280, -5.0
        %v3409 = vmul.f32 %v3281, -5.0
        %v3410 = vmul.f32 %v3282, -5.0
        %v3411 = vmul.f32 %v3283, -5.0
        %v3412 = vmul.f32 %v3284, -5.0
        %v3413 = vmul.f32 %v3285, -5.0
        %v3414 = vmul.f32 %v3286, -5.0
        %v3415 = vmul.f32 %v3287, -5.0
        %v3416 = vmul.f32 %v3288, -5.0
        %v3417 = vmul.f32 %v3289, -5.0
        %v3418 = vmul.f32 %v3290, -5.0
        %v3419 = vmul.f32 %v3291, -5.0
        %v3420 = vmul.f32 %v3292, -5.0
        %v3421 = vmul.f32 %v3293, -5.0
        %v3422 = vmul.f32 %v3294, -5.0
        %v3423 = vmul.f32 %v3295, -5.0
        %v3424 = vmul.f32 %v3296, -5.0
        %v3425 = vmul.f32 %v3297, -5.0
        %v3426 = vmul.f32 %v3298, -5.0
        %v3427 = vmul.f32 %v3299, -5.0
        %v3428 = vmul.f32 %v3300, -5.0
        %v3429 = vmul.f32 %v3301, -5.0
        %v3430 = vmul.f32 %v3302, -5.0
        %v3431 = vmul.f32 %v3303, -5.0
        %v3432 = vmul.f32 %v3304, -5.0
        %v3433 = vmul.f32 %v3305, -5.0
        %v3434 = vmul.f32 %v3306, -5.0
        %v3435 = vmul.f32 %v3307, -5.0
        %v3436 = vmul.f32 %v3308, -5.0
        %v3437 = vmul.f32 %v3309, -5.0
        %v3438 = vmul.f32 %v3310, -5.0
        %v3439 = vmul.f32 %v3311, -5.0
        %v3440 = vmul.f32 %v3312, -5.0
        %v3441 = vmul.f32 %v3313, -5.0
        %v3442 = vmul.f32 %v3314, -5.0
        %v3443 = vmul.f32 %v3315, -5.0
        %v3444 = vmul.f32 %v3316, -5.0
        %v3445 = vmul.f32 %v3317, -5.0
        %v3446 = vmul.f32 %v3318, -5.0
        %v3447 = vmul.f32 %v3319, -5.0
        %v3448 = vmul.f32 %v3320, -5.0
        %v3449 = vmul.f32 %v3321, -5.0
        %v3450 = vmul.f32 %v3322, -5.0
        %v3451 = vmul.f32 %v3323, -5.0
        %v3452 = vmul.f32 %v3324, -5.0
        %v3453 = vmul.f32 %v3325, -5.0
        %v3454 = vmul.f32 %v3326, -5.0
        %v3455 = vmul.f32 %v3327, -5.0
        %v3456 = vmul.f32 %v3328, -5.0
        %v3457 = vmul.f32 %v3329, -5.0
        %v3458 = vmul.f32 %v3330, 1.442695
        %v3459 = vpow.pop %v3458
        %v3460 = vmul.f32 %v3331, 1.442695
        %v3461 = vpow.pop %v3460
        %v3462 = vmul.f32 %v3332, 1.442695
        %v3463 = vpow.pop %v3462
        %v3464 = vmul.f32 %v3333, 1.442695
        %v3465 = vpow.pop %v3464
        %v3466 = vmul.f32 %v3334, 1.442695
        %v3467 = vpow.pop %v3466
        %v3468 = vmul.f32 %v3335, 1.442695
        %v3469 = vpow.pop %v3468
        %v3470 = vmul.f32 %v3336, 1.442695
        %v3471 = vpow.pop %v3470
        %v3472 = vmul.f32 %v3337, 1.442695
        %v3473 = vpow.pop %v3472
        %v3474 = vmul.f32 %v3338, 1.442695
        %v3475 = vpow.pop %v3474
        %v3476 = vmul.f32 %v3339, 1.442695
        %v3477 = vpow.pop %v3476
        %v3478 = vmul.f32 %v3340, 1.442695
        %v3479 = vpow.pop %v3478
        %v3480 = vmul.f32 %v3341, 1.442695
        %v3481 = vpow.pop %v3480
        %v3482 = vmul.f32 %v3342, 1.442695
        %v3483 = vpow.pop %v3482
        %v3484 = vmul.f32 %v3343, 1.442695
        %v3485 = vpow.pop %v3484
        %v3486 = vmul.f32 %v3344, 1.442695
        %v3487 = vpow.pop %v3486
        %v3488 = vmul.f32 %v3345, 1.442695
        %v3489 = vpow.pop %v3488
        %v3490 = vmul.f32 %v3346, 1.442695
        %v3491 = vpow.pop %v3490
        %v3492 = vmul.f32 %v3347, 1.442695
        %v3493 = vpow.pop %v3492
        %v3494 = vmul.f32 %v3348, 1.442695
        %v3495 = vpow.pop %v3494
        %v3496 = vmul.f32 %v3349, 1.442695
        %v3497 = vpow.pop %v3496
        %v3498 = vmul.f32 %v3350, 1.442695
        %v3499 = vpow.pop %v3498
        %v3500 = vmul.f32 %v3351, 1.442695
        %v3501 = vpow.pop %v3500
        %v3502 = vmul.f32 %v3352, 1.442695
        %v3503 = vpow.pop %v3502
        %v3504 = vmul.f32 %v3353, 1.442695
        %v3505 = vpow.pop %v3504
        %v3506 = vmul.f32 %v3354, 1.442695
        %v3507 = vpow.pop %v3506
        %v3508 = vmul.f32 %v3355, 1.442695
        %v3509 = vpow.pop %v3508
        %v3510 = vmul.f32 %v3356, 1.442695
        %v3511 = vpow.pop %v3510
        %v3512 = vmul.f32 %v3357, 1.442695
        %v3513 = vpow.pop %v3512
        %v3514 = vmul.f32 %v3358, 1.442695
        %v3515 = vpow.pop %v3514
        %v3516 = vmul.f32 %v3359, 1.442695
        %v3517 = vpow.pop %v3516
        %v3518 = vmul.f32 %v3360, 1.442695
        %v3519 = vpow.pop %v3518
        %v3520 = vmul.f32 %v3361, 1.442695
        %v3521 = vpow.pop %v3520
        %v3522 = vmul.f32 %v3362, 1.442695
        %v3523 = vpow.pop %v3522
        %v3524 = vmul.f32 %v3363, 1.442695
        %v3525 = vpow.pop %v3524
        %v3526 = vmul.f32 %v3364, 1.442695
        %v3527 = vpow.pop %v3526
        %v3528 = vmul.f32 %v3365, 1.442695
        %v3529 = vpow.pop %v3528
        %v3530 = vmul.f32 %v3366, 1.442695
        %v3531 = vpow.pop %v3530
        %v3532 = vmul.f32 %v3367, 1.442695
        %v3533 = vpow.pop %v3532
        %v3534 = vmul.f32 %v3368, 1.442695
        %v3535 = vpow.pop %v3534
        %v3536 = vmul.f32 %v3369, 1.442695
        %v3537 = vpow.pop %v3536
        %v3538 = vmul.f32 %v3370, 1.442695
        %v3539 = vpow.pop %v3538
        %v3540 = vmul.f32 %v3371, 1.442695
        %v3541 = vpow.pop %v3540
        %v3542 = vmul.f32 %v3372, 1.442695
        %v3543 = vpow.pop %v3542
        %v3544 = vmul.f32 %v3373, 1.442695
        %v3545 = vpow.pop %v3544
        %v3546 = vmul.f32 %v3374, 1.442695
        %v3547 = vpow.pop %v3546
        %v3548 = vmul.f32 %v3375, 1.442695
        %v3549 = vpow.pop %v3548
        %v3550 = vmul.f32 %v3376, 1.442695
        %v3551 = vpow.pop %v3550
        %v3552 = vmul.f32 %v3377, 1.442695
        %v3553 = vpow.pop %v3552
        %v3554 = vmul.f32 %v3378, 1.442695
        %v3555 = vpow.pop %v3554
        %v3556 = vmul.f32 %v3379, 1.442695
        %v3557 = vpow.pop %v3556
        %v3558 = vmul.f32 %v3380, 1.442695
        %v3559 = vpow.pop %v3558
        %v3560 = vmul.f32 %v3381, 1.442695
        %v3561 = vpow.pop %v3560
        %v3562 = vmul.f32 %v3382, 1.442695
        %v3563 = vpow.pop %v3562
        %v3564 = vmul.f32 %v3383, 1.442695
        %v3565 = vpow.pop %v3564
        %v3566 = vmul.f32 %v3384, 1.442695
        %v3567 = vpow.pop %v3566
        %v3568 = vmul.f32 %v3385, 1.442695
        %v3569 = vpow.pop %v3568
        %v3570 = vmul.f32 %v3386, 1.442695
        %v3571 = vpow.pop %v3570
        %v3572 = vmul.f32 %v3387, 1.442695
        %v3573 = vpow.pop %v3572
        %v3574 = vmul.f32 %v3388, 1.442695
        %v3575 = vpow.pop %v3574
        %v3576 = vmul.f32 %v3389, 1.442695
        %v3577 = vpow.pop %v3576
        %v3578 = vmul.f32 %v3390, 1.442695
        %v3579 = vpow.pop %v3578
        %v3580 = vmul.f32 %v3391, 1.442695
        %v3581 = vpow.pop %v3580
        %v3582 = vmul.f32 %v3392, 1.442695
        %v3583 = vpow.pop %v3582
        %v3584 = vmul.f32 %v3393, 1.442695
        %v3585 = vpow.pop %v3584
        %v3586 = vmul.f32 %v3394, 1.442695
        %v3587 = vpow.pop %v3586
        %v3588 = vmul.f32 %v3395, 1.442695
        %v3589 = vpow.pop %v3588
        %v3590 = vmul.f32 %v3396, 1.442695
        %v3591 = vpow.pop %v3590
        %v3592 = vmul.f32 %v3397, 1.442695
        %v3593 = vpow.pop %v3592
        %v3594 = vmul.f32 %v3398, 1.442695
        %v3595 = vpow.pop %v3594
        %v3596 = vmul.f32 %v3399, 1.442695
        %v3597 = vpow.pop %v3596
        %v3598 = vmul.f32 %v3400, 1.442695
        %v3599 = vpow.pop %v3598
        %v3600 = vmul.f32 %v3401, 1.442695
        %v3601 = vpow.pop %v3600
        %v3602 = vmul.f32 %v3402, 1.442695
        %v3603 = vpow.pop %v3602
        %v3604 = vmul.f32 %v3403, 1.442695
        %v3605 = vpow.pop %v3604
        %v3606 = vmul.f32 %v3404, 1.442695
        %v3607 = vpow.pop %v3606
        %v3608 = vmul.f32 %v3405, 1.442695
        %v3609 = vpow.pop %v3608
        %v3610 = vmul.f32 %v3406, 1.442695
        %v3611 = vpow.pop %v3610
        %v3612 = vmul.f32 %v3407, 1.442695
        %v3613 = vpow.pop %v3612
        %v3614 = vmul.f32 %v3408, 1.442695
        %v3615 = vpow.pop %v3614
        %v3616 = vmul.f32 %v3409, 1.442695
        %v3617 = vpow.pop %v3616
        %v3618 = vmul.f32 %v3410, 1.442695
        %v3619 = vpow.pop %v3618
        %v3620 = vmul.f32 %v3411, 1.442695
        %v3621 = vpow.pop %v3620
        %v3622 = vmul.f32 %v3412, 1.442695
        %v3623 = vpow.pop %v3622
        %v3624 = vmul.f32 %v3413, 1.442695
        %v3625 = vpow.pop %v3624
        %v3626 = vmul.f32 %v3414, 1.442695
        %v3627 = vpow.pop %v3626
        %v3628 = vmul.f32 %v3415, 1.442695
        %v3629 = vpow.pop %v3628
        %v3630 = vmul.f32 %v3416, 1.442695
        %v3631 = vpow.pop %v3630
        %v3632 = vmul.f32 %v3417, 1.442695
        %v3633 = vpow.pop %v3632
        %v3634 = vmul.f32 %v3418, 1.442695
        %v3635 = vpow.pop %v3634
        %v3636 = vmul.f32 %v3419, 1.442695
        %v3637 = vpow.pop %v3636
        %v3638 = vmul.f32 %v3420, 1.442695
        %v3639 = vpow.pop %v3638
        %v3640 = vmul.f32 %v3421, 1.442695
        %v3641 = vpow.pop %v3640
        %v3642 = vmul.f32 %v3422, 1.442695
        %v3643 = vpow.pop %v3642
        %v3644 = vmul.f32 %v3423, 1.442695
        %v3645 = vpow.pop %v3644
        %v3646 = vmul.f32 %v3424, 1.442695
        %v3647 = vpow.pop %v3646
        %v3648 = vmul.f32 %v3425, 1.442695
        %v3649 = vpow.pop %v3648
        %v3650 = vmul.f32 %v3426, 1.442695
        %v3651 = vpow.pop %v3650
        %v3652 = vmul.f32 %v3427, 1.442695
        %v3653 = vpow.pop %v3652
        %v3654 = vmul.f32 %v3428, 1.442695
        %v3655 = vpow.pop %v3654
        %v3656 = vmul.f32 %v3429, 1.442695
        %v3657 = vpow.pop %v3656
        %v3658 = vmul.f32 %v3430, 1.442695
        %v3659 = vpow.pop %v3658
        %v3660 = vmul.f32 %v3431, 1.442695
        %v3661 = vpow.pop %v3660
        %v3662 = vmul.f32 %v3432, 1.442695
        %v3663 = vpow.pop %v3662
        %v3664 = vmul.f32 %v3433, 1.442695
        %v3665 = vpow.pop %v3664
        %v3666 = vmul.f32 %v3434, 1.442695
        %v3667 = vpow.pop %v3666
        %v3668 = vmul.f32 %v3435, 1.442695
        %v3669 = vpow.pop %v3668
        %v3670 = vmul.f32 %v3436, 1.442695
        %v3671 = vpow.pop %v3670
        %v3672 = vmul.f32 %v3437, 1.442695
        %v3673 = vpow.pop %v3672
        %v3674 = vmul.f32 %v3438, 1.442695
        %v3675 = vpow.pop %v3674
        %v3676 = vmul.f32 %v3439, 1.442695
        %v3677 = vpow.pop %v3676
        %v3678 = vmul.f32 %v3440, 1.442695
        %v3679 = vpow.pop %v3678
        %v3680 = vmul.f32 %v3441, 1.442695
        %v3681 = vpow.pop %v3680
        %v3682 = vmul.f32 %v3442, 1.442695
        %v3683 = vpow.pop %v3682
        %v3684 = vmul.f32 %v3443, 1.442695
        %v3685 = vpow.pop %v3684
        %v3686 = vmul.f32 %v3444, 1.442695
        %v3687 = vpow.pop %v3686
        %v3688 = vmul.f32 %v3445, 1.442695
        %v3689 = vpow.pop %v3688
        %v3690 = vmul.f32 %v3446, 1.442695
        %v3691 = vpow.pop %v3690
        %v3692 = vmul.f32 %v3447, 1.442695
        %v3693 = vpow.pop %v3692
        %v3694 = vmul.f32 %v3448, 1.442695
        %v3695 = vpow.pop %v3694
        %v3696 = vmul.f32 %v3449, 1.442695
        %v3697 = vpow.pop %v3696
        %v3698 = vmul.f32 %v3450, 1.442695
        %v3699 = vpow.pop %v3698
        %v3700 = vmul.f32 %v3451, 1.442695
        %v3701 = vpow.pop %v3700
        %v3702 = vmul.f32 %v3452, 1.442695
        %v3703 = vpow.pop %v3702
        %v3704 = vmul.f32 %v3453, 1.442695
        %v3705 = vpow.pop %v3704
        %v3706 = vmul.f32 %v3454, 1.442695
        %v3707 = vpow.pop %v3706
        %v3708 = vmul.f32 %v3455, 1.442695
        %v3709 = vpow.pop %v3708
        %v3710 = vmul.f32 %v3456, 1.442695
        %v3711 = vpow.pop %v3710
        %v3712 = vmul.f32 %v3457, 1.442695
        %v3713 = vpow.pop %v3712
        %v3715 = vcombine.high %v2423, %v2423
        %v3717 = vunpack.c.l.s4 1966171168
        %v3718 = vunpack.c.0.s8 %v3717
        %v3719 = vlaneseq
        %v3720 = vshrl.u32 %v3719, 7
        %v3721 = vsub.s32 %v3718, %v3720
        %v3722 = vrot.slane %v2423, %v3721
        %v3724 = vunpack.c.l.s4 1966171168
        %v3725 = vunpack.c.0.s8 %v3724
        %v3726 = vlaneseq
        %v3727 = vshrl.u32 %v3726, 7
        %v3728 = vsub.s32 %v3725, %v3727
        %v3729 = vrot.slane %v3715, %v3728
        %v3730 = vcombine.high %v3722, %v3722
        %v3731 = vcombine.high %v3729, %v3729
        %v3733 = vunpack.c.l.s4 1966171168
        %v3734 = vunpack.c.0.s8 %v3733
        %v3735 = vlaneseq
        %v3736 = vshrl.u32 %v3735, 7
        %v3737 = vsub.s32 %v3734, %v3736
        %v3738 = vrot.slane %v3722, %v3737
        %v3740 = vunpack.c.l.s4 1966171168
        %v3741 = vunpack.c.0.s8 %v3740
        %v3742 = vlaneseq
        %v3743 = vshrl.u32 %v3742, 7
        %v3744 = vsub.s32 %v3741, %v3743
        %v3745 = vrot.slane %v3729, %v3744
        %v3747 = vunpack.c.l.s4 1966171168
        %v3748 = vunpack.c.0.s8 %v3747
        %v3749 = vlaneseq
        %v3750 = vshrl.u32 %v3749, 7
        %v3751 = vsub.s32 %v3748, %v3750
        %v3752 = vrot.slane %v3730, %v3751
        %v3754 = vunpack.c.l.s4 1966171168
        %v3755 = vunpack.c.0.s8 %v3754
        %v3756 = vlaneseq
        %v3757 = vshrl.u32 %v3756, 7
        %v3758 = vsub.s32 %v3755, %v3757
        %v3759 = vrot.slane %v3731, %v3758
        %v3760 = vcombine.high %v3738, %v3738
        %v3761 = vcombine.high %v3745, %v3745
        %v3762 = vcombine.high %v3752, %v3752
        %v3763 = vcombine.high %v3759, %v3759
        %v3764 = vlaneseq
        %v3765 = vshrl.u32 %v3764, 7
        %v3766 = vsub.s32 0, %v3765
        %v3767 = vrot.slane %v3738, %v3766
        %v3768 = vlaneseq
        %v3769 = vshrl.u32 %v3768, 7
        %v3770 = vsub.s32 0, %v3769
        %v3771 = vrot.slane %v3752, %v3770
        %v3772 = vlaneseq
        %v3773 = vshrl.u32 %v3772, 7
        %v3774 = vsub.s32 0, %v3773
        %v3775 = vrot.slane %v3760, %v3774
        %v3776 = vlaneseq
        %v3777 = vshrl.u32 %v3776, 7
        %v3778 = vsub.s32 0, %v3777
        %v3779 = vrot.slane %v3762, %v3778
        %v3780 = vlaneseq
        %v3781 = vshrl.u32 %v3780, 7
        %v3782 = vsub.s32 0, %v3781
        %v3783 = vrot.slane %v3745, %v3782
        %v3784 = vlaneseq
        %v3785 = vshrl.u32 %v3784, 7
        %v3786 = vsub.s32 0, %v3785
        %v3787 = vrot.slane %v3759, %v3786
        %v3788 = vlaneseq
        %v3789 = vshrl.u32 %v3788, 7
        %v3790 = vsub.s32 0, %v3789
        %v3791 = vrot.slane %v3761, %v3790
        %v3792 = vlaneseq
        %v3793 = vshrl.u32 %v3792, 7
        %v3794 = vsub.s32 0, %v3793
        %v3795 = vrot.slane %v3763, %v3794
        %v3804 = vmul.f32 %v3459, %v3767
        %v3805 = vmul.f32 %v3461, %v3767
        %v3806 = vmul.f32 %v3463, %v3767
        %v3807 = vmul.f32 %v3465, %v3767
        %v3808 = vmul.f32 %v3467, %v3767
        %v3809 = vmul.f32 %v3469, %v3767
        %v3810 = vmul.f32 %v3471, %v3767
        %v3811 = vmul.f32 %v3473, %v3767
        %v3812 = vmul.f32 %v3475, %v3767
        %v3813 = vmul.f32 %v3477, %v3767
        %v3814 = vmul.f32 %v3479, %v3767
        %v3815 = vmul.f32 %v3481, %v3767
        %v3816 = vmul.f32 %v3483, %v3767
        %v3817 = vmul.f32 %v3485, %v3767
        %v3818 = vmul.f32 %v3487, %v3767
        %v3819 = vmul.f32 %v3489, %v3767
        %v3820 = vmul.f32 %v3491, %v3771
        %v3821 = vmul.f32 %v3493, %v3771
        %v3822 = vmul.f32 %v3495, %v3771
        %v3823 = vmul.f32 %v3497, %v3771
        %v3824 = vmul.f32 %v3499, %v3771
        %v3825 = vmul.f32 %v3501, %v3771
        %v3826 = vmul.f32 %v3503, %v3771
        %v3827 = vmul.f32 %v3505, %v3771
        %v3828 = vmul.f32 %v3507, %v3771
        %v3829 = vmul.f32 %v3509, %v3771
        %v3830 = vmul.f32 %v3511, %v3771
        %v3831 = vmul.f32 %v3513, %v3771
        %v3832 = vmul.f32 %v3515, %v3771
        %v3833 = vmul.f32 %v3517, %v3771
        %v3834 = vmul.f32 %v3519, %v3771
        %v3835 = vmul.f32 %v3521, %v3771
        %v3836 = vmul.f32 %v3523, %v3775
        %v3837 = vmul.f32 %v3525, %v3775
        %v3838 = vmul.f32 %v3527, %v3775
        %v3839 = vmul.f32 %v3529, %v3775
        %v3840 = vmul.f32 %v3531, %v3775
        %v3841 = vmul.f32 %v3533, %v3775
        %v3842 = vmul.f32 %v3535, %v3775
        %v3843 = vmul.f32 %v3537, %v3775
        %v3844 = vmul.f32 %v3539, %v3775
        %v3845 = vmul.f32 %v3541, %v3775
        %v3846 = vmul.f32 %v3543, %v3775
        %v3847 = vmul.f32 %v3545, %v3775
        %v3848 = vmul.f32 %v3547, %v3775
        %v3849 = vmul.f32 %v3549, %v3775
        %v3850 = vmul.f32 %v3551, %v3775
        %v3851 = vmul.f32 %v3553, %v3775
        %v3852 = vmul.f32 %v3555, %v3779
        %v3853 = vmul.f32 %v3557, %v3779
        %v3854 = vmul.f32 %v3559, %v3779
        %v3855 = vmul.f32 %v3561, %v3779
        %v3856 = vmul.f32 %v3563, %v3779
        %v3857 = vmul.f32 %v3565, %v3779
        %v3858 = vmul.f32 %v3567, %v3779
        %v3859 = vmul.f32 %v3569, %v3779
        %v3860 = vmul.f32 %v3571, %v3779
        %v3861 = vmul.f32 %v3573, %v3779
        %v3862 = vmul.f32 %v3575, %v3779
        %v3863 = vmul.f32 %v3577, %v3779
        %v3864 = vmul.f32 %v3579, %v3779
        %v3865 = vmul.f32 %v3581, %v3779
        %v3866 = vmul.f32 %v3583, %v3779
        %v3867 = vmul.f32 %v3585, %v3779
        %v3868 = vmul.f32 %v3587, %v3783
        %v3869 = vmul.f32 %v3589, %v3783
        %v3870 = vmul.f32 %v3591, %v3783
        %v3871 = vmul.f32 %v3593, %v3783
        %v3872 = vmul.f32 %v3595, %v3783
        %v3873 = vmul.f32 %v3597, %v3783
        %v3874 = vmul.f32 %v3599, %v3783
        %v3875 = vmul.f32 %v3601, %v3783
        %v3876 = vmul.f32 %v3603, %v3783
        %v3877 = vmul.f32 %v3605, %v3783
        %v3878 = vmul.f32 %v3607, %v3783
        %v3879 = vmul.f32 %v3609, %v3783
        %v3880 = vmul.f32 %v3611, %v3783
        %v3881 = vmul.f32 %v3613, %v3783
        %v3882 = vmul.f32 %v3615, %v3783
        %v3883 = vmul.f32 %v3617, %v3783
        %v3884 = vmul.f32 %v3619, %v3787
        %v3885 = vmul.f32 %v3621, %v3787
        %v3886 = vmul.f32 %v3623, %v3787
        %v3887 = vmul.f32 %v3625, %v3787
        %v3888 = vmul.f32 %v3627, %v3787
        %v3889 = vmul.f32 %v3629, %v3787
        %v3890 = vmul.f32 %v3631, %v3787
        %v3891 = vmul.f32 %v3633, %v3787
        %v3892 = vmul.f32 %v3635, %v3787
        %v3893 = vmul.f32 %v3637, %v3787
        %v3894 = vmul.f32 %v3639, %v3787
        %v3895 = vmul.f32 %v3641, %v3787
        %v3896 = vmul.f32 %v3643, %v3787
        %v3897 = vmul.f32 %v3645, %v3787
        %v3898 = vmul.f32 %v3647, %v3787
        %v3899 = vmul.f32 %v3649, %v3787
        %v3900 = vmul.f32 %v3651, %v3791
        %v3901 = vmul.f32 %v3653, %v3791
        %v3902 = vmul.f32 %v3655, %v3791
        %v3903 = vmul.f32 %v3657, %v3791
        %v3904 = vmul.f32 %v3659, %v3791
        %v3905 = vmul.f32 %v3661, %v3791
        %v3906 = vmul.f32 %v3663, %v3791
        %v3907 = vmul.f32 %v3665, %v3791
        %v3908 = vmul.f32 %v3667, %v3791
        %v3909 = vmul.f32 %v3669, %v3791
        %v3910 = vmul.f32 %v3671, %v3791
        %v3911 = vmul.f32 %v3673, %v3791
        %v3912 = vmul.f32 %v3675, %v3791
        %v3913 = vmul.f32 %v3677, %v3791
        %v3914 = vmul.f32 %v3679, %v3791
        %v3915 = vmul.f32 %v3681, %v3791
        %v3916 = vmul.f32 %v3683, %v3795
        %v3917 = vmul.f32 %v3685, %v3795
        %v3918 = vmul.f32 %v3687, %v3795
        %v3919 = vmul.f32 %v3689, %v3795
        %v3920 = vmul.f32 %v3691, %v3795
        %v3921 = vmul.f32 %v3693, %v3795
        %v3922 = vmul.f32 %v3695, %v3795
        %v3923 = vmul.f32 %v3697, %v3795
        %v3924 = vmul.f32 %v3699, %v3795
        %v3925 = vmul.f32 %v3701, %v3795
        %v3926 = vmul.f32 %v3703, %v3795
        %v3927 = vmul.f32 %v3705, %v3795
        %v3928 = vmul.f32 %v3707, %v3795
        %v3929 = vmul.f32 %v3709, %v3795
        %v3930 = vmul.f32 %v3711, %v3795
        %v3931 = vmul.f32 %v3713, %v3795
        %v3932 = vld [vmem:[#allocation2] sm:$0xff]
        %3933 = vadd.xlane.f32.xlu0 %v3804
        %v3934 = vpop.xlane.xlu0 %3933
        %3935 = vadd.xlane.f32.xlu0 %v3805
        %v3936 = vpop.xlane.xlu0 %3935
        %3937 = vadd.xlane.f32.xlu0 %v3806
        %v3938 = vpop.xlane.xlu0 %3937
        %3939 = vadd.xlane.f32.xlu0 %v3807
        %v3940 = vpop.xlane.xlu0 %3939
        %3941 = vadd.xlane.f32.xlu0 %v3808
        %v3942 = vpop.xlane.xlu0 %3941
        %3943 = vadd.xlane.f32.xlu0 %v3809
        %v3944 = vpop.xlane.xlu0 %3943
        %3945 = vadd.xlane.f32.xlu0 %v3810
        %v3946 = vpop.xlane.xlu0 %3945
        %3947 = vadd.xlane.f32.xlu0 %v3811
        %v3948 = vpop.xlane.xlu0 %3947
        %3949 = vadd.xlane.f32.xlu0 %v3812
        %v3950 = vpop.xlane.xlu0 %3949
        %3951 = vadd.xlane.f32.xlu0 %v3813
        %v3952 = vpop.xlane.xlu0 %3951
        %3953 = vadd.xlane.f32.xlu0 %v3814
        %v3954 = vpop.xlane.xlu0 %3953
        %3955 = vadd.xlane.f32.xlu0 %v3815
        %v3956 = vpop.xlane.xlu0 %3955
        %3957 = vadd.xlane.f32.xlu0 %v3816
        %v3958 = vpop.xlane.xlu0 %3957
        %3959 = vadd.xlane.f32.xlu0 %v3817
        %v3960 = vpop.xlane.xlu0 %3959
        %3961 = vadd.xlane.f32.xlu0 %v3818
        %v3962 = vpop.xlane.xlu0 %3961
        %3963 = vadd.xlane.f32.xlu0 %v3819
        %v3964 = vpop.xlane.xlu0 %3963
        %3965 = vadd.xlane.f32.xlu0 %v3820
        %v3966 = vpop.xlane.xlu0 %3965
        %3967 = vadd.xlane.f32.xlu0 %v3821
        %v3968 = vpop.xlane.xlu0 %3967
        %3969 = vadd.xlane.f32.xlu0 %v3822
        %v3970 = vpop.xlane.xlu0 %3969
        %3971 = vadd.xlane.f32.xlu0 %v3823
        %v3972 = vpop.xlane.xlu0 %3971
        %3973 = vadd.xlane.f32.xlu0 %v3824
        %v3974 = vpop.xlane.xlu0 %3973
        %3975 = vadd.xlane.f32.xlu0 %v3825
        %v3976 = vpop.xlane.xlu0 %3975
        %3977 = vadd.xlane.f32.xlu0 %v3826
        %v3978 = vpop.xlane.xlu0 %3977
        %3979 = vadd.xlane.f32.xlu0 %v3827
        %v3980 = vpop.xlane.xlu0 %3979
        %3981 = vadd.xlane.f32.xlu0 %v3828
        %v3982 = vpop.xlane.xlu0 %3981
        %3983 = vadd.xlane.f32.xlu0 %v3829
        %v3984 = vpop.xlane.xlu0 %3983
        %3985 = vadd.xlane.f32.xlu0 %v3830
        %v3986 = vpop.xlane.xlu0 %3985
        %3987 = vadd.xlane.f32.xlu0 %v3831
        %v3988 = vpop.xlane.xlu0 %3987
        %3989 = vadd.xlane.f32.xlu0 %v3832
        %v3990 = vpop.xlane.xlu0 %3989
        %3991 = vadd.xlane.f32.xlu0 %v3833
        %v3992 = vpop.xlane.xlu0 %3991
        %3993 = vadd.xlane.f32.xlu0 %v3834
        %v3994 = vpop.xlane.xlu0 %3993
        %3995 = vadd.xlane.f32.xlu0 %v3835
        %v3996 = vpop.xlane.xlu0 %3995
        %3997 = vadd.xlane.f32.xlu0 %v3836
        %v3998 = vpop.xlane.xlu0 %3997
        %3999 = vadd.xlane.f32.xlu0 %v3837
        %v4000 = vpop.xlane.xlu0 %3999
        %4001 = vadd.xlane.f32.xlu0 %v3838
        %v4002 = vpop.xlane.xlu0 %4001
        %4003 = vadd.xlane.f32.xlu0 %v3839
        %v4004 = vpop.xlane.xlu0 %4003
        %4005 = vadd.xlane.f32.xlu0 %v3840
        %v4006 = vpop.xlane.xlu0 %4005
        %4007 = vadd.xlane.f32.xlu0 %v3841
        %v4008 = vpop.xlane.xlu0 %4007
        %4009 = vadd.xlane.f32.xlu0 %v3842
        %v4010 = vpop.xlane.xlu0 %4009
        %4011 = vadd.xlane.f32.xlu0 %v3843
        %v4012 = vpop.xlane.xlu0 %4011
        %4013 = vadd.xlane.f32.xlu0 %v3844
        %v4014 = vpop.xlane.xlu0 %4013
        %4015 = vadd.xlane.f32.xlu0 %v3845
        %v4016 = vpop.xlane.xlu0 %4015
        %4017 = vadd.xlane.f32.xlu0 %v3846
        %v4018 = vpop.xlane.xlu0 %4017
        %4019 = vadd.xlane.f32.xlu0 %v3847
        %v4020 = vpop.xlane.xlu0 %4019
        %4021 = vadd.xlane.f32.xlu0 %v3848
        %v4022 = vpop.xlane.xlu0 %4021
        %4023 = vadd.xlane.f32.xlu0 %v3849
        %v4024 = vpop.xlane.xlu0 %4023
        %4025 = vadd.xlane.f32.xlu0 %v3850
        %v4026 = vpop.xlane.xlu0 %4025
        %4027 = vadd.xlane.f32.xlu0 %v3851
        %v4028 = vpop.xlane.xlu0 %4027
        %4029 = vadd.xlane.f32.xlu0 %v3852
        %v4030 = vpop.xlane.xlu0 %4029
        %4031 = vadd.xlane.f32.xlu0 %v3853
        %v4032 = vpop.xlane.xlu0 %4031
        %4033 = vadd.xlane.f32.xlu0 %v3854
        %v4034 = vpop.xlane.xlu0 %4033
        %4035 = vadd.xlane.f32.xlu0 %v3855
        %v4036 = vpop.xlane.xlu0 %4035
        %4037 = vadd.xlane.f32.xlu0 %v3856
        %v4038 = vpop.xlane.xlu0 %4037
        %4039 = vadd.xlane.f32.xlu0 %v3857
        %v4040 = vpop.xlane.xlu0 %4039
        %4041 = vadd.xlane.f32.xlu0 %v3858
        %v4042 = vpop.xlane.xlu0 %4041
        %4043 = vadd.xlane.f32.xlu0 %v3859
        %v4044 = vpop.xlane.xlu0 %4043
        %4045 = vadd.xlane.f32.xlu0 %v3860
        %v4046 = vpop.xlane.xlu0 %4045
        %4047 = vadd.xlane.f32.xlu0 %v3861
        %v4048 = vpop.xlane.xlu0 %4047
        %4049 = vadd.xlane.f32.xlu0 %v3862
        %v4050 = vpop.xlane.xlu0 %4049
        %4051 = vadd.xlane.f32.xlu0 %v3863
        %v4052 = vpop.xlane.xlu0 %4051
        %4053 = vadd.xlane.f32.xlu0 %v3864
        %v4054 = vpop.xlane.xlu0 %4053
        %4055 = vadd.xlane.f32.xlu0 %v3865
        %v4056 = vpop.xlane.xlu0 %4055
        %4057 = vadd.xlane.f32.xlu0 %v3866
        %v4058 = vpop.xlane.xlu0 %4057
        %4059 = vadd.xlane.f32.xlu0 %v3867
        %v4060 = vpop.xlane.xlu0 %4059
        %4061 = vadd.xlane.f32.xlu0 %v3868
        %v4062 = vpop.xlane.xlu0 %4061
        %4063 = vadd.xlane.f32.xlu0 %v3869
        %v4064 = vpop.xlane.xlu0 %4063
        %4065 = vadd.xlane.f32.xlu0 %v3870
        %v4066 = vpop.xlane.xlu0 %4065
        %4067 = vadd.xlane.f32.xlu0 %v3871
        %v4068 = vpop.xlane.xlu0 %4067
        %4069 = vadd.xlane.f32.xlu0 %v3872
        %v4070 = vpop.xlane.xlu0 %4069
        %4071 = vadd.xlane.f32.xlu0 %v3873
        %v4072 = vpop.xlane.xlu0 %4071
        %4073 = vadd.xlane.f32.xlu0 %v3874
        %v4074 = vpop.xlane.xlu0 %4073
        %4075 = vadd.xlane.f32.xlu0 %v3875
        %v4076 = vpop.xlane.xlu0 %4075
        %4077 = vadd.xlane.f32.xlu0 %v3876
        %v4078 = vpop.xlane.xlu0 %4077
        %4079 = vadd.xlane.f32.xlu0 %v3877
        %v4080 = vpop.xlane.xlu0 %4079
        %4081 = vadd.xlane.f32.xlu0 %v3878
        %v4082 = vpop.xlane.xlu0 %4081
        %4083 = vadd.xlane.f32.xlu0 %v3879
        %v4084 = vpop.xlane.xlu0 %4083
        %4085 = vadd.xlane.f32.xlu0 %v3880
        %v4086 = vpop.xlane.xlu0 %4085
        %4087 = vadd.xlane.f32.xlu0 %v3881
        %v4088 = vpop.xlane.xlu0 %4087
        %4089 = vadd.xlane.f32.xlu0 %v3882
        %v4090 = vpop.xlane.xlu0 %4089
        %4091 = vadd.xlane.f32.xlu0 %v3883
        %v4092 = vpop.xlane.xlu0 %4091
        %4093 = vadd.xlane.f32.xlu0 %v3884
        %v4094 = vpop.xlane.xlu0 %4093
        %4095 = vadd.xlane.f32.xlu0 %v3885
        %v4096 = vpop.xlane.xlu0 %4095
        %4097 = vadd.xlane.f32.xlu0 %v3886
        %v4098 = vpop.xlane.xlu0 %4097
        %4099 = vadd.xlane.f32.xlu0 %v3887
        %v4100 = vpop.xlane.xlu0 %4099
        %4101 = vadd.xlane.f32.xlu0 %v3888
        %v4102 = vpop.xlane.xlu0 %4101
        %4103 = vadd.xlane.f32.xlu0 %v3889
        %v4104 = vpop.xlane.xlu0 %4103
        %4105 = vadd.xlane.f32.xlu0 %v3890
        %v4106 = vpop.xlane.xlu0 %4105
        %4107 = vadd.xlane.f32.xlu0 %v3891
        %v4108 = vpop.xlane.xlu0 %4107
        %4109 = vadd.xlane.f32.xlu0 %v3892
        %v4110 = vpop.xlane.xlu0 %4109
        %4111 = vadd.xlane.f32.xlu0 %v3893
        %v4112 = vpop.xlane.xlu0 %4111
        %4113 = vadd.xlane.f32.xlu0 %v3894
        %v4114 = vpop.xlane.xlu0 %4113
        %4115 = vadd.xlane.f32.xlu0 %v3895
        %v4116 = vpop.xlane.xlu0 %4115
        %4117 = vadd.xlane.f32.xlu0 %v3896
        %v4118 = vpop.xlane.xlu0 %4117
        %4119 = vadd.xlane.f32.xlu0 %v3897
        %v4120 = vpop.xlane.xlu0 %4119
        %4121 = vadd.xlane.f32.xlu0 %v3898
        %v4122 = vpop.xlane.xlu0 %4121
        %4123 = vadd.xlane.f32.xlu0 %v3899
        %v4124 = vpop.xlane.xlu0 %4123
        %4125 = vadd.xlane.f32.xlu0 %v3900
        %v4126 = vpop.xlane.xlu0 %4125
        %4127 = vadd.xlane.f32.xlu0 %v3901
        %v4128 = vpop.xlane.xlu0 %4127
        %4129 = vadd.xlane.f32.xlu0 %v3902
        %v4130 = vpop.xlane.xlu0 %4129
        %4131 = vadd.xlane.f32.xlu0 %v3903
        %v4132 = vpop.xlane.xlu0 %4131
        %4133 = vadd.xlane.f32.xlu0 %v3904
        %v4134 = vpop.xlane.xlu0 %4133
        %4135 = vadd.xlane.f32.xlu0 %v3905
        %v4136 = vpop.xlane.xlu0 %4135
        %4137 = vadd.xlane.f32.xlu0 %v3906
        %v4138 = vpop.xlane.xlu0 %4137
        %4139 = vadd.xlane.f32.xlu0 %v3907
        %v4140 = vpop.xlane.xlu0 %4139
        %4141 = vadd.xlane.f32.xlu0 %v3908
        %v4142 = vpop.xlane.xlu0 %4141
        %4143 = vadd.xlane.f32.xlu0 %v3909
        %v4144 = vpop.xlane.xlu0 %4143
        %4145 = vadd.xlane.f32.xlu0 %v3910
        %v4146 = vpop.xlane.xlu0 %4145
        %4147 = vadd.xlane.f32.xlu0 %v3911
        %v4148 = vpop.xlane.xlu0 %4147
        %4149 = vadd.xlane.f32.xlu0 %v3912
        %v4150 = vpop.xlane.xlu0 %4149
        %4151 = vadd.xlane.f32.xlu0 %v3913
        %v4152 = vpop.xlane.xlu0 %4151
        %4153 = vadd.xlane.f32.xlu0 %v3914
        %v4154 = vpop.xlane.xlu0 %4153
        %4155 = vadd.xlane.f32.xlu0 %v3915
        %v4156 = vpop.xlane.xlu0 %4155
        %4157 = vadd.xlane.f32.xlu0 %v3916
        %v4158 = vpop.xlane.xlu0 %4157
        %4159 = vadd.xlane.f32.xlu0 %v3917
        %v4160 = vpop.xlane.xlu0 %4159
        %4161 = vadd.xlane.f32.xlu0 %v3918
        %v4162 = vpop.xlane.xlu0 %4161
        %4163 = vadd.xlane.f32.xlu0 %v3919
        %v4164 = vpop.xlane.xlu0 %4163
        %4165 = vadd.xlane.f32.xlu0 %v3920
        %v4166 = vpop.xlane.xlu0 %4165
        %4167 = vadd.xlane.f32.xlu0 %v3921
        %v4168 = vpop.xlane.xlu0 %4167
        %4169 = vadd.xlane.f32.xlu0 %v3922
        %v4170 = vpop.xlane.xlu0 %4169
        %4171 = vadd.xlane.f32.xlu0 %v3923
        %v4172 = vpop.xlane.xlu0 %4171
        %4173 = vadd.xlane.f32.xlu0 %v3924
        %v4174 = vpop.xlane.xlu0 %4173
        %4175 = vadd.xlane.f32.xlu0 %v3925
        %v4176 = vpop.xlane.xlu0 %4175
        %4177 = vadd.xlane.f32.xlu0 %v3926
        %v4178 = vpop.xlane.xlu0 %4177
        %4179 = vadd.xlane.f32.xlu0 %v3927
        %v4180 = vpop.xlane.xlu0 %4179
        %4181 = vadd.xlane.f32.xlu0 %v3928
        %v4182 = vpop.xlane.xlu0 %4181
        %4183 = vadd.xlane.f32.xlu0 %v3929
        %v4184 = vpop.xlane.xlu0 %4183
        %4185 = vadd.xlane.f32.xlu0 %v3930
        %v4186 = vpop.xlane.xlu0 %4185
        %4187 = vadd.xlane.f32.xlu0 %v3931
        %v4188 = vpop.xlane.xlu0 %4187
        %v4317 = vlaneseq
        %v4318 = vand.u32 %v4317, 127
        %v4319 = vlaneseq
        %v4320 = vshrl.u32 %v4319, 7
        %v4321 = vsub.s32 %v4318, %v4320
        %v4322 = vrot.slane %v3934, %v4321
        %v4323 = vadd.s32 %v4318, 4294967288
        %v4324 = vlaneseq
        %v4325 = vshrl.u32 %v4324, 7
        %v4326 = vsub.s32 %v4323, %v4325
        %v4327 = vrot.slane %v3936, %v4326
        %vm4328 = vcmask 130112
        %v4329 = vsel %vm4328, %v4327, %v4322
        %v4330 = vadd.s32 %v4318, 4294967280
        %v4331 = vlaneseq
        %v4332 = vshrl.u32 %v4331, 7
        %v4333 = vsub.s32 %v4330, %v4332
        %v4334 = vrot.slane %v3938, %v4333
        %vm4335 = vcmask 195712
        %v4336 = vsel %vm4335, %v4334, %v4329
        %v4337 = vadd.s32 %v4318, 4294967272
        %v4338 = vlaneseq
        %v4339 = vshrl.u32 %v4338, 7
        %v4340 = vsub.s32 %v4337, %v4339
        %v4341 = vrot.slane %v3940, %v4340
        %vm4342 = vcmask 261312
        %v4343 = vsel %vm4342, %v4341, %v4336
        %v4344 = vadd.s32 %v4318, 4294967264
        %v4345 = vlaneseq
        %v4346 = vshrl.u32 %v4345, 7
        %v4347 = vsub.s32 %v4344, %v4346
        %v4348 = vrot.slane %v3942, %v4347
        %vm4349 = vcmask 326912
        %v4350 = vsel %vm4349, %v4348, %v4343
        %v4351 = vadd.s32 %v4318, 4294967256
        %v4352 = vlaneseq
        %v4353 = vshrl.u32 %v4352, 7
        %v4354 = vsub.s32 %v4351, %v4353
        %v4355 = vrot.slane %v3944, %v4354
        %vm4356 = vcmask 392512
        %v4357 = vsel %vm4356, %v4355, %v4350
        %v4358 = vadd.s32 %v4318, 4294967248
        %v4359 = vlaneseq
        %v4360 = vshrl.u32 %v4359, 7
        %v4361 = vsub.s32 %v4358, %v4360
        %v4362 = vrot.slane %v3946, %v4361
        %vm4363 = vcmask 458112
        %v4364 = vsel %vm4363, %v4362, %v4357
        %v4365 = vadd.s32 %v4318, 4294967240
        %v4366 = vlaneseq
        %v4367 = vshrl.u32 %v4366, 7
        %v4368 = vsub.s32 %v4365, %v4367
        %v4369 = vrot.slane %v3948, %v4368
        %vm4370 = vcmask 523712
        %v4371 = vsel %vm4370, %v4369, %v4364
        %v4372 = vadd.s32 %v4318, 4294967232
        %v4373 = vlaneseq
        %v4374 = vshrl.u32 %v4373, 7
        %v4375 = vsub.s32 %v4372, %v4374
        %v4376 = vrot.slane %v3950, %v4375
        %vm4377 = vcmask 589312
        %v4378 = vsel %vm4377, %v4376, %v4371
        %v4379 = vadd.s32 %v4318, 4294967224
        %v4380 = vlaneseq
        %v4381 = vshrl.u32 %v4380, 7
        %v4382 = vsub.s32 %v4379, %v4381
        %v4383 = vrot.slane %v3952, %v4382
        %vm4384 = vcmask 654912
        %v4385 = vsel %vm4384, %v4383, %v4378
        %v4386 = vadd.s32 %v4318, 4294967216
        %v4387 = vlaneseq
        %v4388 = vshrl.u32 %v4387, 7
        %v4389 = vsub.s32 %v4386, %v4388
        %v4390 = vrot.slane %v3954, %v4389
        %vm4391 = vcmask 720512
        %v4392 = vsel %vm4391, %v4390, %v4385
        %v4393 = vadd.s32 %v4318, 4294967208
        %v4394 = vlaneseq
        %v4395 = vshrl.u32 %v4394, 7
        %v4396 = vsub.s32 %v4393, %v4395
        %v4397 = vrot.slane %v3956, %v4396
        %vm4398 = vcmask 786112
        %v4399 = vsel %vm4398, %v4397, %v4392
        %v4400 = vadd.s32 %v4318, 4294967200
        %v4401 = vlaneseq
        %v4402 = vshrl.u32 %v4401, 7
        %v4403 = vsub.s32 %v4400, %v4402
        %v4404 = vrot.slane %v3958, %v4403
        %vm4405 = vcmask 851712
        %v4406 = vsel %vm4405, %v4404, %v4399
        %v4407 = vadd.s32 %v4318, 4294967192
        %v4408 = vlaneseq
        %v4409 = vshrl.u32 %v4408, 7
        %v4410 = vsub.s32 %v4407, %v4409
        %v4411 = vrot.slane %v3960, %v4410
        %vm4412 = vcmask 917312
        %v4413 = vsel %vm4412, %v4411, %v4406
        %v4414 = vadd.s32 %v4318, 4294967184
        %v4415 = vlaneseq
        %v4416 = vshrl.u32 %v4415, 7
        %v4417 = vsub.s32 %v4414, %v4416
        %v4418 = vrot.slane %v3962, %v4417
        %vm4419 = vcmask 982912
        %v4420 = vsel %vm4419, %v4418, %v4413
        %v4421 = vadd.s32 %v4318, 4294967176
        %v4422 = vlaneseq
        %v4423 = vshrl.u32 %v4422, 7
        %v4424 = vsub.s32 %v4421, %v4423
        %v4425 = vrot.slane %v3964, %v4424
        %vm4426 = vcmask 1048512
        %v4427 = vsel %vm4426, %v4425, %v4420
        %v4428 = vlaneseq
        %v4429 = vshrl.u32 %v4428, 7
        %v4430 = vsub.s32 %v4318, %v4429
        %v4431 = vrot.slane %v3966, %v4430
        %v4432 = vlaneseq
        %v4433 = vshrl.u32 %v4432, 7
        %v4434 = vsub.s32 %v4323, %v4433
        %v4435 = vrot.slane %v3968, %v4434
        %v4436 = vsel %vm4328, %v4435, %v4431
        %v4437 = vlaneseq
        %v4438 = vshrl.u32 %v4437, 7
        %v4439 = vsub.s32 %v4330, %v4438
        %v4440 = vrot.slane %v3970, %v4439
        %v4441 = vsel %vm4335, %v4440, %v4436
        %v4442 = vlaneseq
        %v4443 = vshrl.u32 %v4442, 7
        %v4444 = vsub.s32 %v4337, %v4443
        %v4445 = vrot.slane %v3972, %v4444
        %v4446 = vsel %vm4342, %v4445, %v4441
        %v4447 = vlaneseq
        %v4448 = vshrl.u32 %v4447, 7
        %v4449 = vsub.s32 %v4344, %v4448
        %v4450 = vrot.slane %v3974, %v4449
        %v4451 = vsel %vm4349, %v4450, %v4446
        %v4452 = vlaneseq
        %v4453 = vshrl.u32 %v4452, 7
        %v4454 = vsub.s32 %v4351, %v4453
        %v4455 = vrot.slane %v3976, %v4454
        %v4456 = vsel %vm4356, %v4455, %v4451
        %v4457 = vlaneseq
        %v4458 = vshrl.u32 %v4457, 7
        %v4459 = vsub.s32 %v4358, %v4458
        %v4460 = vrot.slane %v3978, %v4459
        %v4461 = vsel %vm4363, %v4460, %v4456
        %v4462 = vlaneseq
        %v4463 = vshrl.u32 %v4462, 7
        %v4464 = vsub.s32 %v4365, %v4463
        %v4465 = vrot.slane %v3980, %v4464
        %v4466 = vsel %vm4370, %v4465, %v4461
        %v4467 = vlaneseq
        %v4468 = vshrl.u32 %v4467, 7
        %v4469 = vsub.s32 %v4372, %v4468
        %v4470 = vrot.slane %v3982, %v4469
        %v4471 = vsel %vm4377, %v4470, %v4466
        %v4472 = vlaneseq
        %v4473 = vshrl.u32 %v4472, 7
        %v4474 = vsub.s32 %v4379, %v4473
        %v4475 = vrot.slane %v3984, %v4474
        %v4476 = vsel %vm4384, %v4475, %v4471
        %v4477 = vlaneseq
        %v4478 = vshrl.u32 %v4477, 7
        %v4479 = vsub.s32 %v4386, %v4478
        %v4480 = vrot.slane %v3986, %v4479
        %v4481 = vsel %vm4391, %v4480, %v4476
        %v4482 = vlaneseq
        %v4483 = vshrl.u32 %v4482, 7
        %v4484 = vsub.s32 %v4393, %v4483
        %v4485 = vrot.slane %v3988, %v4484
        %v4486 = vsel %vm4398, %v4485, %v4481
        %v4487 = vlaneseq
        %v4488 = vshrl.u32 %v4487, 7
        %v4489 = vsub.s32 %v4400, %v4488
        %v4490 = vrot.slane %v3990, %v4489
        %v4491 = vsel %vm4405, %v4490, %v4486
        %v4492 = vlaneseq
        %v4493 = vshrl.u32 %v4492, 7
        %v4494 = vsub.s32 %v4407, %v4493
        %v4495 = vrot.slane %v3992, %v4494
        %v4496 = vsel %vm4412, %v4495, %v4491
        %v4497 = vlaneseq
        %v4498 = vshrl.u32 %v4497, 7
        %v4499 = vsub.s32 %v4414, %v4498
        %v4500 = vrot.slane %v3994, %v4499
        %v4501 = vsel %vm4419, %v4500, %v4496
        %v4502 = vlaneseq
        %v4503 = vshrl.u32 %v4502, 7
        %v4504 = vsub.s32 %v4421, %v4503
        %v4505 = vrot.slane %v3996, %v4504
        %v4506 = vsel %vm4426, %v4505, %v4501
        %v4507 = vlaneseq
        %v4508 = vshrl.u32 %v4507, 7
        %v4509 = vsub.s32 %v4318, %v4508
        %v4510 = vrot.slane %v3998, %v4509
        %v4511 = vlaneseq
        %v4512 = vshrl.u32 %v4511, 7
        %v4513 = vsub.s32 %v4323, %v4512
        %v4514 = vrot.slane %v4000, %v4513
        %v4515 = vsel %vm4328, %v4514, %v4510
        %v4516 = vlaneseq
        %v4517 = vshrl.u32 %v4516, 7
        %v4518 = vsub.s32 %v4330, %v4517
        %v4519 = vrot.slane %v4002, %v4518
        %v4520 = vsel %vm4335, %v4519, %v4515
        %v4521 = vlaneseq
        %v4522 = vshrl.u32 %v4521, 7
        %v4523 = vsub.s32 %v4337, %v4522
        %v4524 = vrot.slane %v4004, %v4523
        %v4525 = vsel %vm4342, %v4524, %v4520
        %v4526 = vlaneseq
        %v4527 = vshrl.u32 %v4526, 7
        %v4528 = vsub.s32 %v4344, %v4527
        %v4529 = vrot.slane %v4006, %v4528
        %v4530 = vsel %vm4349, %v4529, %v4525
        %v4531 = vlaneseq
        %v4532 = vshrl.u32 %v4531, 7
        %v4533 = vsub.s32 %v4351, %v4532
        %v4534 = vrot.slane %v4008, %v4533
        %v4535 = vsel %vm4356, %v4534, %v4530
        %v4536 = vlaneseq
        %v4537 = vshrl.u32 %v4536, 7
        %v4538 = vsub.s32 %v4358, %v4537
        %v4539 = vrot.slane %v4010, %v4538
        %v4540 = vsel %vm4363, %v4539, %v4535
        %v4541 = vlaneseq
        %v4542 = vshrl.u32 %v4541, 7
        %v4543 = vsub.s32 %v4365, %v4542
        %v4544 = vrot.slane %v4012, %v4543
        %v4545 = vsel %vm4370, %v4544, %v4540
        %v4546 = vlaneseq
        %v4547 = vshrl.u32 %v4546, 7
        %v4548 = vsub.s32 %v4372, %v4547
        %v4549 = vrot.slane %v4014, %v4548
        %v4550 = vsel %vm4377, %v4549, %v4545
        %v4551 = vlaneseq
        %v4552 = vshrl.u32 %v4551, 7
        %v4553 = vsub.s32 %v4379, %v4552
        %v4554 = vrot.slane %v4016, %v4553
        %v4555 = vsel %vm4384, %v4554, %v4550
        %v4556 = vlaneseq
        %v4557 = vshrl.u32 %v4556, 7
        %v4558 = vsub.s32 %v4386, %v4557
        %v4559 = vrot.slane %v4018, %v4558
        %v4560 = vsel %vm4391, %v4559, %v4555
        %v4561 = vlaneseq
        %v4562 = vshrl.u32 %v4561, 7
        %v4563 = vsub.s32 %v4393, %v4562
        %v4564 = vrot.slane %v4020, %v4563
        %v4565 = vsel %vm4398, %v4564, %v4560
        %v4566 = vlaneseq
        %v4567 = vshrl.u32 %v4566, 7
        %v4568 = vsub.s32 %v4400, %v4567
        %v4569 = vrot.slane %v4022, %v4568
        %v4570 = vsel %vm4405, %v4569, %v4565
        %v4571 = vlaneseq
        %v4572 = vshrl.u32 %v4571, 7
        %v4573 = vsub.s32 %v4407, %v4572
        %v4574 = vrot.slane %v4024, %v4573
        %v4575 = vsel %vm4412, %v4574, %v4570
        %v4576 = vlaneseq
        %v4577 = vshrl.u32 %v4576, 7
        %v4578 = vsub.s32 %v4414, %v4577
        %v4579 = vrot.slane %v4026, %v4578
        %v4580 = vsel %vm4419, %v4579, %v4575
        %v4581 = vlaneseq
        %v4582 = vshrl.u32 %v4581, 7
        %v4583 = vsub.s32 %v4421, %v4582
        %v4584 = vrot.slane %v4028, %v4583
        %v4585 = vsel %vm4426, %v4584, %v4580
        %v4586 = vlaneseq
        %v4587 = vshrl.u32 %v4586, 7
        %v4588 = vsub.s32 %v4318, %v4587
        %v4589 = vrot.slane %v4030, %v4588
        %v4590 = vlaneseq
        %v4591 = vshrl.u32 %v4590, 7
        %v4592 = vsub.s32 %v4323, %v4591
        %v4593 = vrot.slane %v4032, %v4592
        %v4594 = vsel %vm4328, %v4593, %v4589
        %v4595 = vlaneseq
        %v4596 = vshrl.u32 %v4595, 7
        %v4597 = vsub.s32 %v4330, %v4596
        %v4598 = vrot.slane %v4034, %v4597
        %v4599 = vsel %vm4335, %v4598, %v4594
        %v4600 = vlaneseq
        %v4601 = vshrl.u32 %v4600, 7
        %v4602 = vsub.s32 %v4337, %v4601
        %v4603 = vrot.slane %v4036, %v4602
        %v4604 = vsel %vm4342, %v4603, %v4599
        %v4605 = vlaneseq
        %v4606 = vshrl.u32 %v4605, 7
        %v4607 = vsub.s32 %v4344, %v4606
        %v4608 = vrot.slane %v4038, %v4607
        %v4609 = vsel %vm4349, %v4608, %v4604
        %v4610 = vlaneseq
        %v4611 = vshrl.u32 %v4610, 7
        %v4612 = vsub.s32 %v4351, %v4611
        %v4613 = vrot.slane %v4040, %v4612
        %v4614 = vsel %vm4356, %v4613, %v4609
        %v4615 = vlaneseq
        %v4616 = vshrl.u32 %v4615, 7
        %v4617 = vsub.s32 %v4358, %v4616
        %v4618 = vrot.slane %v4042, %v4617
        %v4619 = vsel %vm4363, %v4618, %v4614
        %v4620 = vlaneseq
        %v4621 = vshrl.u32 %v4620, 7
        %v4622 = vsub.s32 %v4365, %v4621
        %v4623 = vrot.slane %v4044, %v4622
        %v4624 = vsel %vm4370, %v4623, %v4619
        %v4625 = vlaneseq
        %v4626 = vshrl.u32 %v4625, 7
        %v4627 = vsub.s32 %v4372, %v4626
        %v4628 = vrot.slane %v4046, %v4627
        %v4629 = vsel %vm4377, %v4628, %v4624
        %v4630 = vlaneseq
        %v4631 = vshrl.u32 %v4630, 7
        %v4632 = vsub.s32 %v4379, %v4631
        %v4633 = vrot.slane %v4048, %v4632
        %v4634 = vsel %vm4384, %v4633, %v4629
        %v4635 = vlaneseq
        %v4636 = vshrl.u32 %v4635, 7
        %v4637 = vsub.s32 %v4386, %v4636
        %v4638 = vrot.slane %v4050, %v4637
        %v4639 = vsel %vm4391, %v4638, %v4634
        %v4640 = vlaneseq
        %v4641 = vshrl.u32 %v4640, 7
        %v4642 = vsub.s32 %v4393, %v4641
        %v4643 = vrot.slane %v4052, %v4642
        %v4644 = vsel %vm4398, %v4643, %v4639
        %v4645 = vlaneseq
        %v4646 = vshrl.u32 %v4645, 7
        %v4647 = vsub.s32 %v4400, %v4646
        %v4648 = vrot.slane %v4054, %v4647
        %v4649 = vsel %vm4405, %v4648, %v4644
        %v4650 = vlaneseq
        %v4651 = vshrl.u32 %v4650, 7
        %v4652 = vsub.s32 %v4407, %v4651
        %v4653 = vrot.slane %v4056, %v4652
        %v4654 = vsel %vm4412, %v4653, %v4649
        %v4655 = vlaneseq
        %v4656 = vshrl.u32 %v4655, 7
        %v4657 = vsub.s32 %v4414, %v4656
        %v4658 = vrot.slane %v4058, %v4657
        %v4659 = vsel %vm4419, %v4658, %v4654
        %v4660 = vlaneseq
        %v4661 = vshrl.u32 %v4660, 7
        %v4662 = vsub.s32 %v4421, %v4661
        %v4663 = vrot.slane %v4060, %v4662
        %v4664 = vsel %vm4426, %v4663, %v4659
        %v4665 = vlaneseq
        %v4666 = vshrl.u32 %v4665, 7
        %v4667 = vsub.s32 %v4318, %v4666
        %v4668 = vrot.slane %v4062, %v4667
        %v4669 = vlaneseq
        %v4670 = vshrl.u32 %v4669, 7
        %v4671 = vsub.s32 %v4323, %v4670
        %v4672 = vrot.slane %v4064, %v4671
        %v4673 = vsel %vm4328, %v4672, %v4668
        %v4674 = vlaneseq
        %v4675 = vshrl.u32 %v4674, 7
        %v4676 = vsub.s32 %v4330, %v4675
        %v4677 = vrot.slane %v4066, %v4676
        %v4678 = vsel %vm4335, %v4677, %v4673
        %v4679 = vlaneseq
        %v4680 = vshrl.u32 %v4679, 7
        %v4681 = vsub.s32 %v4337, %v4680
        %v4682 = vrot.slane %v4068, %v4681
        %v4683 = vsel %vm4342, %v4682, %v4678
        %v4684 = vlaneseq
        %v4685 = vshrl.u32 %v4684, 7
        %v4686 = vsub.s32 %v4344, %v4685
        %v4687 = vrot.slane %v4070, %v4686
        %v4688 = vsel %vm4349, %v4687, %v4683
        %v4689 = vlaneseq
        %v4690 = vshrl.u32 %v4689, 7
        %v4691 = vsub.s32 %v4351, %v4690
        %v4692 = vrot.slane %v4072, %v4691
        %v4693 = vsel %vm4356, %v4692, %v4688
        %v4694 = vlaneseq
        %v4695 = vshrl.u32 %v4694, 7
        %v4696 = vsub.s32 %v4358, %v4695
        %v4697 = vrot.slane %v4074, %v4696
        %v4698 = vsel %vm4363, %v4697, %v4693
        %v4699 = vlaneseq
        %v4700 = vshrl.u32 %v4699, 7
        %v4701 = vsub.s32 %v4365, %v4700
        %v4702 = vrot.slane %v4076, %v4701
        %v4703 = vsel %vm4370, %v4702, %v4698
        %v4704 = vlaneseq
        %v4705 = vshrl.u32 %v4704, 7
        %v4706 = vsub.s32 %v4372, %v4705
        %v4707 = vrot.slane %v4078, %v4706
        %v4708 = vsel %vm4377, %v4707, %v4703
        %v4709 = vlaneseq
        %v4710 = vshrl.u32 %v4709, 7
        %v4711 = vsub.s32 %v4379, %v4710
        %v4712 = vrot.slane %v4080, %v4711
        %v4713 = vsel %vm4384, %v4712, %v4708
        %v4714 = vlaneseq
        %v4715 = vshrl.u32 %v4714, 7
        %v4716 = vsub.s32 %v4386, %v4715
        %v4717 = vrot.slane %v4082, %v4716
        %v4718 = vsel %vm4391, %v4717, %v4713
        %v4719 = vlaneseq
        %v4720 = vshrl.u32 %v4719, 7
        %v4721 = vsub.s32 %v4393, %v4720
        %v4722 = vrot.slane %v4084, %v4721
        %v4723 = vsel %vm4398, %v4722, %v4718
        %v4724 = vlaneseq
        %v4725 = vshrl.u32 %v4724, 7
        %v4726 = vsub.s32 %v4400, %v4725
        %v4727 = vrot.slane %v4086, %v4726
        %v4728 = vsel %vm4405, %v4727, %v4723
        %v4729 = vlaneseq
        %v4730 = vshrl.u32 %v4729, 7
        %v4731 = vsub.s32 %v4407, %v4730
        %v4732 = vrot.slane %v4088, %v4731
        %v4733 = vsel %vm4412, %v4732, %v4728
        %v4734 = vlaneseq
        %v4735 = vshrl.u32 %v4734, 7
        %v4736 = vsub.s32 %v4414, %v4735
        %v4737 = vrot.slane %v4090, %v4736
        %v4738 = vsel %vm4419, %v4737, %v4733
        %v4739 = vlaneseq
        %v4740 = vshrl.u32 %v4739, 7
        %v4741 = vsub.s32 %v4421, %v4740
        %v4742 = vrot.slane %v4092, %v4741
        %v4743 = vsel %vm4426, %v4742, %v4738
        %v4744 = vlaneseq
        %v4745 = vshrl.u32 %v4744, 7
        %v4746 = vsub.s32 %v4318, %v4745
        %v4747 = vrot.slane %v4094, %v4746
        %v4748 = vlaneseq
        %v4749 = vshrl.u32 %v4748, 7
        %v4750 = vsub.s32 %v4323, %v4749
        %v4751 = vrot.slane %v4096, %v4750
        %v4752 = vsel %vm4328, %v4751, %v4747
        %v4753 = vlaneseq
        %v4754 = vshrl.u32 %v4753, 7
        %v4755 = vsub.s32 %v4330, %v4754
        %v4756 = vrot.slane %v4098, %v4755
        %v4757 = vsel %vm4335, %v4756, %v4752
        %v4758 = vlaneseq
        %v4759 = vshrl.u32 %v4758, 7
        %v4760 = vsub.s32 %v4337, %v4759
        %v4761 = vrot.slane %v4100, %v4760
        %v4762 = vsel %vm4342, %v4761, %v4757
        %v4763 = vlaneseq
        %v4764 = vshrl.u32 %v4763, 7
        %v4765 = vsub.s32 %v4344, %v4764
        %v4766 = vrot.slane %v4102, %v4765
        %v4767 = vsel %vm4349, %v4766, %v4762
        %v4768 = vlaneseq
        %v4769 = vshrl.u32 %v4768, 7
        %v4770 = vsub.s32 %v4351, %v4769
        %v4771 = vrot.slane %v4104, %v4770
        %v4772 = vsel %vm4356, %v4771, %v4767
        %v4773 = vlaneseq
        %v4774 = vshrl.u32 %v4773, 7
        %v4775 = vsub.s32 %v4358, %v4774
        %v4776 = vrot.slane %v4106, %v4775
        %v4777 = vsel %vm4363, %v4776, %v4772
        %v4778 = vlaneseq
        %v4779 = vshrl.u32 %v4778, 7
        %v4780 = vsub.s32 %v4365, %v4779
        %v4781 = vrot.slane %v4108, %v4780
        %v4782 = vsel %vm4370, %v4781, %v4777
        %v4783 = vlaneseq
        %v4784 = vshrl.u32 %v4783, 7
        %v4785 = vsub.s32 %v4372, %v4784
        %v4786 = vrot.slane %v4110, %v4785
        %v4787 = vsel %vm4377, %v4786, %v4782
        %v4788 = vlaneseq
        %v4789 = vshrl.u32 %v4788, 7
        %v4790 = vsub.s32 %v4379, %v4789
        %v4791 = vrot.slane %v4112, %v4790
        %v4792 = vsel %vm4384, %v4791, %v4787
        %v4793 = vlaneseq
        %v4794 = vshrl.u32 %v4793, 7
        %v4795 = vsub.s32 %v4386, %v4794
        %v4796 = vrot.slane %v4114, %v4795
        %v4797 = vsel %vm4391, %v4796, %v4792
        %v4798 = vlaneseq
        %v4799 = vshrl.u32 %v4798, 7
        %v4800 = vsub.s32 %v4393, %v4799
        %v4801 = vrot.slane %v4116, %v4800
        %v4802 = vsel %vm4398, %v4801, %v4797
        %v4803 = vlaneseq
        %v4804 = vshrl.u32 %v4803, 7
        %v4805 = vsub.s32 %v4400, %v4804
        %v4806 = vrot.slane %v4118, %v4805
        %v4807 = vsel %vm4405, %v4806, %v4802
        %v4808 = vlaneseq
        %v4809 = vshrl.u32 %v4808, 7
        %v4810 = vsub.s32 %v4407, %v4809
        %v4811 = vrot.slane %v4120, %v4810
        %v4812 = vsel %vm4412, %v4811, %v4807
        %v4813 = vlaneseq
        %v4814 = vshrl.u32 %v4813, 7
        %v4815 = vsub.s32 %v4414, %v4814
        %v4816 = vrot.slane %v4122, %v4815
        %v4817 = vsel %vm4419, %v4816, %v4812
        %v4818 = vlaneseq
        %v4819 = vshrl.u32 %v4818, 7
        %v4820 = vsub.s32 %v4421, %v4819
        %v4821 = vrot.slane %v4124, %v4820
        %v4822 = vsel %vm4426, %v4821, %v4817
        %v4823 = vlaneseq
        %v4824 = vshrl.u32 %v4823, 7
        %v4825 = vsub.s32 %v4318, %v4824
        %v4826 = vrot.slane %v4126, %v4825
        %v4827 = vlaneseq
        %v4828 = vshrl.u32 %v4827, 7
        %v4829 = vsub.s32 %v4323, %v4828
        %v4830 = vrot.slane %v4128, %v4829
        %v4831 = vsel %vm4328, %v4830, %v4826
        %v4832 = vlaneseq
        %v4833 = vshrl.u32 %v4832, 7
        %v4834 = vsub.s32 %v4330, %v4833
        %v4835 = vrot.slane %v4130, %v4834
        %v4836 = vsel %vm4335, %v4835, %v4831
        %v4837 = vlaneseq
        %v4838 = vshrl.u32 %v4837, 7
        %v4839 = vsub.s32 %v4337, %v4838
        %v4840 = vrot.slane %v4132, %v4839
        %v4841 = vsel %vm4342, %v4840, %v4836
        %v4842 = vlaneseq
        %v4843 = vshrl.u32 %v4842, 7
        %v4844 = vsub.s32 %v4344, %v4843
        %v4845 = vrot.slane %v4134, %v4844
        %v4846 = vsel %vm4349, %v4845, %v4841
        %v4847 = vlaneseq
        %v4848 = vshrl.u32 %v4847, 7
        %v4849 = vsub.s32 %v4351, %v4848
        %v4850 = vrot.slane %v4136, %v4849
        %v4851 = vsel %vm4356, %v4850, %v4846
        %v4852 = vlaneseq
        %v4853 = vshrl.u32 %v4852, 7
        %v4854 = vsub.s32 %v4358, %v4853
        %v4855 = vrot.slane %v4138, %v4854
        %v4856 = vsel %vm4363, %v4855, %v4851
        %v4857 = vlaneseq
        %v4858 = vshrl.u32 %v4857, 7
        %v4859 = vsub.s32 %v4365, %v4858
        %v4860 = vrot.slane %v4140, %v4859
        %v4861 = vsel %vm4370, %v4860, %v4856
        %v4862 = vlaneseq
        %v4863 = vshrl.u32 %v4862, 7
        %v4864 = vsub.s32 %v4372, %v4863
        %v4865 = vrot.slane %v4142, %v4864
        %v4866 = vsel %vm4377, %v4865, %v4861
        %v4867 = vlaneseq
        %v4868 = vshrl.u32 %v4867, 7
        %v4869 = vsub.s32 %v4379, %v4868
        %v4870 = vrot.slane %v4144, %v4869
        %v4871 = vsel %vm4384, %v4870, %v4866
        %v4872 = vlaneseq
        %v4873 = vshrl.u32 %v4872, 7
        %v4874 = vsub.s32 %v4386, %v4873
        %v4875 = vrot.slane %v4146, %v4874
        %v4876 = vsel %vm4391, %v4875, %v4871
        %v4877 = vlaneseq
        %v4878 = vshrl.u32 %v4877, 7
        %v4879 = vsub.s32 %v4393, %v4878
        %v4880 = vrot.slane %v4148, %v4879
        %v4881 = vsel %vm4398, %v4880, %v4876
        %v4882 = vlaneseq
        %v4883 = vshrl.u32 %v4882, 7
        %v4884 = vsub.s32 %v4400, %v4883
        %v4885 = vrot.slane %v4150, %v4884
        %v4886 = vsel %vm4405, %v4885, %v4881
        %v4887 = vlaneseq
        %v4888 = vshrl.u32 %v4887, 7
        %v4889 = vsub.s32 %v4407, %v4888
        %v4890 = vrot.slane %v4152, %v4889
        %v4891 = vsel %vm4412, %v4890, %v4886
        %v4892 = vlaneseq
        %v4893 = vshrl.u32 %v4892, 7
        %v4894 = vsub.s32 %v4414, %v4893
        %v4895 = vrot.slane %v4154, %v4894
        %v4896 = vsel %vm4419, %v4895, %v4891
        %v4897 = vlaneseq
        %v4898 = vshrl.u32 %v4897, 7
        %v4899 = vsub.s32 %v4421, %v4898
        %v4900 = vrot.slane %v4156, %v4899
        %v4901 = vsel %vm4426, %v4900, %v4896
        %v4902 = vlaneseq
        %v4903 = vshrl.u32 %v4902, 7
        %v4904 = vsub.s32 %v4318, %v4903
        %v4905 = vrot.slane %v4158, %v4904
        %v4906 = vlaneseq
        %v4907 = vshrl.u32 %v4906, 7
        %v4908 = vsub.s32 %v4323, %v4907
        %v4909 = vrot.slane %v4160, %v4908
        %v4910 = vsel %vm4328, %v4909, %v4905
        %v4911 = vlaneseq
        %v4912 = vshrl.u32 %v4911, 7
        %v4913 = vsub.s32 %v4330, %v4912
        %v4914 = vrot.slane %v4162, %v4913
        %v4915 = vsel %vm4335, %v4914, %v4910
        %v4916 = vlaneseq
        %v4917 = vshrl.u32 %v4916, 7
        %v4918 = vsub.s32 %v4337, %v4917
        %v4919 = vrot.slane %v4164, %v4918
        %v4920 = vsel %vm4342, %v4919, %v4915
        %v4921 = vlaneseq
        %v4922 = vshrl.u32 %v4921, 7
        %v4923 = vsub.s32 %v4344, %v4922
        %v4924 = vrot.slane %v4166, %v4923
        %v4925 = vsel %vm4349, %v4924, %v4920
        %v4926 = vlaneseq
        %v4927 = vshrl.u32 %v4926, 7
        %v4928 = vsub.s32 %v4351, %v4927
        %v4929 = vrot.slane %v4168, %v4928
        %v4930 = vsel %vm4356, %v4929, %v4925
        %v4931 = vlaneseq
        %v4932 = vshrl.u32 %v4931, 7
        %v4933 = vsub.s32 %v4358, %v4932
        %v4934 = vrot.slane %v4170, %v4933
        %v4935 = vsel %vm4363, %v4934, %v4930
        %v4936 = vlaneseq
        %v4937 = vshrl.u32 %v4936, 7
        %v4938 = vsub.s32 %v4365, %v4937
        %v4939 = vrot.slane %v4172, %v4938
        %v4940 = vsel %vm4370, %v4939, %v4935
        %v4941 = vlaneseq
        %v4942 = vshrl.u32 %v4941, 7
        %v4943 = vsub.s32 %v4372, %v4942
        %v4944 = vrot.slane %v4174, %v4943
        %v4945 = vsel %vm4377, %v4944, %v4940
        %v4946 = vlaneseq
        %v4947 = vshrl.u32 %v4946, 7
        %v4948 = vsub.s32 %v4379, %v4947
        %v4949 = vrot.slane %v4176, %v4948
        %v4950 = vsel %vm4384, %v4949, %v4945
        %v4951 = vlaneseq
        %v4952 = vshrl.u32 %v4951, 7
        %v4953 = vsub.s32 %v4386, %v4952
        %v4954 = vrot.slane %v4178, %v4953
        %v4955 = vsel %vm4391, %v4954, %v4950
        %v4956 = vlaneseq
        %v4957 = vshrl.u32 %v4956, 7
        %v4958 = vsub.s32 %v4393, %v4957
        %v4959 = vrot.slane %v4180, %v4958
        %v4960 = vsel %vm4398, %v4959, %v4955
        %v4961 = vlaneseq
        %v4962 = vshrl.u32 %v4961, 7
        %v4963 = vsub.s32 %v4400, %v4962
        %v4964 = vrot.slane %v4182, %v4963
        %v4965 = vsel %vm4405, %v4964, %v4960
        %v4966 = vlaneseq
        %v4967 = vshrl.u32 %v4966, 7
        %v4968 = vsub.s32 %v4407, %v4967
        %v4969 = vrot.slane %v4184, %v4968
        %v4970 = vsel %vm4412, %v4969, %v4965
        %v4971 = vlaneseq
        %v4972 = vshrl.u32 %v4971, 7
        %v4973 = vsub.s32 %v4414, %v4972
        %v4974 = vrot.slane %v4186, %v4973
        %v4975 = vsel %vm4419, %v4974, %v4970
        %v4976 = vlaneseq
        %v4977 = vshrl.u32 %v4976, 7
        %v4978 = vsub.s32 %v4421, %v4977
        %v4979 = vrot.slane %v4188, %v4978
        %v4980 = vsel %vm4426, %v4979, %v4975
        %vm4981 = vcmask 1041409
        %v4982 = vsel %vm4981, %v4506, %v4427
        %vm4983 = vcmask 1042434
        %v4984 = vsel %vm4983, %v4585, %v4982
        %vm4985 = vcmask 1043459
        %v4986 = vsel %vm4985, %v4664, %v4984
        %vm4987 = vcmask 1044484
        %v4988 = vsel %vm4987, %v4743, %v4986
        %vm4989 = vcmask 1045509
        %v4990 = vsel %vm4989, %v4822, %v4988
        %vm4991 = vcmask 1046534
        %v4992 = vsel %vm4991, %v4901, %v4990
        %vm4993 = vcmask 1047559
        %v4994 = vsel %vm4993, %v4980, %v4992
        %v4996 = vadd.f32 %v3932, %v4994
        %4997 = vst [vmem:[#allocation2] sm:$0xff] %v4996
        %p4998 = scmp.eq.s32.totalorder %s31, 1
        // Predicated region
        $region65: #{tpu_custom_call.1} parent=39 // pred_check
          %p4999 = pneg %p4998
        $region66: #{tpu_custom_call.1} parent=39 // pred_check_branch
          %5001 = sbr.rel (%p4999) target = $region68
        $region67: #{tpu_custom_call.1} parent=39 // pred_region
          %v5002 = vld [vmem:[#allocation3] sm:$0xff]
          %v5003 = vadd.f32 %v5002, 1.0
          %v5004 = vrcp.pop %v5003
          %v5005 = vld [vmem:[#allocation2] sm:$0xff]
          %5007 = vset.pattern.permute.xlu0 0
          %5008 = vperm.xlu0 %5007, %v5004
          %v5009 = vpop.permute.xlu0 %5008
          %v5011 = vmul.f32 %v5005, %v5009
          %v5012 = vld [vmem:[#allocation12] sm:$0xff]
          %v5013 = vld [vmem:[#allocation12 + $0x8] sm:$0xff]
          %v5014 = vld [vmem:[#allocation12 + $0x10] sm:$0xff]
          %v5015 = vld [vmem:[#allocation12 + $0x18] sm:$0xff]
          %v5016 = vld [vmem:[#allocation12 + $0x20] sm:$0xff]
          %v5017 = vld [vmem:[#allocation12 + $0x28] sm:$0xff]
          %v5018 = vld [vmem:[#allocation12 + $0x30] sm:$0xff]
          %v5019 = vld [vmem:[#allocation12 + $0x38] sm:$0xff]
          %v5020 = vld [vmem:[#allocation12 + $0x40] sm:$0xff]
          %v5021 = vld [vmem:[#allocation12 + $0x48] sm:$0xff]
          %v5022 = vld [vmem:[#allocation12 + $0x50] sm:$0xff]
          %v5023 = vld [vmem:[#allocation12 + $0x58] sm:$0xff]
          %v5024 = vld [vmem:[#allocation12 + $0x60] sm:$0xff]
          %v5025 = vld [vmem:[#allocation12 + $0x68] sm:$0xff]
          %v5026 = vld [vmem:[#allocation12 + $0x70] sm:$0xff]
          %v5027 = vld [vmem:[#allocation12 + $0x78] sm:$0xff]
          %5028 = vmatprep.subr.mxu0 0.0
          %v5029 = vand.u32 %v5012, 4294901760
          %5030 = vmatpush1.msra.mxu0 %v5029
          %5031 = vmatprep.subr.mxu0 0.0
          %v5032 = vand.u32 %v5013, 4294901760
          %5033 = vmatpush1.msra.mxu0 %v5032
          %5034 = vmatprep.subr.mxu0 0.0
          %v5035 = vand.u32 %v5014, 4294901760
          %5036 = vmatpush1.msra.mxu0 %v5035
          %5037 = vmatprep.subr.mxu0 0.0
          %v5038 = vand.u32 %v5015, 4294901760
          %5039 = vmatpush1.msra.mxu0 %v5038
          %5040 = vmatprep.subr.mxu0 0.0
          %v5041 = vand.u32 %v5016, 4294901760
          %5042 = vmatpush1.msra.mxu0 %v5041
          %5043 = vmatprep.subr.mxu0 0.0
          %v5044 = vand.u32 %v5017, 4294901760
          %5045 = vmatpush1.msra.mxu0 %v5044
          %5046 = vmatprep.subr.mxu0 0.0
          %v5047 = vand.u32 %v5018, 4294901760
          %5048 = vmatpush1.msra.mxu0 %v5047
          %5049 = vmatprep.subr.mxu0 0.0
          %v5050 = vand.u32 %v5019, 4294901760
          %5051 = vmatpush1.msra.mxu0 %v5050
          %5052 = vmatprep.subr.mxu0 0.0
          %v5053 = vand.u32 %v5020, 4294901760
          %5054 = vmatpush1.msra.mxu0 %v5053
          %5055 = vmatprep.subr.mxu0 0.0
          %v5056 = vand.u32 %v5021, 4294901760
          %5057 = vmatpush1.msra.mxu0 %v5056
          %5058 = vmatprep.subr.mxu0 0.0
          %v5059 = vand.u32 %v5022, 4294901760
          %5060 = vmatpush1.msra.mxu0 %v5059
          %5061 = vmatprep.subr.mxu0 0.0
          %v5062 = vand.u32 %v5023, 4294901760
          %5063 = vmatpush1.msra.mxu0 %v5062
          %5064 = vmatprep.subr.mxu0 0.0
          %v5065 = vand.u32 %v5024, 4294901760
          %5066 = vmatpush1.msra.mxu0 %v5065
          %5067 = vmatprep.subr.mxu0 0.0
          %v5068 = vand.u32 %v5025, 4294901760
          %5069 = vmatpush1.msra.mxu0 %v5068
          %5070 = vmatprep.subr.mxu0 0.0
          %v5071 = vand.u32 %v5026, 4294901760
          %5072 = vmatpush1.msra.mxu0 %v5071
          %5073 = vmatprep.subr.mxu0 0.0
          %v5074 = vand.u32 %v5027, 4294901760
          %5075 = vmatpush1.msra.mxu0 %v5074
          %5076 = vmatprep.subr.mxu0 0.0
          %5077 = vmatpush1.msra.mxu0 0.0
          %5078 = vmatprep.subr.mxu0 0.0
          %5079 = vmatpush1.msra.mxu0 0.0
          %5080 = vmatprep.subr.mxu0 0.0
          %5081 = vmatpush1.msra.mxu0 0.0
          %5082 = vmatprep.subr.mxu0 0.0
          %5083 = vmatpush1.msra.mxu0 0.0
          %5084 = vmatprep.subr.mxu0 0.0
          %5085 = vmatpush1.msra.mxu0 0.0
          %5086 = vmatprep.subr.mxu0 0.0
          %5087 = vmatpush1.msra.mxu0 0.0
          %5088 = vmatprep.subr.mxu0 0.0
          %5089 = vmatpush1.msra.mxu0 0.0
          %5090 = vmatprep.subr.mxu0 0.0
          %5091 = vmatpush1.msra.mxu0 0.0
          %5092 = vmatprep.subr.mxu0 0.0
          %5093 = vmatpush1.msra.mxu0 0.0
          %5094 = vmatprep.subr.mxu0 0.0
          %5095 = vmatpush1.msra.mxu0 0.0
          %5096 = vmatprep.subr.mxu0 0.0
          %5097 = vmatpush1.msra.mxu0 0.0
          %5098 = vmatprep.subr.mxu0 0.0
          %5099 = vmatpush1.msra.mxu0 0.0
          %5100 = vmatprep.subr.mxu0 0.0
          %5101 = vmatpush1.msra.mxu0 0.0
          %5102 = vmatprep.subr.mxu0 0.0
          %5103 = vmatpush1.msra.mxu0 0.0
          %5104 = vmatprep.subr.mxu0 0.0
          %5105 = vmatpush1.msra.mxu0 0.0
          %5106 = vmatprep.subr.mxu0 0.0
          %5107 = vmatpush1.msra.mxu0 0.0
          %5108 = vmatprep.mubr.f32.mxu0 0.0
          %v5109 = vand.u32 %v5011, 4294901760
          %v5110 = vsub.f32 %v5011, %v5109
          %v5111 = vand.u32 %v5110, 4294901760
          %v5112 = vsub.f32 %v5110, %v5111
          %v5113 = vand.u32 %v5112, 4294901760
          %5114 = vmatmul.mubr.f32.gmra.mrb[0].mxu0 %v5113
          %v5115 = vpop.f32.mrb[0].mxu0
          %v5116 = vadd.f32 0.0, %v5115
          %v5117 = vpop.f32.mrb[0].mxu0
          %5118 = vdwg.mxu0
          %5119 = vmatprep.subr.mxu0 0.0
          %v5120 = vand.u32 %v5012, 4294901760
          %v5121 = vsub.f32 %v5012, %v5120
          %v5122 = vand.u32 %v5121, 4294901760
          %v5123 = vsub.f32 %v5121, %v5122
          %v5124 = vand.u32 %v5123, 4294901760
          %5125 = vmatpush1.msra.mxu0 %v5124
          %5126 = vmatprep.subr.mxu0 0.0
          %v5127 = vand.u32 %v5013, 4294901760
          %v5128 = vsub.f32 %v5013, %v5127
          %v5129 = vand.u32 %v5128, 4294901760
          %v5130 = vsub.f32 %v5128, %v5129
          %v5131 = vand.u32 %v5130, 4294901760
          %5132 = vmatpush1.msra.mxu0 %v5131
          %5133 = vmatprep.subr.mxu0 0.0
          %v5134 = vand.u32 %v5014, 4294901760
          %v5135 = vsub.f32 %v5014, %v5134
          %v5136 = vand.u32 %v5135, 4294901760
          %v5137 = vsub.f32 %v5135, %v5136
          %v5138 = vand.u32 %v5137, 4294901760
          %5139 = vmatpush1.msra.mxu0 %v5138
          %5140 = vmatprep.subr.mxu0 0.0
          %v5141 = vand.u32 %v5015, 4294901760
          %v5142 = vsub.f32 %v5015, %v5141
          %v5143 = vand.u32 %v5142, 4294901760
          %v5144 = vsub.f32 %v5142, %v5143
          %v5145 = vand.u32 %v5144, 4294901760
          %5146 = vmatpush1.msra.mxu0 %v5145
          %5147 = vmatprep.subr.mxu0 0.0
          %v5148 = vand.u32 %v5016, 4294901760
          %v5149 = vsub.f32 %v5016, %v5148
          %v5150 = vand.u32 %v5149, 4294901760
          %v5151 = vsub.f32 %v5149, %v5150
          %v5152 = vand.u32 %v5151, 4294901760
          %5153 = vmatpush1.msra.mxu0 %v5152
          %5154 = vmatprep.subr.mxu0 0.0
          %v5155 = vand.u32 %v5017, 4294901760
          %v5156 = vsub.f32 %v5017, %v5155
          %v5157 = vand.u32 %v5156, 4294901760
          %v5158 = vsub.f32 %v5156, %v5157
          %v5159 = vand.u32 %v5158, 4294901760
          %5160 = vmatpush1.msra.mxu0 %v5159
          %5161 = vmatprep.subr.mxu0 0.0
          %v5162 = vand.u32 %v5018, 4294901760
          %v5163 = vsub.f32 %v5018, %v5162
          %v5164 = vand.u32 %v5163, 4294901760
          %v5165 = vsub.f32 %v5163, %v5164
          %v5166 = vand.u32 %v5165, 4294901760
          %5167 = vmatpush1.msra.mxu0 %v5166
          %5168 = vmatprep.subr.mxu0 0.0
          %v5169 = vand.u32 %v5019, 4294901760
          %v5170 = vsub.f32 %v5019, %v5169
          %v5171 = vand.u32 %v5170, 4294901760
          %v5172 = vsub.f32 %v5170, %v5171
          %v5173 = vand.u32 %v5172, 4294901760
          %5174 = vmatpush1.msra.mxu0 %v5173
          %5175 = vmatprep.subr.mxu0 0.0
          %v5176 = vand.u32 %v5020, 4294901760
          %v5177 = vsub.f32 %v5020, %v5176
          %v5178 = vand.u32 %v5177, 4294901760
          %v5179 = vsub.f32 %v5177, %v5178
          %v5180 = vand.u32 %v5179, 4294901760
          %5181 = vmatpush1.msra.mxu0 %v5180
          %5182 = vmatprep.subr.mxu0 0.0
          %v5183 = vand.u32 %v5021, 4294901760
          %v5184 = vsub.f32 %v5021, %v5183
          %v5185 = vand.u32 %v5184, 4294901760
          %v5186 = vsub.f32 %v5184, %v5185
          %v5187 = vand.u32 %v5186, 4294901760
          %5188 = vmatpush1.msra.mxu0 %v5187
          %5189 = vmatprep.subr.mxu0 0.0
          %v5190 = vand.u32 %v5022, 4294901760
          %v5191 = vsub.f32 %v5022, %v5190
          %v5192 = vand.u32 %v5191, 4294901760
          %v5193 = vsub.f32 %v5191, %v5192
          %v5194 = vand.u32 %v5193, 4294901760
          %5195 = vmatpush1.msra.mxu0 %v5194
          %5196 = vmatprep.subr.mxu0 0.0
          %v5197 = vand.u32 %v5023, 4294901760
          %v5198 = vsub.f32 %v5023, %v5197
          %v5199 = vand.u32 %v5198, 4294901760
          %v5200 = vsub.f32 %v5198, %v5199
          %v5201 = vand.u32 %v5200, 4294901760
          %5202 = vmatpush1.msra.mxu0 %v5201
          %5203 = vmatprep.subr.mxu0 0.0
          %v5204 = vand.u32 %v5024, 4294901760
          %v5205 = vsub.f32 %v5024, %v5204
          %v5206 = vand.u32 %v5205, 4294901760
          %v5207 = vsub.f32 %v5205, %v5206
          %v5208 = vand.u32 %v5207, 4294901760
          %5209 = vmatpush1.msra.mxu0 %v5208
          %5210 = vmatprep.subr.mxu0 0.0
          %v5211 = vand.u32 %v5025, 4294901760
          %v5212 = vsub.f32 %v5025, %v5211
          %v5213 = vand.u32 %v5212, 4294901760
          %v5214 = vsub.f32 %v5212, %v5213
          %v5215 = vand.u32 %v5214, 4294901760
          %5216 = vmatpush1.msra.mxu0 %v5215
          %5217 = vmatprep.subr.mxu0 0.0
          %v5218 = vand.u32 %v5026, 4294901760
          %v5219 = vsub.f32 %v5026, %v5218
          %v5220 = vand.u32 %v5219, 4294901760
          %v5221 = vsub.f32 %v5219, %v5220
          %v5222 = vand.u32 %v5221, 4294901760
          %5223 = vmatpush1.msra.mxu0 %v5222
          %5224 = vmatprep.subr.mxu0 0.0
          %v5225 = vand.u32 %v5027, 4294901760
          %v5226 = vsub.f32 %v5027, %v5225
          %v5227 = vand.u32 %v5226, 4294901760
          %v5228 = vsub.f32 %v5226, %v5227
          %v5229 = vand.u32 %v5228, 4294901760
          %5230 = vmatpush1.msra.mxu0 %v5229
          %5231 = vmatprep.subr.mxu0 0.0
          %5232 = vmatpush1.msra.mxu0 0.0
          %5233 = vmatprep.subr.mxu0 0.0
          %5234 = vmatpush1.msra.mxu0 0.0
          %5235 = vmatprep.subr.mxu0 0.0
          %5236 = vmatpush1.msra.mxu0 0.0
          %5237 = vmatprep.subr.mxu0 0.0
          %5238 = vmatpush1.msra.mxu0 0.0
          %5239 = vmatprep.subr.mxu0 0.0
          %5240 = vmatpush1.msra.mxu0 0.0
          %5241 = vmatprep.subr.mxu0 0.0
          %5242 = vmatpush1.msra.mxu0 0.0
          %5243 = vmatprep.subr.mxu0 0.0
          %5244 = vmatpush1.msra.mxu0 0.0
          %5245 = vmatprep.subr.mxu0 0.0
          %5246 = vmatpush1.msra.mxu0 0.0
          %5247 = vmatprep.subr.mxu0 0.0
          %5248 = vmatpush1.msra.mxu0 0.0
          %5249 = vmatprep.subr.mxu0 0.0
          %5250 = vmatpush1.msra.mxu0 0.0
          %5251 = vmatprep.subr.mxu0 0.0
          %5252 = vmatpush1.msra.mxu0 0.0
          %5253 = vmatprep.subr.mxu0 0.0
          %5254 = vmatpush1.msra.mxu0 0.0
          %5255 = vmatprep.subr.mxu0 0.0
          %5256 = vmatpush1.msra.mxu0 0.0
          %5257 = vmatprep.subr.mxu0 0.0
          %5258 = vmatpush1.msra.mxu0 0.0
          %5259 = vmatprep.subr.mxu0 0.0
          %5260 = vmatpush1.msra.mxu0 0.0
          %5261 = vmatprep.subr.mxu0 0.0
          %5262 = vmatpush1.msra.mxu0 0.0
          %5263 = vmatprep.mubr.f32.mxu0 0.0
          %v5264 = vand.u32 %v5011, 4294901760
          %5265 = vmatmul.mubr.f32.gmra.mrb[0].mxu0 %v5264
          %v5266 = vpop.f32.mrb[0].mxu0
          %v5267 = vadd.f32 %v5116, %v5266
          %v5268 = vpop.f32.mrb[0].mxu0
          %5269 = vdwg.mxu0
          %5270 = vmatprep.subr.mxu0 0.0
          %v5271 = vand.u32 %v5012, 4294901760
          %v5272 = vsub.f32 %v5012, %v5271
          %5273 = vmatpush1.msra.mxu0 %v5272
          %5274 = vmatprep.subr.mxu0 0.0
          %v5275 = vand.u32 %v5013, 4294901760
          %v5276 = vsub.f32 %v5013, %v5275
          %5277 = vmatpush1.msra.mxu0 %v5276
          %5278 = vmatprep.subr.mxu0 0.0
          %v5279 = vand.u32 %v5014, 4294901760
          %v5280 = vsub.f32 %v5014, %v5279
          %5281 = vmatpush1.msra.mxu0 %v5280
          %5282 = vmatprep.subr.mxu0 0.0
          %v5283 = vand.u32 %v5015, 4294901760
          %v5284 = vsub.f32 %v5015, %v5283
          %5285 = vmatpush1.msra.mxu0 %v5284
          %5286 = vmatprep.subr.mxu0 0.0
          %v5287 = vand.u32 %v5016, 4294901760
          %v5288 = vsub.f32 %v5016, %v5287
          %5289 = vmatpush1.msra.mxu0 %v5288
          %5290 = vmatprep.subr.mxu0 0.0
          %v5291 = vand.u32 %v5017, 4294901760
          %v5292 = vsub.f32 %v5017, %v5291
          %5293 = vmatpush1.msra.mxu0 %v5292
          %5294 = vmatprep.subr.mxu0 0.0
          %v5295 = vand.u32 %v5018, 4294901760
          %v5296 = vsub.f32 %v5018, %v5295
          %5297 = vmatpush1.msra.mxu0 %v5296
          %5298 = vmatprep.subr.mxu0 0.0
          %v5299 = vand.u32 %v5019, 4294901760
          %v5300 = vsub.f32 %v5019, %v5299
          %5301 = vmatpush1.msra.mxu0 %v5300
          %5302 = vmatprep.subr.mxu0 0.0
          %v5303 = vand.u32 %v5020, 4294901760
          %v5304 = vsub.f32 %v5020, %v5303
          %5305 = vmatpush1.msra.mxu0 %v5304
          %5306 = vmatprep.subr.mxu0 0.0
          %v5307 = vand.u32 %v5021, 4294901760
          %v5308 = vsub.f32 %v5021, %v5307
          %5309 = vmatpush1.msra.mxu0 %v5308
          %5310 = vmatprep.subr.mxu0 0.0
          %v5311 = vand.u32 %v5022, 4294901760
          %v5312 = vsub.f32 %v5022, %v5311
          %5313 = vmatpush1.msra.mxu0 %v5312
          %5314 = vmatprep.subr.mxu0 0.0
          %v5315 = vand.u32 %v5023, 4294901760
          %v5316 = vsub.f32 %v5023, %v5315
          %5317 = vmatpush1.msra.mxu0 %v5316
          %5318 = vmatprep.subr.mxu0 0.0
          %v5319 = vand.u32 %v5024, 4294901760
          %v5320 = vsub.f32 %v5024, %v5319
          %5321 = vmatpush1.msra.mxu0 %v5320
          %5322 = vmatprep.subr.mxu0 0.0
          %v5323 = vand.u32 %v5025, 4294901760
          %v5324 = vsub.f32 %v5025, %v5323
          %5325 = vmatpush1.msra.mxu0 %v5324
          %5326 = vmatprep.subr.mxu0 0.0
          %v5327 = vand.u32 %v5026, 4294901760
          %v5328 = vsub.f32 %v5026, %v5327
          %5329 = vmatpush1.msra.mxu0 %v5328
          %5330 = vmatprep.subr.mxu0 0.0
          %v5331 = vand.u32 %v5027, 4294901760
          %v5332 = vsub.f32 %v5027, %v5331
          %5333 = vmatpush1.msra.mxu0 %v5332
          %5334 = vmatprep.subr.mxu0 0.0
          %5335 = vmatpush1.msra.mxu0 0.0
          %5336 = vmatprep.subr.mxu0 0.0
          %5337 = vmatpush1.msra.mxu0 0.0
          %5338 = vmatprep.subr.mxu0 0.0
          %5339 = vmatpush1.msra.mxu0 0.0
          %5340 = vmatprep.subr.mxu0 0.0
          %5341 = vmatpush1.msra.mxu0 0.0
          %5342 = vmatprep.subr.mxu0 0.0
          %5343 = vmatpush1.msra.mxu0 0.0
          %5344 = vmatprep.subr.mxu0 0.0
          %5345 = vmatpush1.msra.mxu0 0.0
          %5346 = vmatprep.subr.mxu0 0.0
          %5347 = vmatpush1.msra.mxu0 0.0
          %5348 = vmatprep.subr.mxu0 0.0
          %5349 = vmatpush1.msra.mxu0 0.0
          %5350 = vmatprep.subr.mxu0 0.0
          %5351 = vmatpush1.msra.mxu0 0.0
          %5352 = vmatprep.subr.mxu0 0.0
          %5353 = vmatpush1.msra.mxu0 0.0
          %5354 = vmatprep.subr.mxu0 0.0
          %5355 = vmatpush1.msra.mxu0 0.0
          %5356 = vmatprep.subr.mxu0 0.0
          %5357 = vmatpush1.msra.mxu0 0.0
          %5358 = vmatprep.subr.mxu0 0.0
          %5359 = vmatpush1.msra.mxu0 0.0
          %5360 = vmatprep.subr.mxu0 0.0
          %5361 = vmatpush1.msra.mxu0 0.0
          %5362 = vmatprep.subr.mxu0 0.0
          %5363 = vmatpush1.msra.mxu0 0.0
          %5364 = vmatprep.subr.mxu0 0.0
          %5365 = vmatpush1.msra.mxu0 0.0
          %5366 = vmatprep.mubr.f32.mxu0 0.0
          %v5367 = vand.u32 %v5011, 4294901760
          %v5368 = vsub.f32 %v5011, %v5367
          %5369 = vmatmul.mubr.f32.gmra.mrb[0].mxu0 %v5368
          %v5370 = vpop.f32.mrb[0].mxu0
          %v5371 = vadd.f32 %v5267, %v5370
          %v5372 = vpop.f32.mrb[0].mxu0
          %5373 = vdwg.mxu0
          %5374 = vmatprep.subr.mxu0 0.0
          %v5375 = vand.u32 %v5012, 4294901760
          %5376 = vmatpush1.msra.mxu0 %v5375
          %5377 = vmatprep.subr.mxu0 0.0
          %v5378 = vand.u32 %v5013, 4294901760
          %5379 = vmatpush1.msra.mxu0 %v5378
          %5380 = vmatprep.subr.mxu0 0.0
          %v5381 = vand.u32 %v5014, 4294901760
          %5382 = vmatpush1.msra.mxu0 %v5381
          %5383 = vmatprep.subr.mxu0 0.0
          %v5384 = vand.u32 %v5015, 4294901760
          %5385 = vmatpush1.msra.mxu0 %v5384
          %5386 = vmatprep.subr.mxu0 0.0
          %v5387 = vand.u32 %v5016, 4294901760
          %5388 = vmatpush1.msra.mxu0 %v5387
          %5389 = vmatprep.subr.mxu0 0.0
          %v5390 = vand.u32 %v5017, 4294901760
          %5391 = vmatpush1.msra.mxu0 %v5390
          %5392 = vmatprep.subr.mxu0 0.0
          %v5393 = vand.u32 %v5018, 4294901760
          %5394 = vmatpush1.msra.mxu0 %v5393
          %5395 = vmatprep.subr.mxu0 0.0
          %v5396 = vand.u32 %v5019, 4294901760
          %5397 = vmatpush1.msra.mxu0 %v5396
          %5398 = vmatprep.subr.mxu0 0.0
          %v5399 = vand.u32 %v5020, 4294901760
          %5400 = vmatpush1.msra.mxu0 %v5399
          %5401 = vmatprep.subr.mxu0 0.0
          %v5402 = vand.u32 %v5021, 4294901760
          %5403 = vmatpush1.msra.mxu0 %v5402
          %5404 = vmatprep.subr.mxu0 0.0
          %v5405 = vand.u32 %v5022, 4294901760
          %5406 = vmatpush1.msra.mxu0 %v5405
          %5407 = vmatprep.subr.mxu0 0.0
          %v5408 = vand.u32 %v5023, 4294901760
          %5409 = vmatpush1.msra.mxu0 %v5408
          %5410 = vmatprep.subr.mxu0 0.0
          %v5411 = vand.u32 %v5024, 4294901760
          %5412 = vmatpush1.msra.mxu0 %v5411
          %5413 = vmatprep.subr.mxu0 0.0
          %v5414 = vand.u32 %v5025, 4294901760
          %5415 = vmatpush1.msra.mxu0 %v5414
          %5416 = vmatprep.subr.mxu0 0.0
          %v5417 = vand.u32 %v5026, 4294901760
          %5418 = vmatpush1.msra.mxu0 %v5417
          %5419 = vmatprep.subr.mxu0 0.0
          %v5420 = vand.u32 %v5027, 4294901760
          %5421 = vmatpush1.msra.mxu0 %v5420
          %5422 = vmatprep.subr.mxu0 0.0
          %5423 = vmatpush1.msra.mxu0 0.0
          %5424 = vmatprep.subr.mxu0 0.0
          %5425 = vmatpush1.msra.mxu0 0.0
          %5426 = vmatprep.subr.mxu0 0.0
          %5427 = vmatpush1.msra.mxu0 0.0
          %5428 = vmatprep.subr.mxu0 0.0
          %5429 = vmatpush1.msra.mxu0 0.0
          %5430 = vmatprep.subr.mxu0 0.0
          %5431 = vmatpush1.msra.mxu0 0.0
          %5432 = vmatprep.subr.mxu0 0.0
          %5433 = vmatpush1.msra.mxu0 0.0
          %5434 = vmatprep.subr.mxu0 0.0
          %5435 = vmatpush1.msra.mxu0 0.0
          %5436 = vmatprep.subr.mxu0 0.0
          %5437 = vmatpush1.msra.mxu0 0.0
          %5438 = vmatprep.subr.mxu0 0.0
          %5439 = vmatpush1.msra.mxu0 0.0
          %5440 = vmatprep.subr.mxu0 0.0
          %5441 = vmatpush1.msra.mxu0 0.0
          %5442 = vmatprep.subr.mxu0 0.0
          %5443 = vmatpush1.msra.mxu0 0.0
          %5444 = vmatprep.subr.mxu0 0.0
          %5445 = vmatpush1.msra.mxu0 0.0
          %5446 = vmatprep.subr.mxu0 0.0
          %5447 = vmatpush1.msra.mxu0 0.0
          %5448 = vmatprep.subr.mxu0 0.0
          %5449 = vmatpush1.msra.mxu0 0.0
          %5450 = vmatprep.subr.mxu0 0.0
          %5451 = vmatpush1.msra.mxu0 0.0
          %5452 = vmatprep.subr.mxu0 0.0
          %5453 = vmatpush1.msra.mxu0 0.0
          %5454 = vmatprep.mubr.f32.mxu0 0.0
          %v5455 = vand.u32 %v5011, 4294901760
          %v5456 = vsub.f32 %v5011, %v5455
          %v5457 = vand.u32 %v5456, 4294901760
          %5458 = vmatmul.mubr.f32.gmra.mrb[0].mxu0 %v5457
          %v5459 = vpop.f32.mrb[0].mxu0
          %v5460 = vadd.f32 %v5371, %v5459
          %v5461 = vpop.f32.mrb[0].mxu0
          %5462 = vdwg.mxu0
          %5463 = vmatprep.subr.mxu0 0.0
          %v5464 = vand.u32 %v5012, 4294901760
          %v5465 = vsub.f32 %v5012, %v5464
          %v5466 = vand.u32 %v5465, 4294901760
          %5467 = vmatpush1.msra.mxu0 %v5466
          %5468 = vmatprep.subr.mxu0 0.0
          %v5469 = vand.u32 %v5013, 4294901760
          %v5470 = vsub.f32 %v5013, %v5469
          %v5471 = vand.u32 %v5470, 4294901760
          %5472 = vmatpush1.msra.mxu0 %v5471
          %5473 = vmatprep.subr.mxu0 0.0
          %v5474 = vand.u32 %v5014, 4294901760
          %v5475 = vsub.f32 %v5014, %v5474
          %v5476 = vand.u32 %v5475, 4294901760
          %5477 = vmatpush1.msra.mxu0 %v5476
          %5478 = vmatprep.subr.mxu0 0.0
          %v5479 = vand.u32 %v5015, 4294901760
          %v5480 = vsub.f32 %v5015, %v5479
          %v5481 = vand.u32 %v5480, 4294901760
          %5482 = vmatpush1.msra.mxu0 %v5481
          %5483 = vmatprep.subr.mxu0 0.0
          %v5484 = vand.u32 %v5016, 4294901760
          %v5485 = vsub.f32 %v5016, %v5484
          %v5486 = vand.u32 %v5485, 4294901760
          %5487 = vmatpush1.msra.mxu0 %v5486
          %5488 = vmatprep.subr.mxu0 0.0
          %v5489 = vand.u32 %v5017, 4294901760
          %v5490 = vsub.f32 %v5017, %v5489
          %v5491 = vand.u32 %v5490, 4294901760
          %5492 = vmatpush1.msra.mxu0 %v5491
          %5493 = vmatprep.subr.mxu0 0.0
          %v5494 = vand.u32 %v5018, 4294901760
          %v5495 = vsub.f32 %v5018, %v5494
          %v5496 = vand.u32 %v5495, 4294901760
          %5497 = vmatpush1.msra.mxu0 %v5496
          %5498 = vmatprep.subr.mxu0 0.0
          %v5499 = vand.u32 %v5019, 4294901760
          %v5500 = vsub.f32 %v5019, %v5499
          %v5501 = vand.u32 %v5500, 4294901760
          %5502 = vmatpush1.msra.mxu0 %v5501
          %5503 = vmatprep.subr.mxu0 0.0
          %v5504 = vand.u32 %v5020, 4294901760
          %v5505 = vsub.f32 %v5020, %v5504
          %v5506 = vand.u32 %v5505, 4294901760
          %5507 = vmatpush1.msra.mxu0 %v5506
          %5508 = vmatprep.subr.mxu0 0.0
          %v5509 = vand.u32 %v5021, 4294901760
          %v5510 = vsub.f32 %v5021, %v5509
          %v5511 = vand.u32 %v5510, 4294901760
          %5512 = vmatpush1.msra.mxu0 %v5511
          %5513 = vmatprep.subr.mxu0 0.0
          %v5514 = vand.u32 %v5022, 4294901760
          %v5515 = vsub.f32 %v5022, %v5514
          %v5516 = vand.u32 %v5515, 4294901760
          %5517 = vmatpush1.msra.mxu0 %v5516
          %5518 = vmatprep.subr.mxu0 0.0
          %v5519 = vand.u32 %v5023, 4294901760
          %v5520 = vsub.f32 %v5023, %v5519
          %v5521 = vand.u32 %v5520, 4294901760
          %5522 = vmatpush1.msra.mxu0 %v5521
          %5523 = vmatprep.subr.mxu0 0.0
          %v5524 = vand.u32 %v5024, 4294901760
          %v5525 = vsub.f32 %v5024, %v5524
          %v5526 = vand.u32 %v5525, 4294901760
          %5527 = vmatpush1.msra.mxu0 %v5526
          %5528 = vmatprep.subr.mxu0 0.0
          %v5529 = vand.u32 %v5025, 4294901760
          %v5530 = vsub.f32 %v5025, %v5529
          %v5531 = vand.u32 %v5530, 4294901760
          %5532 = vmatpush1.msra.mxu0 %v5531
          %5533 = vmatprep.subr.mxu0 0.0
          %v5534 = vand.u32 %v5026, 4294901760
          %v5535 = vsub.f32 %v5026, %v5534
          %v5536 = vand.u32 %v5535, 4294901760
          %5537 = vmatpush1.msra.mxu0 %v5536
          %5538 = vmatprep.subr.mxu0 0.0
          %v5539 = vand.u32 %v5027, 4294901760
          %v5540 = vsub.f32 %v5027, %v5539
          %v5541 = vand.u32 %v5540, 4294901760
          %5542 = vmatpush1.msra.mxu0 %v5541
          %5543 = vmatprep.subr.mxu0 0.0
          %5544 = vmatpush1.msra.mxu0 0.0
          %5545 = vmatprep.subr.mxu0 0.0
          %5546 = vmatpush1.msra.mxu0 0.0
          %5547 = vmatprep.subr.mxu0 0.0
          %5548 = vmatpush1.msra.mxu0 0.0
          %5549 = vmatprep.subr.mxu0 0.0
          %5550 = vmatpush1.msra.mxu0 0.0
          %5551 = vmatprep.subr.mxu0 0.0
          %5552 = vmatpush1.msra.mxu0 0.0
          %5553 = vmatprep.subr.mxu0 0.0
          %5554 = vmatpush1.msra.mxu0 0.0
          %5555 = vmatprep.subr.mxu0 0.0
          %5556 = vmatpush1.msra.mxu0 0.0
          %5557 = vmatprep.subr.mxu0 0.0
          %5558 = vmatpush1.msra.mxu0 0.0
          %5559 = vmatprep.subr.mxu0 0.0
          %5560 = vmatpush1.msra.mxu0 0.0
          %5561 = vmatprep.subr.mxu0 0.0
          %5562 = vmatpush1.msra.mxu0 0.0
          %5563 = vmatprep.subr.mxu0 0.0
          %5564 = vmatpush1.msra.mxu0 0.0
          %5565 = vmatprep.subr.mxu0 0.0
          %5566 = vmatpush1.msra.mxu0 0.0
          %5567 = vmatprep.subr.mxu0 0.0
          %5568 = vmatpush1.msra.mxu0 0.0
          %5569 = vmatprep.subr.mxu0 0.0
          %5570 = vmatpush1.msra.mxu0 0.0
          %5571 = vmatprep.subr.mxu0 0.0
          %5572 = vmatpush1.msra.mxu0 0.0
          %5573 = vmatprep.subr.mxu0 0.0
          %5574 = vmatpush1.msra.mxu0 0.0
          %5575 = vmatprep.mubr.f32.mxu0 0.0
          %v5576 = vand.u32 %v5011, 4294901760
          %5577 = vmatmul.mubr.f32.gmra.mrb[0].mxu0 %v5576
          %v5578 = vpop.f32.mrb[0].mxu0
          %v5579 = vadd.f32 %v5460, %v5578
          %v5580 = vpop.f32.mrb[0].mxu0
          %5581 = vdwg.mxu0
          %5582 = vmatprep.subr.mxu0 0.0
          %v5583 = vand.u32 %v5012, 4294901760
          %5584 = vmatpush1.msra.mxu0 %v5583
          %5585 = vmatprep.subr.mxu0 0.0
          %v5586 = vand.u32 %v5013, 4294901760
          %5587 = vmatpush1.msra.mxu0 %v5586
          %5588 = vmatprep.subr.mxu0 0.0
          %v5589 = vand.u32 %v5014, 4294901760
          %5590 = vmatpush1.msra.mxu0 %v5589
          %5591 = vmatprep.subr.mxu0 0.0
          %v5592 = vand.u32 %v5015, 4294901760
          %5593 = vmatpush1.msra.mxu0 %v5592
          %5594 = vmatprep.subr.mxu0 0.0
          %v5595 = vand.u32 %v5016, 4294901760
          %5596 = vmatpush1.msra.mxu0 %v5595
          %5597 = vmatprep.subr.mxu0 0.0
          %v5598 = vand.u32 %v5017, 4294901760
          %5599 = vmatpush1.msra.mxu0 %v5598
          %5600 = vmatprep.subr.mxu0 0.0
          %v5601 = vand.u32 %v5018, 4294901760
          %5602 = vmatpush1.msra.mxu0 %v5601
          %5603 = vmatprep.subr.mxu0 0.0
          %v5604 = vand.u32 %v5019, 4294901760
          %5605 = vmatpush1.msra.mxu0 %v5604
          %5606 = vmatprep.subr.mxu0 0.0
          %v5607 = vand.u32 %v5020, 4294901760
          %5608 = vmatpush1.msra.mxu0 %v5607
          %5609 = vmatprep.subr.mxu0 0.0
          %v5610 = vand.u32 %v5021, 4294901760
          %5611 = vmatpush1.msra.mxu0 %v5610
          %5612 = vmatprep.subr.mxu0 0.0
          %v5613 = vand.u32 %v5022, 4294901760
          %5614 = vmatpush1.msra.mxu0 %v5613
          %5615 = vmatprep.subr.mxu0 0.0
          %v5616 = vand.u32 %v5023, 4294901760
          %5617 = vmatpush1.msra.mxu0 %v5616
          %5618 = vmatprep.subr.mxu0 0.0
          %v5619 = vand.u32 %v5024, 4294901760
          %5620 = vmatpush1.msra.mxu0 %v5619
          %5621 = vmatprep.subr.mxu0 0.0
          %v5622 = vand.u32 %v5025, 4294901760
          %5623 = vmatpush1.msra.mxu0 %v5622
          %5624 = vmatprep.subr.mxu0 0.0
          %v5625 = vand.u32 %v5026, 4294901760
          %5626 = vmatpush1.msra.mxu0 %v5625
          %5627 = vmatprep.subr.mxu0 0.0
          %v5628 = vand.u32 %v5027, 4294901760
          %5629 = vmatpush1.msra.mxu0 %v5628
          %5630 = vmatprep.subr.mxu0 0.0
          %5631 = vmatpush1.msra.mxu0 0.0
          %5632 = vmatprep.subr.mxu0 0.0
          %5633 = vmatpush1.msra.mxu0 0.0
          %5634 = vmatprep.subr.mxu0 0.0
          %5635 = vmatpush1.msra.mxu0 0.0
          %5636 = vmatprep.subr.mxu0 0.0
          %5637 = vmatpush1.msra.mxu0 0.0
          %5638 = vmatprep.subr.mxu0 0.0
          %5639 = vmatpush1.msra.mxu0 0.0
          %5640 = vmatprep.subr.mxu0 0.0
          %5641 = vmatpush1.msra.mxu0 0.0
          %5642 = vmatprep.subr.mxu0 0.0
          %5643 = vmatpush1.msra.mxu0 0.0
          %5644 = vmatprep.subr.mxu0 0.0
          %5645 = vmatpush1.msra.mxu0 0.0
          %5646 = vmatprep.subr.mxu0 0.0
          %5647 = vmatpush1.msra.mxu0 0.0
          %5648 = vmatprep.subr.mxu0 0.0
          %5649 = vmatpush1.msra.mxu0 0.0
          %5650 = vmatprep.subr.mxu0 0.0
          %5651 = vmatpush1.msra.mxu0 0.0
          %5652 = vmatprep.subr.mxu0 0.0
          %5653 = vmatpush1.msra.mxu0 0.0
          %5654 = vmatprep.subr.mxu0 0.0
          %5655 = vmatpush1.msra.mxu0 0.0
          %5656 = vmatprep.subr.mxu0 0.0
          %5657 = vmatpush1.msra.mxu0 0.0
          %5658 = vmatprep.subr.mxu0 0.0
          %5659 = vmatpush1.msra.mxu0 0.0
          %5660 = vmatprep.subr.mxu0 0.0
          %5661 = vmatpush1.msra.mxu0 0.0
          %5662 = vmatprep.mubr.f32.mxu0 0.0
          %v5663 = vand.u32 %v5011, 4294901760
          %5664 = vmatmul.mubr.f32.gmra.mrb[0].mxu0 %v5663
          %v5665 = vpop.f32.mrb[0].mxu0
          %v5666 = vadd.f32 %v5579, %v5665
          %v5667 = vpop.f32.mrb[0].mxu0
          %5668 = vdwg.mxu0
          %vm5669 = vcmask 261120
          %5670 = vst.msk [vmem:[%s329] sm:$0xff] %vm5669, %v5666
        $region68: #{tpu_custom_call.1} parent=39 // pred_fallthru
          _
        %s5671 = sand.u32 %s161, 1
        %s5672 = scalar_lea.sflag [#allocation6], %s5671
        %s5673 = sand.u32 %s161, 1
        %s5674 = smul.addr %s5673, 8
        %s5675 = scalar_lea.vmem [#allocation13], %s5674
        // Predicated region
        $region69: #{tpu_custom_call.1} parent=39 // pred_check
          %p5676 = pneg %p171
        $region70: #{tpu_custom_call.1} parent=39 // pred_check_branch
          %5678 = sbr.rel (%p5676) target = $region72
        $region71: #{tpu_custom_call.1} parent=39 // pred_region
          %s5680 = ssub.s32 128, 128
          %5681 = vsyncadd %s5672, %s5680
          %s5682 = smul.addr %s30, 128
          %s5683 = scalar_lea.hbm %s5, %s5682
          %s5685 = sshll.u32 %s5675, 4
          %s5686 = int_to_ptr.vmem [resolvable:$true] %s5685
          %5688 = dma.vmem_to_hbm [thread:$0]  %s5686, 128, %s5683, %s5672
        $region72: #{tpu_custom_call.1} parent=39 // pred_fallthru
          _
      $region40: #{tpu_custom_call.1} parent=5 // pred_fallthru
        _
      %p5689 = scmp.le.s32.totalorder 2, %s21
      // Predicated region
      $region73: #{tpu_custom_call.1} parent=5 // pred_check
        %p5690 = pneg %p5689
      $region74: #{tpu_custom_call.1} parent=5 // pred_check_branch
        %5692 = sbr.rel (%p5690) target = $region76
      $region75: #{tpu_custom_call.1} parent=5 // pred_region
        %s5693 = ssub.s32 %s21, 2
        // Predicated region
        $region77: #{tpu_custom_call.1} parent=75 // pred_check
          %p5694 = pneg %p177
        $region78: #{tpu_custom_call.1} parent=75 // pred_check_branch
          %5696 = sbr.rel (%p5694) target = $region80
        $region79: #{tpu_custom_call.1} parent=75 // pred_region
          %s5697 = sand.u32 %s162, 1
          %s5698 = scalar_lea.sflag [#allocation6], %s5697
          %s5699 = sand.u32 %s162, 1
          %s5700 = smul.addr %s5699, 8
          %s5701 = scalar_lea.vmem [#allocation13], %s5700
          %5702 = dma.done %s5698, 128
        $region80: #{tpu_custom_call.1} parent=75 // pred_fallthru
          _
      $region76: #{tpu_custom_call.1} parent=5 // pred_fallthru
        _
    $region6: #{tpu_custom_call.1} parent=1 // loop_footer
      %s25 = sadd.s32 1, %s21
    $region7: #{tpu_custom_call.1} parent=1 // loop_footer_branch
      %20 = sbr.rel target = $region3
    $region8: #{tpu_custom_call.1} parent=1 // loop_exit
      _
    %5703 = vsyncpa [#allocation5], 1
    %s5704 = scalar_lea.sflag [#allocation5], 1
    %5705 = vsyncpa %s5704, 1
    %5706 = vsyncpa [#allocation8], 1
    %s5707 = scalar_lea.sflag [#allocation8], 1
    %5708 = vsyncpa %s5707, 1
    %5709 = vsyncpa [#allocation11], 1
    %5710 = vsyncpa [#allocation6], 1
    %s5711 = scalar_lea.sflag [#allocation6], 1
    %5712 = vsyncpa %s5711, 1

</llo_original>
